<compile_context>
chip_gen: v7x
topology: tpu7x:2x2x1
jax: 0.10.0
libtpu: 0.0.40
codegen_flags: <defaults>
</compile_context>

<pallas_src>
import jax
import jax.numpy as jnp
from jax import lax
from jax.experimental import pallas as pl
from jax.experimental.pallas import tpu as pltpu


# ----------------------------- Pallas kernel -------------------------------

def bilstm_att_kernel(x_ref, w_ih_f_ref, w_ih_b_ref, w_hh_ref, b_ref,
                      att_w_ref, out_w_ref, out_b_ref,
                      out_ref,
                      gates_ref, H_ref):
    Bt, S, D_in = x_ref.shape
    hidden = w_hh_ref.shape[0]          # 2*Hh (both directions)
    Hh = hidden // 2
    G = w_hh_ref.shape[1]               # 8*Hh

    def reverse_seq(a):
        # Reverse a value over axis 1 with STATIC slices + concatenate
        # (avoids lax.rev, which is not guaranteed to lower in Mosaic).
        n = a.shape[1]
        if n == 1:
            return a
        return jnp.concatenate([a[:, s:s + 1] for s in range(n - 1, -1, -1)],
                               axis=1)

    # ---- hoisted input projection: one lane-dense matmul per direction for
    #      all timesteps; backward stream is time-reversed once, in f32, in
    #      VMEM (off the recurrence critical path). ----------------------------
    x2d = x_ref[...].reshape(Bt * S, D_in)
    gf = jnp.dot(x2d, w_ih_f_ref[...],
                 preferred_element_type=jnp.float32).reshape(Bt, S, G)
    gb = jnp.dot(x2d, w_ih_b_ref[...],
                 preferred_element_type=jnp.float32).reshape(Bt, S, G)
    gates_ref[...] = gf + reverse_seq(gb) + b_ref[...].astype(jnp.float32)

    w_hh = w_hh_ref[...]

    # ---- fused fwd/bwd recurrence: one [Bt,2Hh]@[2Hh,8Hh] matmul per step ----
    # gate column order (Hh-wide chunks): i_f,i_b,f_f,f_b,o_f,o_b,g_f,g_b
    # NOTE: at hidden=32 the EUP (sigmoid/tanh) is the likely binding unit once
    # batch_tile is large; carries h,c stay f32.
    def step(t, carry):
        h, c = carry                                       # [Bt, hidden], f32
        g_in = gates_ref[:, pl.ds(t, 1), :][:, 0, :]       # [Bt, G]
        gates = g_in + jnp.dot(h.astype(w_hh.dtype), w_hh,
                               preferred_element_type=jnp.float32)
        sg = jax.nn.sigmoid(gates[:, :3 * hidden])         # i|f|o, both dirs
        gg = jnp.tanh(gates[:, 3 * hidden:])               # g, both dirs
        i_g = sg[:, 0 * hidden:1 * hidden]
        f_g = sg[:, 1 * hidden:2 * hidden]
        o_g = sg[:, 2 * hidden:3 * hidden]
        c_new = f_g * c + i_g * gg
        h_new = o_g * jnp.tanh(c_new)
        # single full-width store per step, forward loop order
        # (fwd half is hidden state for time t, bwd half for time S-1-t)
        H_ref[:, pl.ds(t, 1), :] = h_new[:, None, :]
        return h_new, c_new

    init = (jnp.zeros((Bt, hidden), jnp.float32),
            jnp.zeros((Bt, hidden), jnp.float32))
    # bounded unroll: full for small S, capped at 8 for long sequences
    lax.fori_loop(0, S, step, init, unroll=min(S, 8))

    # ---- un-reverse the backward half once (hoisted off the serial chain) ---
    Hbuf = H_ref[...]                                      # [Bt, S, hidden]
    H = jnp.concatenate([Hbuf[:, :, :Hh], reverse_seq(Hbuf[:, :, Hh:])],
                        axis=-1)

    # ---- attention: alpha = softmax(tanh(H) . w);  r = sum_s alpha_s H_s ----
    # scores via VPU multiply + lane reduction (no wasted N=1 MXU pass)
    M = jnp.tanh(H)
    scores = jnp.sum(M * att_w_ref[...].astype(jnp.float32), axis=-1)  # [Bt,S]
    scores = scores - jnp.max(scores, axis=-1, keepdims=True)
    e = jnp.exp(scores)
    alpha = e / jnp.sum(e, axis=-1, keepdims=True)         # [Bt, S]
    r = jnp.sum(H * alpha[:, :, None], axis=1)             # [Bt, hidden]
    h_star = jnp.tanh(r)

    # ---- output linear (flat [Bt, tag] writeback) ---------------------------
    logits = (jnp.dot(h_star.astype(out_w_ref.dtype), out_w_ref[...],
                      preferred_element_type=jnp.float32)
              + out_b_ref[...].astype(jnp.float32))        # [Bt, tag]
    out_ref[...] = logits.astype(out_ref.dtype)


# --------------------------- weight repacking --------------------------------

def pack_params(p):
    """Repack per-direction / PyTorch-gate-order (i,f,g,o) params into the
    fused layout used by the kernel.
      gate column order (Hh-wide chunks): [i_f, i_b, f_f, f_b, o_f, o_b, g_f, g_b]
      w_ih_f_aug : [D_in, 8*Hh]   forward-direction columns filled, bwd zero
      w_ih_b_aug : [D_in, 8*Hh]   backward-direction columns filled, fwd zero
      w_hh_aug   : [2*Hh, 8*Hh]   block-diagonal by direction (h = [h_fwd|h_bwd])
      b_aug      : [1, 8*Hh]
    """
    Hh = p["w_hh_f"].shape[0]

    def split_gates(w):                       # [..., 4*Hh] -> dict of [..., Hh]
        return {"i": w[..., 0 * Hh:1 * Hh], "f": w[..., 1 * Hh:2 * Hh],
                "g": w[..., 2 * Hh:3 * Hh], "o": w[..., 3 * Hh:4 * Hh]}

    gf_ih, gb_ih = split_gates(p["w_ih_f"]), split_gates(p["w_ih_b"])
    gf_hh, gb_hh = split_gates(p["w_hh_f"]), split_gates(p["w_hh_b"])
    gf_b,  gb_b  = split_gates(p["b_f"]),    split_gates(p["b_b"])

    z_ih = jnp.zeros_like(gf_ih["i"])
    w_ih_f_aug = jnp.concatenate([gf_ih["i"], z_ih, gf_ih["f"], z_ih,
                                  gf_ih["o"], z_ih, gf_ih["g"], z_ih], axis=-1)
    w_ih_b_aug = jnp.concatenate([z_ih, gb_ih["i"], z_ih, gb_ih["f"],
                                  z_ih, gb_ih["o"], z_ih, gb_ih["g"]], axis=-1)

    z_hh = jnp.zeros_like(gf_hh["i"])
    w_hh_top = jnp.concatenate([gf_hh["i"], z_hh, gf_hh["f"], z_hh,
                                gf_hh["o"], z_hh, gf_hh["g"], z_hh], axis=-1)
    w_hh_bot = jnp.concatenate([z_hh, gb_hh["i"], z_hh, gb_hh["f"],
                                z_hh, gb_hh["o"], z_hh, gb_hh["g"]], axis=-1)
    w_hh_aug = jnp.concatenate([w_hh_top, w_hh_bot], axis=0)

    b_aug = jnp.concatenate([gf_b["i"], gb_b["i"], gf_b["f"], gb_b["f"],
                             gf_b["o"], gb_b["o"], gf_b["g"], gb_b["g"]], axis=-1)
    return w_ih_f_aug, w_ih_b_aug, w_hh_aug, b_aug


# ------------------------------- wrappers -----------------------------------

def _pick_batch_tile(B, cap=256):
    """Largest divisor of B that is a multiple of 8 (so the flat (Bt, tag)
    output block is a legal sublane tile), <= cap (~256 keeps the unrolled
    f32 carries inside the vreg file), and leaves grid >= 2 when possible so
    the batch axis shards across v7x's two TensorCores.  Falls back to the
    whole batch (grid=1) for tiny / awkward B — on v5e/v6e (1 TC) that is the
    preferred shape anyway."""
    best = B
    for bt in range(8, min(B, cap) + 1, 8):
        if B % bt == 0 and B // bt >= 2:
            best = bt
    return best


def bilstm_att_pallas(embeds, p, *, batch_tile=None, mxu_dtype=jnp.bfloat16):
    B, S, D_in = embeds.shape
    Hh = p["w_hh_f"].shape[0]
    hidden = 2 * Hh
    G = 8 * Hh
    tag_size = p["out_b"].shape[-1]

    # Explicit layout assumptions (avoid silently-padded/masked layouts).
    assert G % 128 == 0, (
        f"8*(hidden_dim//2)={G} must be a multiple of 128 lanes for the fused "
        "lane-dense gate layout (e.g. hidden_dim=32 -> 128).")

    if batch_tile is None:
        batch_tile = _pick_batch_tile(B)
    assert B % batch_tile == 0, "B must be divisible by batch_tile"
    assert batch_tile == B or batch_tile % 8 == 0, (
        "batch_tile must be a multiple of 8 (or the full batch) so the "
        "(batch_tile, tag_size) output block is a legal sublane tile")
    grid = (B // batch_tile,)

    w_ih_f_aug, w_ih_b_aug, w_hh_aug, b_aug = pack_params(p)

    # MXU operands default to bf16 (f32 accumulate); elementwise math & the
    # attention weight (VPU operand) stay f32.
    embeds = embeds.astype(mxu_dtype)
    w_ih_f_aug = w_ih_f_aug.astype(mxu_dtype)
    w_ih_b_aug = w_ih_b_aug.astype(mxu_dtype)
    w_hh_aug = w_hh_aug.astype(mxu_dtype)
    out_w = p["out_w"].astype(mxu_dtype)
    att_w = p["att_w"].reshape(1, hidden).astype(jnp.float32)
    b_aug = b_aug.astype(jnp.float32)
    out_b = p["out_b"].reshape(1, tag_size).astype(jnp.float32)

    # VMEM budget: double-buffered x block + resident weights + f32 scratch.
    mxu_b = jnp.dtype(mxu_dtype).itemsize
    f32_b = 4
    vmem_bytes = (
        2 * batch_tile * S * D_in * mxu_b                    # x block (2 bufs)
        + 2 * (2 * D_in + hidden) * G * mxu_b                # W_ih_f/b + W_hh
        + 2 * (G + hidden + hidden * tag_size + tag_size) * f32_b
        + 2 * batch_tile * tag_size * f32_b                  # out block (2 bufs)
        + batch_tile * S * (G + hidden) * f32_b)             # gates + H scratch
    vmem_limit = int(max(16 << 20, min(64 << 20, 1.5 * vmem_bytes + (2 << 20))))

    out = pl.pallas_call(
        bilstm_att_kernel,
        out_shape=jax.ShapeDtypeStruct((B, tag_size), jnp.float32),
        grid_spec=pltpu.PrefetchScalarGridSpec(
            num_scalar_prefetch=0,
            grid=grid,
            in_specs=[
                pl.BlockSpec((batch_tile, S, D_in), lambda b: (b, 0, 0)),
                pl.BlockSpec((D_in, G), lambda b: (0, 0)),
                pl.BlockSpec((D_in, G), lambda b: (0, 0)),
                pl.BlockSpec((hidden, G), lambda b: (0, 0)),
                pl.BlockSpec((1, G), lambda b: (0, 0)),
                pl.BlockSpec((1, hidden), lambda b: (0, 0)),
                pl.BlockSpec((hidden, tag_size), lambda b: (0, 0)),
                pl.BlockSpec((1, tag_size), lambda b: (0, 0)),
            ],
            out_specs=pl.BlockSpec((batch_tile, tag_size), lambda b: (b, 0)),
            scratch_shapes=[
                pltpu.VMEM((batch_tile, S, G), jnp.float32),      # gates_pre
                pltpu.VMEM((batch_tile, S, hidden), jnp.float32),  # H
            ]),
        compiler_params=pltpu.CompilerParams(
            dimension_semantics=("parallel",),
            vmem_limit_bytes=vmem_limit),
    )(embeds, w_ih_f_aug, w_ih_b_aug, w_hh_aug, b_aug, att_w, out_w, out_b)
    return out


def forward(sentence, pos1, pos2, p, *, batch_tile=None, mxu_dtype=jnp.bfloat16):
    """Full BiLSTM_ATT forward (eval mode: dropouts = identity)."""
    embeds = jnp.concatenate(
        [p["word_embed"][sentence],
         p["pos1_embed"][pos1],
         p["pos2_embed"][pos2]], axis=-1)                # [B, S, D_in]
    return bilstm_att_pallas(embeds, p, batch_tile=batch_tile,
                             mxu_dtype=mxu_dtype)


# ---------------------------- pure-JAX reference ----------------------------

def forward_ref(sentence, pos1, pos2, p):
    embeds = jnp.concatenate(
        [p["word_embed"][sentence],
         p["pos1_embed"][pos1],
         p["pos2_embed"][pos2]], axis=-1)
    B, S, _ = embeds.shape
    Hh = p["w_hh_f"].shape[0]

    def lstm_dir(w_ih, w_hh, b, reverse):
        h = jnp.zeros((B, Hh), jnp.float32)
        c = jnp.zeros((B, Hh), jnp.float32)
        outs = [None] * S
        steps = range(S - 1, -1, -1) if reverse else range(S)
        for t in steps:
            g = embeds[:, t, :] @ w_ih + h @ w_hh + b
            i_g = jax.nn.sigmoid(g[:, 0 * Hh:1 * Hh])
            f_g = jax.nn.sigmoid(g[:, 1 * Hh:2 * Hh])
            g_g = jnp.tanh(g[:, 2 * Hh:3 * Hh])
            o_g = jax.nn.sigmoid(g[:, 3 * Hh:4 * Hh])
            c = f_g * c + i_g * g_g
            h = o_g * jnp.tanh(c)
            outs[t] = h
        return jnp.stack(outs, axis=1)

    H = jnp.concatenate(
        [lstm_dir(p["w_ih_f"], p["w_hh_f"], p["b_f"], False),
         lstm_dir(p["w_ih_b"], p["w_hh_b"], p["b_b"], True)], axis=-1)
    M = jnp.tanh(H)
    scores = jnp.einsum("bsh,h->bs", M, p["att_w"][:, 0])
    alpha = jax.nn.softmax(scores, axis=-1)
    r = jnp.einsum("bsh,bs->bh", H, alpha)
    h_star = jnp.tanh(r)
    return h_star @ p["out_w"] + p["out_b"]


# --------------------------------- main --------------------------------------

if __name__ == "__main__":
    # Small, module-consistent config.
    B, S = 16, 8
    vocab_size = 101          # len(word2id_dict) + 1
    embedding_dim = 32
    pos_size, pos_dim = 150, 8
    hidden_dim = 32           # bidirectional -> Hh = 16 per direction
    tag_size = 8
    D_in = embedding_dim + 2 * pos_dim
    Hh = hidden_dim // 2

    key = jax.random.PRNGKey(0)
    ks = jax.random.split(key, 20)
    sc = 0.1

    def rnd(k, shape):
        return jax.random.normal(k, shape, jnp.float32) * sc

    params = {
        "word_embed": rnd(ks[0], (vocab_size, embedding_dim)),
        "pos1_embed": rnd(ks[1], (pos_size, pos_dim)),
        "pos2_embed": rnd(ks[2], (pos_size, pos_dim)),
        # LSTM weights, pre-transposed to (in, out); bias = b_ih + b_hh merged.
        # Gate order along the 4*Hh axis is PyTorch's (i, f, g, o).
        "w_ih_f": rnd(ks[3], (D_in, 4 * Hh)),
        "w_hh_f": rnd(ks[4], (Hh, 4 * Hh)),
        "b_f":    rnd(ks[5], (1, 4 * Hh)) + rnd(ks[6], (1, 4 * Hh)),
        "w_ih_b": rnd(ks[7], (D_in, 4 * Hh)),
        "w_hh_b": rnd(ks[8], (Hh, 4 * Hh)),
        "b_b":    rnd(ks[9], (1, 4 * Hh)) + rnd(ks[10], (1, 4 * Hh)),
        # attention weight  (hidden_dim, 1)
        "att_w":  jax.random.normal(ks[11], (hidden_dim, 1), jnp.float32),
        # output Linear, pre-transposed weight (hidden_dim, tag_size)
        "out_w":  rnd(ks[12], (hidden_dim, tag_size)),
        "out_b":  rnd(ks[13], (1, tag_size)),
    }

    sentence = jax.random.randint(ks[14], (B, S), 0, vocab_size, jnp.int32)
    pos1 = jax.random.randint(ks[15], (B, S), 0, pos_size, jnp.int32)
    pos2 = jax.random.randint(ks[16], (B, S), 0, pos_size, jnp.int32)

    ref = jax.block_until_ready(forward_ref(sentence, pos1, pos2, params))

    # f32 MXU path, whole batch in one program (grid=1): tight numerics check.
    out_f32 = forward(sentence, pos1, pos2, params, batch_tile=B,
                      mxu_dtype=jnp.float32)
    out_f32 = jax.block_until_ready(out_f32)
    assert out_f32.shape == (B, tag_size)
    assert jnp.allclose(out_f32, ref, atol=5e-3, rtol=5e-3), (
        f"f32 max abs err {jnp.max(jnp.abs(out_f32 - ref))}")

    # Default path: bf16 MXU operands, auto batch_tile (=8 here -> grid of 2
    # batch-parallel programs, shards across v7x's two TensorCores).
    out = forward(sentence, pos1, pos2, params)
    out = jax.block_until_ready(out)
    assert out.shape == (B, tag_size)
    assert jnp.allclose(out, ref, atol=5e-2, rtol=5e-2), (
        f"bf16 max abs err {jnp.max(jnp.abs(out - ref))}")

    print("KERNEL_OK")
</pallas_src>

<mosaic_0001>
module attributes {stable_mosaic.version = 11 : i64} {
  func.func @bilstm_att_kernel(%arg0: i32, %arg1: memref<16x8x48xf32, #tpu.memory_space<vmem>>, %arg2: memref<48x128xf32, #tpu.memory_space<vmem>>, %arg3: memref<48x128xf32, #tpu.memory_space<vmem>>, %arg4: memref<32x128xf32, #tpu.memory_space<vmem>>, %arg5: memref<1x128xf32, #tpu.memory_space<vmem>>, %arg6: memref<1x32xf32, #tpu.memory_space<vmem>>, %arg7: memref<32x8xf32, #tpu.memory_space<vmem>>, %arg8: memref<1x8xf32, #tpu.memory_space<vmem>>, %arg9: memref<16x8xf32, #tpu.memory_space<vmem>>, %arg10: memref<16x8x128xf32, #tpu.memory_space<vmem>>, %arg11: memref<16x8x32xf32, #tpu.memory_space<vmem>>) attributes {dimension_semantics = [#tpu.dimension_semantics<parallel>], iteration_bounds = array<i64: 1>, scalar_prefetch = 0 : i64, scratch_operands = 2 : i64, tpu.core_type = #tpu.core_type<tc>, window_params = [{transform_indices = @transform_0, window_bounds = array<i64: 16, 8, 48>}, {pipeline_mode = #tpu.pipeline_mode<synchronous>, transform_indices = @transform_1, window_bounds = array<i64: 48, 128>}, {pipeline_mode = #tpu.pipeline_mode<synchronous>, transform_indices = @transform_2, window_bounds = array<i64: 48, 128>}, {pipeline_mode = #tpu.pipeline_mode<synchronous>, transform_indices = @transform_3, window_bounds = array<i64: 32, 128>}, {pipeline_mode = #tpu.pipeline_mode<synchronous>, transform_indices = @transform_4, window_bounds = array<i64: 1, 128>}, {pipeline_mode = #tpu.pipeline_mode<synchronous>, transform_indices = @transform_5, window_bounds = array<i64: 1, 32>}, {pipeline_mode = #tpu.pipeline_mode<synchronous>, transform_indices = @transform_6, window_bounds = array<i64: 32, 8>}, {pipeline_mode = #tpu.pipeline_mode<synchronous>, transform_indices = @transform_7, window_bounds = array<i64: 1, 8>}, {transform_indices = @transform_8, window_bounds = array<i64: 16, 8>}]} {
    %c0 = arith.constant 0 : index
    %c0_0 = arith.constant 0 : index
    %c0_1 = arith.constant 0 : index
    %0 = vector.load %arg1[%c0, %c0_0, %c0_1] : memref<16x8x48xf32, #tpu.memory_space<vmem>>, vector<16x8x48xf32>
    %1 = vector.shape_cast %0 : vector<16x8x48xf32> to vector<128x48xf32>
    %c0_2 = arith.constant 0 : index
    %c0_3 = arith.constant 0 : index
    %2 = vector.load %arg2[%c0_2, %c0_3] : memref<48x128xf32, #tpu.memory_space<vmem>>, vector<48x128xf32>
    %cst = arith.constant dense<0.000000e+00> : vector<128x128xf32>
    %3 = tpu.matmul %1, %2, %cst {dimension_numbers = #tpu.dot_dimension_numbers<[1], [0], [0], [1], [0, 0, 1, 1], [], []>} : vector<128x48xf32>, vector<48x128xf32>, vector<128x128xf32> -> vector<128x128xf32>
    %4 = vector.shape_cast %3 : vector<128x128xf32> to vector<16x8x128xf32>
    %c0_4 = arith.constant 0 : index
    %c0_5 = arith.constant 0 : index
    %5 = vector.load %arg3[%c0_4, %c0_5] : memref<48x128xf32, #tpu.memory_space<vmem>>, vector<48x128xf32>
    %cst_6 = arith.constant dense<0.000000e+00> : vector<128x128xf32>
    %6 = tpu.matmul %1, %5, %cst_6 {dimension_numbers = #tpu.dot_dimension_numbers<[1], [0], [0], [1], [0, 0, 1, 1], [], []>} : vector<128x48xf32>, vector<48x128xf32>, vector<128x128xf32> -> vector<128x128xf32>
    %7 = vector.shape_cast %6 : vector<128x128xf32> to vector<16x8x128xf32>
    %8 = vector.extract_strided_slice %7 {offsets = [0, 7, 0], sizes = [16, 1, 128], strides = [1, 1, 1]} : vector<16x8x128xf32> to vector<16x1x128xf32>
    %9 = vector.extract_strided_slice %7 {offsets = [0, 6, 0], sizes = [16, 1, 128], strides = [1, 1, 1]} : vector<16x8x128xf32> to vector<16x1x128xf32>
    %10 = vector.extract_strided_slice %7 {offsets = [0, 5, 0], sizes = [16, 1, 128], strides = [1, 1, 1]} : vector<16x8x128xf32> to vector<16x1x128xf32>
    %11 = vector.extract_strided_slice %7 {offsets = [0, 4, 0], sizes = [16, 1, 128], strides = [1, 1, 1]} : vector<16x8x128xf32> to vector<16x1x128xf32>
    %12 = vector.extract_strided_slice %7 {offsets = [0, 3, 0], sizes = [16, 1, 128], strides = [1, 1, 1]} : vector<16x8x128xf32> to vector<16x1x128xf32>
    %13 = vector.extract_strided_slice %7 {offsets = [0, 2, 0], sizes = [16, 1, 128], strides = [1, 1, 1]} : vector<16x8x128xf32> to vector<16x1x128xf32>
    %14 = vector.extract_strided_slice %7 {offsets = [0, 1, 0], sizes = [16, 1, 128], strides = [1, 1, 1]} : vector<16x8x128xf32> to vector<16x1x128xf32>
    %15 = vector.extract_strided_slice %7 {offsets = [0, 0, 0], sizes = [16, 1, 128], strides = [1, 1, 1]} : vector<16x8x128xf32> to vector<16x1x128xf32>
    %16 = tpu.concatenate %8, %9, %10, %11, %12, %13, %14, %15 in 1 : vector<16x1x128xf32>, vector<16x1x128xf32>, vector<16x1x128xf32>, vector<16x1x128xf32>, vector<16x1x128xf32>, vector<16x1x128xf32>, vector<16x1x128xf32>, vector<16x1x128xf32> -> vector<16x8x128xf32>
    %17 = arith.addf %4, %16 : vector<16x8x128xf32>
    %c0_7 = arith.constant 0 : index
    %c0_8 = arith.constant 0 : index
    %18 = vector.load %arg5[%c0_7, %c0_8] : memref<1x128xf32, #tpu.memory_space<vmem>>, vector<1x128xf32>
    %19 = vector.shape_cast %18 : vector<1x128xf32> to vector<1x1x128xf32>
    %20 = vector.broadcast %19 : vector<1x1x128xf32> to vector<16x8x128xf32>
    %21 = arith.addf %17, %20 : vector<16x8x128xf32>
    %c0_9 = arith.constant 0 : index
    %c0_10 = arith.constant 0 : index
    %c0_11 = arith.constant 0 : index
    %22 = vector.load %arg10[%c0_9, %c0_10, %c0_11] : memref<16x8x128xf32, #tpu.memory_space<vmem>>, vector<16x8x128xf32>
    tpu.vector_store %arg10[%c0_9, %c0_10, %c0_11], %21 {strides = array<i32>} : memref<16x8x128xf32, #tpu.memory_space<vmem>>, vector<16x8x128xf32>,
    %c0_12 = arith.constant 0 : index
    %c0_13 = arith.constant 0 : index
    %23 = vector.load %arg4[%c0_12, %c0_13] : memref<32x128xf32, #tpu.memory_space<vmem>>, vector<32x128xf32>
    %cst_14 = arith.constant 0.000000e+00 : f32
    %24 = vector.broadcast %cst_14 : f32 to vector<16x32xf32>
    %cst_15 = arith.constant 0.000000e+00 : f32
    %25 = vector.broadcast %cst_15 : f32 to vector<16x32xf32>
    %c0_i32 = arith.constant 0 : i32
    %c0_16 = arith.constant 0 : index
    %26 = arith.index_cast %c0_i32 : i32 to index
    %c0_17 = arith.constant 0 : index
    %27 = vector.load %arg10[%c0_16, %26, %c0_17] : memref<16x8x128xf32, #tpu.memory_space<vmem>>, vector<16x1x128xf32>
    %28 = vector.shape_cast %27 : vector<16x1x128xf32> to vector<16x128xf32>
    %cst_18 = arith.constant dense<0.000000e+00> : vector<16x128xf32>
    %29 = tpu.matmul %24, %23, %cst_18 {dimension_numbers = #tpu.dot_dimension_numbers<[1], [0], [0], [1], [0, 0, 1, 1], [], []>} : vector<16x32xf32>, vector<32x128xf32>, vector<16x128xf32> -> vector<16x128xf32>
    %30 = arith.addf %28, %29 : vector<16x128xf32>
    %31 = vector.extract_strided_slice %30 {offsets = [0, 0], sizes = [16, 96], strides = [1, 1]} : vector<16x128xf32> to vector<16x96xf32>
    %32 = arith.negf %31 : vector<16x96xf32>
    %33 = math.exp %32 : vector<16x96xf32>
    %cst_19 = arith.constant 1.000000e+00 : f32
    %34 = vector.broadcast %cst_19 : f32 to vector<16x96xf32>
    %35 = arith.addf %34, %33 : vector<16x96xf32>
    %36 = arith.divf %34, %35 : vector<16x96xf32>
    %37 = vector.extract_strided_slice %30 {offsets = [0, 96], sizes = [16, 32], strides = [1, 1]} : vector<16x128xf32> to vector<16x32xf32>
    %38 = math.tanh %37 : vector<16x32xf32>
    %39 = vector.extract_strided_slice %36 {offsets = [0, 0], sizes = [16, 32], strides = [1, 1]} : vector<16x96xf32> to vector<16x32xf32>
    %40 = vector.extract_strided_slice %36 {offsets = [0, 32], sizes = [16, 32], strides = [1, 1]} : vector<16x96xf32> to vector<16x32xf32>
    %41 = vector.extract_strided_slice %36 {offsets = [0, 64], sizes = [16, 32], strides = [1, 1]} : vector<16x96xf32> to vector<16x32xf32>
    %42 = arith.mulf %40, %25 : vector<16x32xf32>
    %43 = arith.mulf %39, %38 : vector<16x32xf32>
    %44 = arith.addf %42, %43 : vector<16x32xf32>
    %45 = math.tanh %44 : vector<16x32xf32>
    %46 = arith.mulf %41, %45 : vector<16x32xf32>
    %47 = vector.shape_cast %46 : vector<16x32xf32> to vector<16x1x32xf32>
    %c0_20 = arith.constant 0 : index
    %48 = arith.index_cast %c0_i32 : i32 to index
    %c0_21 = arith.constant 0 : index
    %49 = vector.load %arg11[%c0_20, %48, %c0_21] : memref<16x8x32xf32, #tpu.memory_space<vmem>>, vector<16x1x32xf32>
    tpu.vector_store %arg11[%c0_20, %48, %c0_21], %47 {strides = array<i32>} : memref<16x8x32xf32, #tpu.memory_space<vmem>>, vector<16x1x32xf32>,
    %c1_i32 = arith.constant 1 : i32
    %c0_22 = arith.constant 0 : index
    %50 = arith.index_cast %c1_i32 : i32 to index
    %c0_23 = arith.constant 0 : index
    %51 = vector.load %arg10[%c0_22, %50, %c0_23] : memref<16x8x128xf32, #tpu.memory_space<vmem>>, vector<16x1x128xf32>
    %52 = vector.shape_cast %51 : vector<16x1x128xf32> to vector<16x128xf32>
    %cst_24 = arith.constant dense<0.000000e+00> : vector<16x128xf32>
    %53 = tpu.matmul %46, %23, %cst_24 {dimension_numbers = #tpu.dot_dimension_numbers<[1], [0], [0], [1], [0, 0, 1, 1], [], []>} : vector<16x32xf32>, vector<32x128xf32>, vector<16x128xf32> -> vector<16x128xf32>
    %54 = arith.addf %52, %53 : vector<16x128xf32>
    %55 = vector.extract_strided_slice %54 {offsets = [0, 0], sizes = [16, 96], strides = [1, 1]} : vector<16x128xf32> to vector<16x96xf32>
    %56 = arith.negf %55 : vector<16x96xf32>
    %57 = math.exp %56 : vector<16x96xf32>
    %cst_25 = arith.constant 1.000000e+00 : f32
    %58 = vector.broadcast %cst_25 : f32 to vector<16x96xf32>
    %59 = arith.addf %58, %57 : vector<16x96xf32>
    %60 = arith.divf %58, %59 : vector<16x96xf32>
    %61 = vector.extract_strided_slice %54 {offsets = [0, 96], sizes = [16, 32], strides = [1, 1]} : vector<16x128xf32> to vector<16x32xf32>
    %62 = math.tanh %61 : vector<16x32xf32>
    %63 = vector.extract_strided_slice %60 {offsets = [0, 0], sizes = [16, 32], strides = [1, 1]} : vector<16x96xf32> to vector<16x32xf32>
    %64 = vector.extract_strided_slice %60 {offsets = [0, 32], sizes = [16, 32], strides = [1, 1]} : vector<16x96xf32> to vector<16x32xf32>
    %65 = vector.extract_strided_slice %60 {offsets = [0, 64], sizes = [16, 32], strides = [1, 1]} : vector<16x96xf32> to vector<16x32xf32>
    %66 = arith.mulf %64, %44 : vector<16x32xf32>
    %67 = arith.mulf %63, %62 : vector<16x32xf32>
    %68 = arith.addf %66, %67 : vector<16x32xf32>
    %69 = math.tanh %68 : vector<16x32xf32>
    %70 = arith.mulf %65, %69 : vector<16x32xf32>
    %71 = vector.shape_cast %70 : vector<16x32xf32> to vector<16x1x32xf32>
    %c0_26 = arith.constant 0 : index
    %72 = arith.index_cast %c1_i32 : i32 to index
    %c0_27 = arith.constant 0 : index
    %73 = vector.load %arg11[%c0_26, %72, %c0_27] : memref<16x8x32xf32, #tpu.memory_space<vmem>>, vector<16x1x32xf32>
    tpu.vector_store %arg11[%c0_26, %72, %c0_27], %71 {strides = array<i32>} : memref<16x8x32xf32, #tpu.memory_space<vmem>>, vector<16x1x32xf32>,
    %c2_i32 = arith.constant 2 : i32
    %c0_28 = arith.constant 0 : index
    %74 = arith.index_cast %c2_i32 : i32 to index
    %c0_29 = arith.constant 0 : index
    %75 = vector.load %arg10[%c0_28, %74, %c0_29] : memref<16x8x128xf32, #tpu.memory_space<vmem>>, vector<16x1x128xf32>
    %76 = vector.shape_cast %75 : vector<16x1x128xf32> to vector<16x128xf32>
    %cst_30 = arith.constant dense<0.000000e+00> : vector<16x128xf32>
    %77 = tpu.matmul %70, %23, %cst_30 {dimension_numbers = #tpu.dot_dimension_numbers<[1], [0], [0], [1], [0, 0, 1, 1], [], []>} : vector<16x32xf32>, vector<32x128xf32>, vector<16x128xf32> -> vector<16x128xf32>
    %78 = arith.addf %76, %77 : vector<16x128xf32>
    %79 = vector.extract_strided_slice %78 {offsets = [0, 0], sizes = [16, 96], strides = [1, 1]} : vector<16x128xf32> to vector<16x96xf32>
    %80 = arith.negf %79 : vector<16x96xf32>
    %81 = math.exp %80 : vector<16x96xf32>
    %cst_31 = arith.constant 1.000000e+00 : f32
    %82 = vector.broadcast %cst_31 : f32 to vector<16x96xf32>
    %83 = arith.addf %82, %81 : vector<16x96xf32>
    %84 = arith.divf %82, %83 : vector<16x96xf32>
    %85 = vector.extract_strided_slice %78 {offsets = [0, 96], sizes = [16, 32], strides = [1, 1]} : vector<16x128xf32> to vector<16x32xf32>
    %86 = math.tanh %85 : vector<16x32xf32>
    %87 = vector.extract_strided_slice %84 {offsets = [0, 0], sizes = [16, 32], strides = [1, 1]} : vector<16x96xf32> to vector<16x32xf32>
    %88 = vector.extract_strided_slice %84 {offsets = [0, 32], sizes = [16, 32], strides = [1, 1]} : vector<16x96xf32> to vector<16x32xf32>
    %89 = vector.extract_strided_slice %84 {offsets = [0, 64], sizes = [16, 32], strides = [1, 1]} : vector<16x96xf32> to vector<16x32xf32>
    %90 = arith.mulf %88, %68 : vector<16x32xf32>
    %91 = arith.mulf %87, %86 : vector<16x32xf32>
    %92 = arith.addf %90, %91 : vector<16x32xf32>
    %93 = math.tanh %92 : vector<16x32xf32>
    %94 = arith.mulf %89, %93 : vector<16x32xf32>
    %95 = vector.shape_cast %94 : vector<16x32xf32> to vector<16x1x32xf32>
    %c0_32 = arith.constant 0 : index
    %96 = arith.index_cast %c2_i32 : i32 to index
    %c0_33 = arith.constant 0 : index
    %97 = vector.load %arg11[%c0_32, %96, %c0_33] : memref<16x8x32xf32, #tpu.memory_space<vmem>>, vector<16x1x32xf32>
    tpu.vector_store %arg11[%c0_32, %96, %c0_33], %95 {strides = array<i32>} : memref<16x8x32xf32, #tpu.memory_space<vmem>>, vector<16x1x32xf32>,
    %c3_i32 = arith.constant 3 : i32
    %c0_34 = arith.constant 0 : index
    %98 = arith.index_cast %c3_i32 : i32 to index
    %c0_35 = arith.constant 0 : index
    %99 = vector.load %arg10[%c0_34, %98, %c0_35] : memref<16x8x128xf32, #tpu.memory_space<vmem>>, vector<16x1x128xf32>
    %100 = vector.shape_cast %99 : vector<16x1x128xf32> to vector<16x128xf32>
    %cst_36 = arith.constant dense<0.000000e+00> : vector<16x128xf32>
    %101 = tpu.matmul %94, %23, %cst_36 {dimension_numbers = #tpu.dot_dimension_numbers<[1], [0], [0], [1], [0, 0, 1, 1], [], []>} : vector<16x32xf32>, vector<32x128xf32>, vector<16x128xf32> -> vector<16x128xf32>
    %102 = arith.addf %100, %101 : vector<16x128xf32>
    %103 = vector.extract_strided_slice %102 {offsets = [0, 0], sizes = [16, 96], strides = [1, 1]} : vector<16x128xf32> to vector<16x96xf32>
    %104 = arith.negf %103 : vector<16x96xf32>
    %105 = math.exp %104 : vector<16x96xf32>
    %cst_37 = arith.constant 1.000000e+00 : f32
    %106 = vector.broadcast %cst_37 : f32 to vector<16x96xf32>
    %107 = arith.addf %106, %105 : vector<16x96xf32>
    %108 = arith.divf %106, %107 : vector<16x96xf32>
    %109 = vector.extract_strided_slice %102 {offsets = [0, 96], sizes = [16, 32], strides = [1, 1]} : vector<16x128xf32> to vector<16x32xf32>
    %110 = math.tanh %109 : vector<16x32xf32>
    %111 = vector.extract_strided_slice %108 {offsets = [0, 0], sizes = [16, 32], strides = [1, 1]} : vector<16x96xf32> to vector<16x32xf32>
    %112 = vector.extract_strided_slice %108 {offsets = [0, 32], sizes = [16, 32], strides = [1, 1]} : vector<16x96xf32> to vector<16x32xf32>
    %113 = vector.extract_strided_slice %108 {offsets = [0, 64], sizes = [16, 32], strides = [1, 1]} : vector<16x96xf32> to vector<16x32xf32>
    %114 = arith.mulf %112, %92 : vector<16x32xf32>
    %115 = arith.mulf %111, %110 : vector<16x32xf32>
    %116 = arith.addf %114, %115 : vector<16x32xf32>
    %117 = math.tanh %116 : vector<16x32xf32>
    %118 = arith.mulf %113, %117 : vector<16x32xf32>
    %119 = vector.shape_cast %118 : vector<16x32xf32> to vector<16x1x32xf32>
    %c0_38 = arith.constant 0 : index
    %120 = arith.index_cast %c3_i32 : i32 to index
    %c0_39 = arith.constant 0 : index
    %121 = vector.load %arg11[%c0_38, %120, %c0_39] : memref<16x8x32xf32, #tpu.memory_space<vmem>>, vector<16x1x32xf32>
    tpu.vector_store %arg11[%c0_38, %120, %c0_39], %119 {strides = array<i32>} : memref<16x8x32xf32, #tpu.memory_space<vmem>>, vector<16x1x32xf32>,
    %c4_i32 = arith.constant 4 : i32
    %c0_40 = arith.constant 0 : index
    %122 = arith.index_cast %c4_i32 : i32 to index
    %c0_41 = arith.constant 0 : index
    %123 = vector.load %arg10[%c0_40, %122, %c0_41] : memref<16x8x128xf32, #tpu.memory_space<vmem>>, vector<16x1x128xf32>
    %124 = vector.shape_cast %123 : vector<16x1x128xf32> to vector<16x128xf32>
    %cst_42 = arith.constant dense<0.000000e+00> : vector<16x128xf32>
    %125 = tpu.matmul %118, %23, %cst_42 {dimension_numbers = #tpu.dot_dimension_numbers<[1], [0], [0], [1], [0, 0, 1, 1], [], []>} : vector<16x32xf32>, vector<32x128xf32>, vector<16x128xf32> -> vector<16x128xf32>
    %126 = arith.addf %124, %125 : vector<16x128xf32>
    %127 = vector.extract_strided_slice %126 {offsets = [0, 0], sizes = [16, 96], strides = [1, 1]} : vector<16x128xf32> to vector<16x96xf32>
    %128 = arith.negf %127 : vector<16x96xf32>
    %129 = math.exp %128 : vector<16x96xf32>
    %cst_43 = arith.constant 1.000000e+00 : f32
    %130 = vector.broadcast %cst_43 : f32 to vector<16x96xf32>
    %131 = arith.addf %130, %129 : vector<16x96xf32>
    %132 = arith.divf %130, %131 : vector<16x96xf32>
    %133 = vector.extract_strided_slice %126 {offsets = [0, 96], sizes = [16, 32], strides = [1, 1]} : vector<16x128xf32> to vector<16x32xf32>
    %134 = math.tanh %133 : vector<16x32xf32>
    %135 = vector.extract_strided_slice %132 {offsets = [0, 0], sizes = [16, 32], strides = [1, 1]} : vector<16x96xf32> to vector<16x32xf32>
    %136 = vector.extract_strided_slice %132 {offsets = [0, 32], sizes = [16, 32], strides = [1, 1]} : vector<16x96xf32> to vector<16x32xf32>
    %137 = vector.extract_strided_slice %132 {offsets = [0, 64], sizes = [16, 32], strides = [1, 1]} : vector<16x96xf32> to vector<16x32xf32>
    %138 = arith.mulf %136, %116 : vector<16x32xf32>
    %139 = arith.mulf %135, %134 : vector<16x32xf32>
    %140 = arith.addf %138, %139 : vector<16x32xf32>
    %141 = math.tanh %140 : vector<16x32xf32>
    %142 = arith.mulf %137, %141 : vector<16x32xf32>
    %143 = vector.shape_cast %142 : vector<16x32xf32> to vector<16x1x32xf32>
    %c0_44 = arith.constant 0 : index
    %144 = arith.index_cast %c4_i32 : i32 to index
    %c0_45 = arith.constant 0 : index
    %145 = vector.load %arg11[%c0_44, %144, %c0_45] : memref<16x8x32xf32, #tpu.memory_space<vmem>>, vector<16x1x32xf32>
    tpu.vector_store %arg11[%c0_44, %144, %c0_45], %143 {strides = array<i32>} : memref<16x8x32xf32, #tpu.memory_space<vmem>>, vector<16x1x32xf32>,
    %c5_i32 = arith.constant 5 : i32
    %c0_46 = arith.constant 0 : index
    %146 = arith.index_cast %c5_i32 : i32 to index
    %c0_47 = arith.constant 0 : index
    %147 = vector.load %arg10[%c0_46, %146, %c0_47] : memref<16x8x128xf32, #tpu.memory_space<vmem>>, vector<16x1x128xf32>
    %148 = vector.shape_cast %147 : vector<16x1x128xf32> to vector<16x128xf32>
    %cst_48 = arith.constant dense<0.000000e+00> : vector<16x128xf32>
    %149 = tpu.matmul %142, %23, %cst_48 {dimension_numbers = #tpu.dot_dimension_numbers<[1], [0], [0], [1], [0, 0, 1, 1], [], []>} : vector<16x32xf32>, vector<32x128xf32>, vector<16x128xf32> -> vector<16x128xf32>
    %150 = arith.addf %148, %149 : vector<16x128xf32>
    %151 = vector.extract_strided_slice %150 {offsets = [0, 0], sizes = [16, 96], strides = [1, 1]} : vector<16x128xf32> to vector<16x96xf32>
    %152 = arith.negf %151 : vector<16x96xf32>
    %153 = math.exp %152 : vector<16x96xf32>
    %cst_49 = arith.constant 1.000000e+00 : f32
    %154 = vector.broadcast %cst_49 : f32 to vector<16x96xf32>
    %155 = arith.addf %154, %153 : vector<16x96xf32>
    %156 = arith.divf %154, %155 : vector<16x96xf32>
    %157 = vector.extract_strided_slice %150 {offsets = [0, 96], sizes = [16, 32], strides = [1, 1]} : vector<16x128xf32> to vector<16x32xf32>
    %158 = math.tanh %157 : vector<16x32xf32>
    %159 = vector.extract_strided_slice %156 {offsets = [0, 0], sizes = [16, 32], strides = [1, 1]} : vector<16x96xf32> to vector<16x32xf32>
    %160 = vector.extract_strided_slice %156 {offsets = [0, 32], sizes = [16, 32], strides = [1, 1]} : vector<16x96xf32> to vector<16x32xf32>
    %161 = vector.extract_strided_slice %156 {offsets = [0, 64], sizes = [16, 32], strides = [1, 1]} : vector<16x96xf32> to vector<16x32xf32>
    %162 = arith.mulf %160, %140 : vector<16x32xf32>
    %163 = arith.mulf %159, %158 : vector<16x32xf32>
    %164 = arith.addf %162, %163 : vector<16x32xf32>
    %165 = math.tanh %164 : vector<16x32xf32>
    %166 = arith.mulf %161, %165 : vector<16x32xf32>
    %167 = vector.shape_cast %166 : vector<16x32xf32> to vector<16x1x32xf32>
    %c0_50 = arith.constant 0 : index
    %168 = arith.index_cast %c5_i32 : i32 to index
    %c0_51 = arith.constant 0 : index
    %169 = vector.load %arg11[%c0_50, %168, %c0_51] : memref<16x8x32xf32, #tpu.memory_space<vmem>>, vector<16x1x32xf32>
    tpu.vector_store %arg11[%c0_50, %168, %c0_51], %167 {strides = array<i32>} : memref<16x8x32xf32, #tpu.memory_space<vmem>>, vector<16x1x32xf32>,
    %c6_i32 = arith.constant 6 : i32
    %c0_52 = arith.constant 0 : index
    %170 = arith.index_cast %c6_i32 : i32 to index
    %c0_53 = arith.constant 0 : index
    %171 = vector.load %arg10[%c0_52, %170, %c0_53] : memref<16x8x128xf32, #tpu.memory_space<vmem>>, vector<16x1x128xf32>
    %172 = vector.shape_cast %171 : vector<16x1x128xf32> to vector<16x128xf32>
    %cst_54 = arith.constant dense<0.000000e+00> : vector<16x128xf32>
    %173 = tpu.matmul %166, %23, %cst_54 {dimension_numbers = #tpu.dot_dimension_numbers<[1], [0], [0], [1], [0, 0, 1, 1], [], []>} : vector<16x32xf32>, vector<32x128xf32>, vector<16x128xf32> -> vector<16x128xf32>
    %174 = arith.addf %172, %173 : vector<16x128xf32>
    %175 = vector.extract_strided_slice %174 {offsets = [0, 0], sizes = [16, 96], strides = [1, 1]} : vector<16x128xf32> to vector<16x96xf32>
    %176 = arith.negf %175 : vector<16x96xf32>
    %177 = math.exp %176 : vector<16x96xf32>
    %cst_55 = arith.constant 1.000000e+00 : f32
    %178 = vector.broadcast %cst_55 : f32 to vector<16x96xf32>
    %179 = arith.addf %178, %177 : vector<16x96xf32>
    %180 = arith.divf %178, %179 : vector<16x96xf32>
    %181 = vector.extract_strided_slice %174 {offsets = [0, 96], sizes = [16, 32], strides = [1, 1]} : vector<16x128xf32> to vector<16x32xf32>
    %182 = math.tanh %181 : vector<16x32xf32>
    %183 = vector.extract_strided_slice %180 {offsets = [0, 0], sizes = [16, 32], strides = [1, 1]} : vector<16x96xf32> to vector<16x32xf32>
    %184 = vector.extract_strided_slice %180 {offsets = [0, 32], sizes = [16, 32], strides = [1, 1]} : vector<16x96xf32> to vector<16x32xf32>
    %185 = vector.extract_strided_slice %180 {offsets = [0, 64], sizes = [16, 32], strides = [1, 1]} : vector<16x96xf32> to vector<16x32xf32>
    %186 = arith.mulf %184, %164 : vector<16x32xf32>
    %187 = arith.mulf %183, %182 : vector<16x32xf32>
    %188 = arith.addf %186, %187 : vector<16x32xf32>
    %189 = math.tanh %188 : vector<16x32xf32>
    %190 = arith.mulf %185, %189 : vector<16x32xf32>
    %191 = vector.shape_cast %190 : vector<16x32xf32> to vector<16x1x32xf32>
    %c0_56 = arith.constant 0 : index
    %192 = arith.index_cast %c6_i32 : i32 to index
    %c0_57 = arith.constant 0 : index
    %193 = vector.load %arg11[%c0_56, %192, %c0_57] : memref<16x8x32xf32, #tpu.memory_space<vmem>>, vector<16x1x32xf32>
    tpu.vector_store %arg11[%c0_56, %192, %c0_57], %191 {strides = array<i32>} : memref<16x8x32xf32, #tpu.memory_space<vmem>>, vector<16x1x32xf32>,
    %c7_i32 = arith.constant 7 : i32
    %c0_58 = arith.constant 0 : index
    %194 = arith.index_cast %c7_i32 : i32 to index
    %c0_59 = arith.constant 0 : index
    %195 = vector.load %arg10[%c0_58, %194, %c0_59] : memref<16x8x128xf32, #tpu.memory_space<vmem>>, vector<16x1x128xf32>
    %196 = vector.shape_cast %195 : vector<16x1x128xf32> to vector<16x128xf32>
    %cst_60 = arith.constant dense<0.000000e+00> : vector<16x128xf32>
    %197 = tpu.matmul %190, %23, %cst_60 {dimension_numbers = #tpu.dot_dimension_numbers<[1], [0], [0], [1], [0, 0, 1, 1], [], []>} : vector<16x32xf32>, vector<32x128xf32>, vector<16x128xf32> -> vector<16x128xf32>
    %198 = arith.addf %196, %197 : vector<16x128xf32>
    %199 = vector.extract_strided_slice %198 {offsets = [0, 0], sizes = [16, 96], strides = [1, 1]} : vector<16x128xf32> to vector<16x96xf32>
    %200 = arith.negf %199 : vector<16x96xf32>
    %201 = math.exp %200 : vector<16x96xf32>
    %cst_61 = arith.constant 1.000000e+00 : f32
    %202 = vector.broadcast %cst_61 : f32 to vector<16x96xf32>
    %203 = arith.addf %202, %201 : vector<16x96xf32>
    %204 = arith.divf %202, %203 : vector<16x96xf32>
    %205 = vector.extract_strided_slice %198 {offsets = [0, 96], sizes = [16, 32], strides = [1, 1]} : vector<16x128xf32> to vector<16x32xf32>
    %206 = math.tanh %205 : vector<16x32xf32>
    %207 = vector.extract_strided_slice %204 {offsets = [0, 0], sizes = [16, 32], strides = [1, 1]} : vector<16x96xf32> to vector<16x32xf32>
    %208 = vector.extract_strided_slice %204 {offsets = [0, 32], sizes = [16, 32], strides = [1, 1]} : vector<16x96xf32> to vector<16x32xf32>
    %209 = vector.extract_strided_slice %204 {offsets = [0, 64], sizes = [16, 32], strides = [1, 1]} : vector<16x96xf32> to vector<16x32xf32>
    %210 = arith.mulf %208, %188 : vector<16x32xf32>
    %211 = arith.mulf %207, %206 : vector<16x32xf32>
    %212 = arith.addf %210, %211 : vector<16x32xf32>
    %213 = math.tanh %212 : vector<16x32xf32>
    %214 = arith.mulf %209, %213 : vector<16x32xf32>
    %215 = vector.shape_cast %214 : vector<16x32xf32> to vector<16x1x32xf32>
    %c0_62 = arith.constant 0 : index
    %216 = arith.index_cast %c7_i32 : i32 to index
    %c0_63 = arith.constant 0 : index
    %217 = vector.load %arg11[%c0_62, %216, %c0_63] : memref<16x8x32xf32, #tpu.memory_space<vmem>>, vector<16x1x32xf32>
    tpu.vector_store %arg11[%c0_62, %216, %c0_63], %215 {strides = array<i32>} : memref<16x8x32xf32, #tpu.memory_space<vmem>>, vector<16x1x32xf32>,
    %c8_i32 = arith.constant 8 : i32
    %c0_64 = arith.constant 0 : index
    %c0_65 = arith.constant 0 : index
    %c0_66 = arith.constant 0 : index
    %218 = vector.load %arg11[%c0_64, %c0_65, %c0_66] : memref<16x8x32xf32, #tpu.memory_space<vmem>>, vector<16x8x32xf32>
    %219 = vector.extract_strided_slice %218 {offsets = [0, 0, 0], sizes = [16, 8, 16], strides = [1, 1, 1]} : vector<16x8x32xf32> to vector<16x8x16xf32>
    %220 = vector.extract_strided_slice %218 {offsets = [0, 0, 16], sizes = [16, 8, 16], strides = [1, 1, 1]} : vector<16x8x32xf32> to vector<16x8x16xf32>
    %221 = vector.extract_strided_slice %220 {offsets = [0, 7, 0], sizes = [16, 1, 16], strides = [1, 1, 1]} : vector<16x8x16xf32> to vector<16x1x16xf32>
    %222 = vector.extract_strided_slice %220 {offsets = [0, 6, 0], sizes = [16, 1, 16], strides = [1, 1, 1]} : vector<16x8x16xf32> to vector<16x1x16xf32>
    %223 = vector.extract_strided_slice %220 {offsets = [0, 5, 0], sizes = [16, 1, 16], strides = [1, 1, 1]} : vector<16x8x16xf32> to vector<16x1x16xf32>
    %224 = vector.extract_strided_slice %220 {offsets = [0, 4, 0], sizes = [16, 1, 16], strides = [1, 1, 1]} : vector<16x8x16xf32> to vector<16x1x16xf32>
    %225 = vector.extract_strided_slice %220 {offsets = [0, 3, 0], sizes = [16, 1, 16], strides = [1, 1, 1]} : vector<16x8x16xf32> to vector<16x1x16xf32>
    %226 = vector.extract_strided_slice %220 {offsets = [0, 2, 0], sizes = [16, 1, 16], strides = [1, 1, 1]} : vector<16x8x16xf32> to vector<16x1x16xf32>
    %227 = vector.extract_strided_slice %220 {offsets = [0, 1, 0], sizes = [16, 1, 16], strides = [1, 1, 1]} : vector<16x8x16xf32> to vector<16x1x16xf32>
    %228 = vector.extract_strided_slice %220 {offsets = [0, 0, 0], sizes = [16, 1, 16], strides = [1, 1, 1]} : vector<16x8x16xf32> to vector<16x1x16xf32>
    %229 = tpu.concatenate %221, %222, %223, %224, %225, %226, %227, %228 in 1 : vector<16x1x16xf32>, vector<16x1x16xf32>, vector<16x1x16xf32>, vector<16x1x16xf32>, vector<16x1x16xf32>, vector<16x1x16xf32>, vector<16x1x16xf32>, vector<16x1x16xf32> -> vector<16x8x16xf32>
    %230 = tpu.concatenate %219, %229 in 2 : vector<16x8x16xf32>, vector<16x8x16xf32> -> vector<16x8x32xf32>
    %231 = math.tanh %230 : vector<16x8x32xf32>
    %c0_67 = arith.constant 0 : index
    %c0_68 = arith.constant 0 : index
    %232 = vector.load %arg6[%c0_67, %c0_68] : memref<1x32xf32, #tpu.memory_space<vmem>>, vector<1x32xf32>
    %233 = vector.shape_cast %232 : vector<1x32xf32> to vector<1x1x32xf32>
    %234 = vector.broadcast %233 : vector<1x1x32xf32> to vector<16x8x32xf32>
    %235 = arith.mulf %231, %234 : vector<16x8x32xf32>
    %cst_69 = arith.constant dense<0.000000e+00> : vector<16x8xf32>
    %236 = vector.multi_reduction <add>, %235, %cst_69 [2] : vector<16x8x32xf32> to vector<16x8xf32>
    %cst_70 = arith.constant dense<0xFF800000> : vector<16xf32>
    %237 = vector.multi_reduction <maximumf>, %236, %cst_70 [1] : vector<16x8xf32> to vector<16xf32>
    %238 = vector.shape_cast %237 : vector<16xf32> to vector<16x1xf32>
    %239 = vector.broadcast %238 : vector<16x1xf32> to vector<16x8xf32>
    %240 = arith.subf %236, %239 : vector<16x8xf32>
    %241 = math.exp %240 : vector<16x8xf32>
    %cst_71 = arith.constant dense<0.000000e+00> : vector<16xf32>
    %242 = vector.multi_reduction <add>, %241, %cst_71 [1] : vector<16x8xf32> to vector<16xf32>
    %243 = vector.shape_cast %242 : vector<16xf32> to vector<16x1xf32>
    %244 = vector.broadcast %243 : vector<16x1xf32> to vector<16x8xf32>
    %245 = arith.divf %241, %244 : vector<16x8xf32>
    %246 = vector.shape_cast %245 : vector<16x8xf32> to vector<16x8x1xf32>
    %247 = vector.broadcast %246 : vector<16x8x1xf32> to vector<16x8x32xf32>
    %248 = arith.mulf %230, %247 : vector<16x8x32xf32>
    %cst_72 = arith.constant dense<0.000000e+00> : vector<16x32xf32>
    %249 = vector.multi_reduction <add>, %248, %cst_72 [1] : vector<16x8x32xf32> to vector<16x32xf32>
    %250 = math.tanh %249 : vector<16x32xf32>
    %c0_73 = arith.constant 0 : index
    %c0_74 = arith.constant 0 : index
    %251 = vector.load %arg7[%c0_73, %c0_74] : memref<32x8xf32, #tpu.memory_space<vmem>>, vector<32x8xf32>
    %cst_75 = arith.constant dense<0.000000e+00> : vector<16x8xf32>
    %252 = tpu.matmul %250, %251, %cst_75 {dimension_numbers = #tpu.dot_dimension_numbers<[1], [0], [0], [1], [0, 0, 1, 1], [], []>} : vector<16x32xf32>, vector<32x8xf32>, vector<16x8xf32> -> vector<16x8xf32>
    %c0_76 = arith.constant 0 : index
    %c0_77 = arith.constant 0 : index
    %253 = vector.load %arg8[%c0_76, %c0_77] : memref<1x8xf32, #tpu.memory_space<vmem>>, vector<1x8xf32>
    %254 = vector.broadcast %253 : vector<1x8xf32> to vector<16x8xf32>
    %255 = arith.addf %252, %254 : vector<16x8xf32>
    %c0_78 = arith.constant 0 : index
    %c0_79 = arith.constant 0 : index
    %256 = vector.load %arg9[%c0_78, %c0_79] : memref<16x8xf32, #tpu.memory_space<vmem>>, vector<16x8xf32>
    tpu.vector_store %arg9[%c0_78, %c0_79], %255 {strides = array<i32>} : memref<16x8xf32, #tpu.memory_space<vmem>>, vector<16x8xf32>,
    return
  }
  func.func @transform_0(%arg0: i32) -> (i32, i32, i32) {
    %c0_i32 = arith.constant 0 : i32
    %c0_i32_0 = arith.constant 0 : i32
    %c0_i32_1 = arith.constant 0 : i32
    return %arg0, %c0_i32, %c0_i32_0 : i32, i32, i32
  }
  func.func @transform_1(%arg0: i32) -> (i32, i32) {
    %c0_i32 = arith.constant 0 : i32
    %c0_i32_0 = arith.constant 0 : i32
    %c0_i32_1 = arith.constant 0 : i32
    return %c0_i32, %c0_i32_0 : i32, i32
  }
  func.func @transform_2(%arg0: i32) -> (i32, i32) {
    %c0_i32 = arith.constant 0 : i32
    %c0_i32_0 = arith.constant 0 : i32
    %c0_i32_1 = arith.constant 0 : i32
    return %c0_i32, %c0_i32_0 : i32, i32
  }
  func.func @transform_3(%arg0: i32) -> (i32, i32) {
    %c0_i32 = arith.constant 0 : i32
    %c0_i32_0 = arith.constant 0 : i32
    %c0_i32_1 = arith.constant 0 : i32
    return %c0_i32, %c0_i32_0 : i32, i32
  }
  func.func @transform_4(%arg0: i32) -> (i32, i32) {
    %c0_i32 = arith.constant 0 : i32
    %c0_i32_0 = arith.constant 0 : i32
    %c0_i32_1 = arith.constant 0 : i32
    return %c0_i32, %c0_i32_0 : i32, i32
  }
  func.func @transform_5(%arg0: i32) -> (i32, i32) {
    %c0_i32 = arith.constant 0 : i32
    %c0_i32_0 = arith.constant 0 : i32
    %c0_i32_1 = arith.constant 0 : i32
    return %c0_i32, %c0_i32_0 : i32, i32
  }
  func.func @transform_6(%arg0: i32) -> (i32, i32) {
    %c0_i32 = arith.constant 0 : i32
    %c0_i32_0 = arith.constant 0 : i32
    %c0_i32_1 = arith.constant 0 : i32
    return %c0_i32, %c0_i32_0 : i32, i32
  }
  func.func @transform_7(%arg0: i32) -> (i32, i32) {
    %c0_i32 = arith.constant 0 : i32
    %c0_i32_0 = arith.constant 0 : i32
    %c0_i32_1 = arith.constant 0 : i32
    return %c0_i32, %c0_i32_0 : i32, i32
  }
  func.func @transform_8(%arg0: i32) -> (i32, i32) {
    %c0_i32 = arith.constant 0 : i32
    %c0_i32_0 = arith.constant 0 : i32
    return %arg0, %c0_i32 : i32, i32
  }
}

</mosaic_0001>

<llo_original>
// kernel: tpu_custom_call.1
$region0: #{tpu_custom_call.1}
  #allocation0 [shape = 'u32[]', space=smem, size = 0x4, offset = 0x4, fixed_abs, tag = 'smem constant byte address 0x4 - core index']
  #allocation1 [shape = 'u32[144,128]{1,0:T(1,128)}', space=vmem, size = 0x12000, scoped, tag = 'internal scratch']
  #allocation2 [shape = 'f32[16,8,128]{2,1,0:T(8,128)}', space=vmem, size = 0x10000, scoped, tag = 'scratch operand']
  #allocation3 [shape = 'f32[16,8,32]{2,1,0:T(8,128)}', space=vmem, size = 0x10000, scoped, tag = 'scratch operand']
  %s0 = inlined_call_operand.hbm [shape: f32[16,8,48], index: 0, kind: input, shape index: {}]
  %s1 = inlined_call_operand.hbm [shape: f32[48,128], index: 1, kind: input, shape index: {}]
  %s2 = inlined_call_operand.hbm [shape: f32[48,128], index: 2, kind: input, shape index: {}]
  %s3 = inlined_call_operand.vmem [shape: f32[32,128], index: 3, kind: input, shape index: {}]
  %s4 = inlined_call_operand.vmem [shape: f32[1,128], index: 4, kind: input, shape index: {}]
  %s5 = inlined_call_operand.vmem [shape: f32[1,32], index: 5, kind: input, shape index: {}]
  %s6 = inlined_call_operand.vmem [shape: f32[32,8], index: 6, kind: input, shape index: {}]
  %s7 = inlined_call_operand.vmem [shape: f32[1,8], index: 7, kind: input, shape index: {}]
  %s8 = inlined_call_operand.vmem [shape: f32[16,8], index: 8, kind: output, shape index: {}]
  %s9 = sld [smem:[#allocation0]]
  $region54: #{tpu_custom_call.1} parent=0
    _
  %s11 = ssub.s32 1, %s9
  %s12 = scalar_select 0, %s11, %s9
  $region1: #{tpu_custom_call.1} parent=0
    #allocation4 [shape = 'u8[65536]{0}', space=vmem, size = 0x10000, scoped, tag = 'input window, operand 0, single buffered']
    #allocation5 [shape = 's32[1]{0}', space=sflag, size = 0x4, scoped, tag = 'scoped memory for tpu_custom_call.1']
    #allocation6 [shape = 'u8[24576]{0}', space=vmem, size = 0x6000, scoped, tag = 'input window, operand 1, single buffered']
    #allocation7 [shape = 's32[1]{0}', space=sflag, size = 0x4, scoped, tag = 'scoped memory for tpu_custom_call.1']
    #allocation8 [shape = 'u8[24576]{0}', space=vmem, size = 0x6000, scoped, tag = 'input window, operand 2, single buffered']
    %13 = vsyncpa [#allocation5], 0
    %14 = vsyncpa [#allocation7], 0
    // Predicated region
    $region2: #{tpu_custom_call.1} parent=1 // pred_check
      _
    $region3: #{tpu_custom_call.1} parent=1 // pred_check_branch
      %16 = sbr.rel (0) target = $region5
    $region4: #{tpu_custom_call.1} parent=1 // pred_region
      %s18 = ssub.s32 2048, 2048
      %19 = vsyncadd [#allocation5], %s18
      %s20 = sshll.u32 [#allocation4], 4
      %s21 = int_to_ptr.vmem [resolvable:$true] %s20
      %26 = dma.hbm_to_vmem [thread:$0]  %s0, 2048, %s21, [#allocation5], 128, 128, 8
    $region5: #{tpu_custom_call.1} parent=1 // pred_fallthru
      _
    // Predicated region
    $region6: #{tpu_custom_call.1} parent=1 // pred_check
      _
    $region7: #{tpu_custom_call.1} parent=1 // pred_check_branch
      %28 = sbr.rel (0) target = $region9
    $region8: #{tpu_custom_call.1} parent=1 // pred_region
      %s30 = ssub.s32 768, 768
      %31 = vsyncadd [#allocation7], %s30
      %s32 = sshll.u32 [#allocation6], 4
      %s33 = int_to_ptr.vmem [resolvable:$true] %s32
      %38 = dma.hbm_to_vmem [thread:$0]  %s1, 768, %s33, [#allocation7], 128, 128, 8
    $region9: #{tpu_custom_call.1} parent=1 // pred_fallthru
      _
    // Predicated region
    $region10: #{tpu_custom_call.1} parent=1 // pred_check
      _
    $region11: #{tpu_custom_call.1} parent=1 // pred_check_branch
      %40 = sbr.rel (0) target = $region13
    $region12: #{tpu_custom_call.1} parent=1 // pred_region
      %s42 = ssub.s32 768, 768
      %43 = vsyncadd [#allocation7], %s42
      %s44 = sshll.u32 [#allocation8], 4
      %s45 = int_to_ptr.vmem [resolvable:$true] %s44
      %50 = dma.hbm_to_vmem [thread:$0]  %s2, 768, %s45, [#allocation7], 128, 128, 8
    $region13: #{tpu_custom_call.1} parent=1 // pred_fallthru
      _
    // Predicated region
    $region14: #{tpu_custom_call.1} parent=1 // pred_check
      _
    $region15: #{tpu_custom_call.1} parent=1 // pred_check_branch
      %52 = sbr.rel (0) target = $region17
    $region16: #{tpu_custom_call.1} parent=1 // pred_region
      _
    $region17: #{tpu_custom_call.1} parent=1 // pred_fallthru
      _
    // Predicated region
    $region18: #{tpu_custom_call.1} parent=1 // pred_check
      _
    $region19: #{tpu_custom_call.1} parent=1 // pred_check_branch
      %54 = sbr.rel (0) target = $region21
    $region20: #{tpu_custom_call.1} parent=1 // pred_region
      _
    $region21: #{tpu_custom_call.1} parent=1 // pred_fallthru
      _
    // Predicated region
    $region22: #{tpu_custom_call.1} parent=1 // pred_check
      _
    $region23: #{tpu_custom_call.1} parent=1 // pred_check_branch
      %56 = sbr.rel (0) target = $region25
    $region24: #{tpu_custom_call.1} parent=1 // pred_region
      _
    $region25: #{tpu_custom_call.1} parent=1 // pred_fallthru
      _
    // Predicated region
    $region26: #{tpu_custom_call.1} parent=1 // pred_check
      _
    $region27: #{tpu_custom_call.1} parent=1 // pred_check_branch
      %58 = sbr.rel (0) target = $region29
    $region28: #{tpu_custom_call.1} parent=1 // pred_region
      _
    $region29: #{tpu_custom_call.1} parent=1 // pred_fallthru
      _
    // Predicated region
    $region30: #{tpu_custom_call.1} parent=1 // pred_check
      _
    $region31: #{tpu_custom_call.1} parent=1 // pred_check_branch
      %60 = sbr.rel (0) target = $region33
    $region32: #{tpu_custom_call.1} parent=1 // pred_region
      _
    $region33: #{tpu_custom_call.1} parent=1 // pred_fallthru
      _
    // Predicated region
    $region34: #{tpu_custom_call.1} parent=1 // pred_check
      _
    $region35: #{tpu_custom_call.1} parent=1 // pred_check_branch
      %62 = sbr.rel (0) target = $region37
    $region36: #{tpu_custom_call.1} parent=1 // pred_region
      %63 = dma.done [#allocation5], 2048
    $region37: #{tpu_custom_call.1} parent=1 // pred_fallthru
      _
    // Predicated region
    $region38: #{tpu_custom_call.1} parent=1 // pred_check
      _
    $region39: #{tpu_custom_call.1} parent=1 // pred_check_branch
      %65 = sbr.rel (0) target = $region41
    $region40: #{tpu_custom_call.1} parent=1 // pred_region
      %66 = dma.done [#allocation7], 768
    $region41: #{tpu_custom_call.1} parent=1 // pred_fallthru
      _
    // Predicated region
    $region42: #{tpu_custom_call.1} parent=1 // pred_check
      _
    $region43: #{tpu_custom_call.1} parent=1 // pred_check_branch
      %68 = sbr.rel (0) target = $region45
    $region44: #{tpu_custom_call.1} parent=1 // pred_region
      %69 = dma.done [#allocation7], 768
    $region45: #{tpu_custom_call.1} parent=1 // pred_fallthru
      _
    %v70 = vld [vmem:[#allocation4] sm:$0xff]
    %v71 = vld [vmem:[#allocation4 + $0x8] sm:$0xff]
    %v72 = vld [vmem:[#allocation4 + $0x10] sm:$0xff]
    %v73 = vld [vmem:[#allocation4 + $0x18] sm:$0xff]
    %v74 = vld [vmem:[#allocation4 + $0x20] sm:$0xff]
    %v75 = vld [vmem:[#allocation4 + $0x28] sm:$0xff]
    %v76 = vld [vmem:[#allocation4 + $0x30] sm:$0xff]
    %v77 = vld [vmem:[#allocation4 + $0x38] sm:$0xff]
    %v78 = vld [vmem:[#allocation4 + $0x40] sm:$0xff]
    %v79 = vld [vmem:[#allocation4 + $0x48] sm:$0xff]
    %v80 = vld [vmem:[#allocation4 + $0x50] sm:$0xff]
    %v81 = vld [vmem:[#allocation4 + $0x58] sm:$0xff]
    %v82 = vld [vmem:[#allocation4 + $0x60] sm:$0xff]
    %v83 = vld [vmem:[#allocation4 + $0x68] sm:$0xff]
    %v84 = vld [vmem:[#allocation4 + $0x70] sm:$0xff]
    %v85 = vld [vmem:[#allocation4 + $0x78] sm:$0xff]
    %v86 = vld [vmem:[#allocation6] sm:$0xff]
    %v87 = vld [vmem:[#allocation6 + $0x8] sm:$0xff]
    %v88 = vld [vmem:[#allocation6 + $0x10] sm:$0xff]
    %v89 = vld [vmem:[#allocation6 + $0x18] sm:$0xff]
    %v90 = vld [vmem:[#allocation6 + $0x20] sm:$0xff]
    %v91 = vld [vmem:[#allocation6 + $0x28] sm:$0xff]
    %vm92 = vcmask 392192
    %v94 = vsel %vm92, %v70, 0
    %v97 = vsel %vm92, %v71, 0
    %v100 = vsel %vm92, %v72, 0
    %v103 = vsel %vm92, %v73, 0
    %v106 = vsel %vm92, %v74, 0
    %v109 = vsel %vm92, %v75, 0
    %v112 = vsel %vm92, %v76, 0
    %v115 = vsel %vm92, %v77, 0
    %v118 = vsel %vm92, %v78, 0
    %v121 = vsel %vm92, %v79, 0
    %v124 = vsel %vm92, %v80, 0
    %v127 = vsel %vm92, %v81, 0
    %v130 = vsel %vm92, %v82, 0
    %v133 = vsel %vm92, %v83, 0
    %v136 = vsel %vm92, %v84, 0
    %v139 = vsel %vm92, %v85, 0
    %141 = vmatprep.subr.mxu0 0.0
    %142 = vmatpush1.msra.mxu0 %v86
    %143 = vmatprep.subr.mxu0 0.0
    %144 = vmatpush1.msra.mxu0 %v87
    %145 = vmatprep.subr.mxu0 0.0
    %146 = vmatpush1.msra.mxu0 %v88
    %147 = vmatprep.subr.mxu0 0.0
    %148 = vmatpush1.msra.mxu0 %v89
    %149 = vmatprep.subr.mxu0 0.0
    %150 = vmatpush1.msra.mxu0 %v90
    %151 = vmatprep.subr.mxu0 0.0
    %152 = vmatpush1.msra.mxu0 %v91
    %153 = vmatprep.subr.mxu0 0.0
    %154 = vmatpush1.msra.mxu0 0.0
    %155 = vmatprep.subr.mxu0 0.0
    %156 = vmatpush1.msra.mxu0 0.0
    %157 = vmatprep.subr.mxu0 0.0
    %158 = vmatpush1.msra.mxu0 0.0
    %159 = vmatprep.subr.mxu0 0.0
    %160 = vmatpush1.msra.mxu0 0.0
    %161 = vmatprep.subr.mxu0 0.0
    %162 = vmatpush1.msra.mxu0 0.0
    %163 = vmatprep.subr.mxu0 0.0
    %164 = vmatpush1.msra.mxu0 0.0
    %165 = vmatprep.subr.mxu0 0.0
    %166 = vmatpush1.msra.mxu0 0.0
    %167 = vmatprep.subr.mxu0 0.0
    %168 = vmatpush1.msra.mxu0 0.0
    %169 = vmatprep.subr.mxu0 0.0
    %170 = vmatpush1.msra.mxu0 0.0
    %171 = vmatprep.subr.mxu0 0.0
    %172 = vmatpush1.msra.mxu0 0.0
    %173 = vmatprep.subr.mxu0 0.0
    %174 = vmatpush1.msra.mxu0 0.0
    %175 = vmatprep.subr.mxu0 0.0
    %176 = vmatpush1.msra.mxu0 0.0
    %177 = vmatprep.subr.mxu0 0.0
    %178 = vmatpush1.msra.mxu0 0.0
    %179 = vmatprep.subr.mxu0 0.0
    %180 = vmatpush1.msra.mxu0 0.0
    %181 = vmatprep.subr.mxu0 0.0
    %182 = vmatpush1.msra.mxu0 0.0
    %183 = vmatprep.subr.mxu0 0.0
    %184 = vmatpush1.msra.mxu0 0.0
    %185 = vmatprep.subr.mxu0 0.0
    %186 = vmatpush1.msra.mxu0 0.0
    %187 = vmatprep.subr.mxu0 0.0
    %188 = vmatpush1.msra.mxu0 0.0
    %189 = vmatprep.subr.mxu0 0.0
    %190 = vmatpush1.msra.mxu0 0.0
    %191 = vmatprep.subr.mxu0 0.0
    %192 = vmatpush1.msra.mxu0 0.0
    %193 = vmatprep.subr.mxu0 0.0
    %194 = vmatpush1.msra.mxu0 0.0
    %195 = vmatprep.subr.mxu0 0.0
    %196 = vmatpush1.msra.mxu0 0.0
    %197 = vmatprep.subr.mxu0 0.0
    %198 = vmatpush1.msra.mxu0 0.0
    %199 = vmatprep.subr.mxu0 0.0
    %200 = vmatpush1.msra.mxu0 0.0
    %201 = vmatprep.subr.mxu0 0.0
    %202 = vmatpush1.msra.mxu0 0.0
    %203 = vmatprep.subr.mxu0 0.0
    %204 = vmatpush1.msra.mxu0 0.0
    %205 = vmatprep.mubr.f32.mxu0 0.0
    %206 = vmatmul.mubr.f32.gmra.mrb[0].mxu0 %v94
    %v207 = vpop.f32.mrb[0].mxu0
    %v208 = vadd.f32 0.0, %v207
    %v209 = vpop.f32.mrb[0].mxu0
    %210 = vmatprep.mubr.f32.mxu0 0.0
    %211 = vmatmul.mubr.f32.gmra.mrb[0].mxu0 %v97
    %v212 = vpop.f32.mrb[0].mxu0
    %v213 = vadd.f32 0.0, %v212
    %v214 = vpop.f32.mrb[0].mxu0
    %215 = vmatprep.mubr.f32.mxu0 0.0
    %216 = vmatmul.mubr.f32.gmra.mrb[0].mxu0 %v100
    %v217 = vpop.f32.mrb[0].mxu0
    %v218 = vadd.f32 0.0, %v217
    %v219 = vpop.f32.mrb[0].mxu0
    %220 = vmatprep.mubr.f32.mxu0 0.0
    %221 = vmatmul.mubr.f32.gmra.mrb[0].mxu0 %v103
    %v222 = vpop.f32.mrb[0].mxu0
    %v223 = vadd.f32 0.0, %v222
    %v224 = vpop.f32.mrb[0].mxu0
    %225 = vmatprep.mubr.f32.mxu0 0.0
    %226 = vmatmul.mubr.f32.gmra.mrb[0].mxu0 %v106
    %v227 = vpop.f32.mrb[0].mxu0
    %v228 = vadd.f32 0.0, %v227
    %v229 = vpop.f32.mrb[0].mxu0
    %230 = vmatprep.mubr.f32.mxu0 0.0
    %231 = vmatmul.mubr.f32.gmra.mrb[0].mxu0 %v109
    %v232 = vpop.f32.mrb[0].mxu0
    %v233 = vadd.f32 0.0, %v232
    %v234 = vpop.f32.mrb[0].mxu0
    %235 = vmatprep.mubr.f32.mxu0 0.0
    %236 = vmatmul.mubr.f32.gmra.mrb[0].mxu0 %v112
    %v237 = vpop.f32.mrb[0].mxu0
    %v238 = vadd.f32 0.0, %v237
    %v239 = vpop.f32.mrb[0].mxu0
    %240 = vmatprep.mubr.f32.mxu0 0.0
    %241 = vmatmul.mubr.f32.gmra.mrb[0].mxu0 %v115
    %v242 = vpop.f32.mrb[0].mxu0
    %v243 = vadd.f32 0.0, %v242
    %v244 = vpop.f32.mrb[0].mxu0
    %245 = vmatprep.mubr.f32.mxu0 0.0
    %246 = vmatmul.mubr.f32.gmra.mrb[0].mxu0 %v118
    %v247 = vpop.f32.mrb[0].mxu0
    %v248 = vadd.f32 0.0, %v247
    %v249 = vpop.f32.mrb[0].mxu0
    %250 = vmatprep.mubr.f32.mxu0 0.0
    %251 = vmatmul.mubr.f32.gmra.mrb[0].mxu0 %v121
    %v252 = vpop.f32.mrb[0].mxu0
    %v253 = vadd.f32 0.0, %v252
    %v254 = vpop.f32.mrb[0].mxu0
    %255 = vmatprep.mubr.f32.mxu0 0.0
    %256 = vmatmul.mubr.f32.gmra.mrb[0].mxu0 %v124
    %v257 = vpop.f32.mrb[0].mxu0
    %v258 = vadd.f32 0.0, %v257
    %v259 = vpop.f32.mrb[0].mxu0
    %260 = vmatprep.mubr.f32.mxu0 0.0
    %261 = vmatmul.mubr.f32.gmra.mrb[0].mxu0 %v127
    %v262 = vpop.f32.mrb[0].mxu0
    %v263 = vadd.f32 0.0, %v262
    %v264 = vpop.f32.mrb[0].mxu0
    %265 = vmatprep.mubr.f32.mxu0 0.0
    %266 = vmatmul.mubr.f32.gmra.mrb[0].mxu0 %v130
    %v267 = vpop.f32.mrb[0].mxu0
    %v268 = vadd.f32 0.0, %v267
    %v269 = vpop.f32.mrb[0].mxu0
    %270 = vmatprep.mubr.f32.mxu0 0.0
    %271 = vmatmul.mubr.f32.gmra.mrb[0].mxu0 %v133
    %v272 = vpop.f32.mrb[0].mxu0
    %v273 = vadd.f32 0.0, %v272
    %v274 = vpop.f32.mrb[0].mxu0
    %275 = vmatprep.mubr.f32.mxu0 0.0
    %276 = vmatmul.mubr.f32.gmra.mrb[0].mxu0 %v136
    %v277 = vpop.f32.mrb[0].mxu0
    %v278 = vadd.f32 0.0, %v277
    %v279 = vpop.f32.mrb[0].mxu0
    %280 = vmatprep.mubr.f32.mxu0 0.0
    %281 = vmatmul.mubr.f32.gmra.mrb[0].mxu0 %v139
    %v282 = vpop.f32.mrb[0].mxu0
    %v283 = vadd.f32 0.0, %v282
    %v284 = vpop.f32.mrb[0].mxu0
    %285 = vdwg.mxu0
    %v286 = vld [vmem:[#allocation8] sm:$0xff]
    %v287 = vld [vmem:[#allocation8 + $0x8] sm:$0xff]
    %v288 = vld [vmem:[#allocation8 + $0x10] sm:$0xff]
    %v289 = vld [vmem:[#allocation8 + $0x18] sm:$0xff]
    %v290 = vld [vmem:[#allocation8 + $0x20] sm:$0xff]
    %v291 = vld [vmem:[#allocation8 + $0x28] sm:$0xff]
    %292 = vmatprep.subr.mxu0 0.0
    %293 = vmatpush1.msra.mxu0 %v286
    %294 = vmatprep.subr.mxu0 0.0
    %295 = vmatpush1.msra.mxu0 %v287
    %296 = vmatprep.subr.mxu0 0.0
    %297 = vmatpush1.msra.mxu0 %v288
    %298 = vmatprep.subr.mxu0 0.0
    %299 = vmatpush1.msra.mxu0 %v289
    %300 = vmatprep.subr.mxu0 0.0
    %301 = vmatpush1.msra.mxu0 %v290
    %302 = vmatprep.subr.mxu0 0.0
    %303 = vmatpush1.msra.mxu0 %v291
    %304 = vmatprep.subr.mxu0 0.0
    %305 = vmatpush1.msra.mxu0 0.0
    %306 = vmatprep.subr.mxu0 0.0
    %307 = vmatpush1.msra.mxu0 0.0
    %308 = vmatprep.subr.mxu0 0.0
    %309 = vmatpush1.msra.mxu0 0.0
    %310 = vmatprep.subr.mxu0 0.0
    %311 = vmatpush1.msra.mxu0 0.0
    %312 = vmatprep.subr.mxu0 0.0
    %313 = vmatpush1.msra.mxu0 0.0
    %314 = vmatprep.subr.mxu0 0.0
    %315 = vmatpush1.msra.mxu0 0.0
    %316 = vmatprep.subr.mxu0 0.0
    %317 = vmatpush1.msra.mxu0 0.0
    %318 = vmatprep.subr.mxu0 0.0
    %319 = vmatpush1.msra.mxu0 0.0
    %320 = vmatprep.subr.mxu0 0.0
    %321 = vmatpush1.msra.mxu0 0.0
    %322 = vmatprep.subr.mxu0 0.0
    %323 = vmatpush1.msra.mxu0 0.0
    %324 = vmatprep.subr.mxu0 0.0
    %325 = vmatpush1.msra.mxu0 0.0
    %326 = vmatprep.subr.mxu0 0.0
    %327 = vmatpush1.msra.mxu0 0.0
    %328 = vmatprep.subr.mxu0 0.0
    %329 = vmatpush1.msra.mxu0 0.0
    %330 = vmatprep.subr.mxu0 0.0
    %331 = vmatpush1.msra.mxu0 0.0
    %332 = vmatprep.subr.mxu0 0.0
    %333 = vmatpush1.msra.mxu0 0.0
    %334 = vmatprep.subr.mxu0 0.0
    %335 = vmatpush1.msra.mxu0 0.0
    %336 = vmatprep.subr.mxu0 0.0
    %337 = vmatpush1.msra.mxu0 0.0
    %338 = vmatprep.subr.mxu0 0.0
    %339 = vmatpush1.msra.mxu0 0.0
    %340 = vmatprep.subr.mxu0 0.0
    %341 = vmatpush1.msra.mxu0 0.0
    %342 = vmatprep.subr.mxu0 0.0
    %343 = vmatpush1.msra.mxu0 0.0
    %344 = vmatprep.subr.mxu0 0.0
    %345 = vmatpush1.msra.mxu0 0.0
    %346 = vmatprep.subr.mxu0 0.0
    %347 = vmatpush1.msra.mxu0 0.0
    %348 = vmatprep.subr.mxu0 0.0
    %349 = vmatpush1.msra.mxu0 0.0
    %350 = vmatprep.subr.mxu0 0.0
    %351 = vmatpush1.msra.mxu0 0.0
    %352 = vmatprep.subr.mxu0 0.0
    %353 = vmatpush1.msra.mxu0 0.0
    %354 = vmatprep.subr.mxu0 0.0
    %355 = vmatpush1.msra.mxu0 0.0
    %356 = vmatprep.mubr.f32.mxu0 0.0
    %357 = vmatmul.mubr.f32.gmra.mrb[0].mxu0 %v94
    %v358 = vpop.f32.mrb[0].mxu0
    %v359 = vadd.f32 0.0, %v358
    %v360 = vpop.f32.mrb[0].mxu0
    %361 = vmatprep.mubr.f32.mxu0 0.0
    %362 = vmatmul.mubr.f32.gmra.mrb[0].mxu0 %v97
    %v363 = vpop.f32.mrb[0].mxu0
    %v364 = vadd.f32 0.0, %v363
    %v365 = vpop.f32.mrb[0].mxu0
    %366 = vmatprep.mubr.f32.mxu0 0.0
    %367 = vmatmul.mubr.f32.gmra.mrb[0].mxu0 %v100
    %v368 = vpop.f32.mrb[0].mxu0
    %v369 = vadd.f32 0.0, %v368
    %v370 = vpop.f32.mrb[0].mxu0
    %371 = vmatprep.mubr.f32.mxu0 0.0
    %372 = vmatmul.mubr.f32.gmra.mrb[0].mxu0 %v103
    %v373 = vpop.f32.mrb[0].mxu0
    %v374 = vadd.f32 0.0, %v373
    %v375 = vpop.f32.mrb[0].mxu0
    %376 = vmatprep.mubr.f32.mxu0 0.0
    %377 = vmatmul.mubr.f32.gmra.mrb[0].mxu0 %v106
    %v378 = vpop.f32.mrb[0].mxu0
    %v379 = vadd.f32 0.0, %v378
    %v380 = vpop.f32.mrb[0].mxu0
    %381 = vmatprep.mubr.f32.mxu0 0.0
    %382 = vmatmul.mubr.f32.gmra.mrb[0].mxu0 %v109
    %v383 = vpop.f32.mrb[0].mxu0
    %v384 = vadd.f32 0.0, %v383
    %v385 = vpop.f32.mrb[0].mxu0
    %386 = vmatprep.mubr.f32.mxu0 0.0
    %387 = vmatmul.mubr.f32.gmra.mrb[0].mxu0 %v112
    %v388 = vpop.f32.mrb[0].mxu0
    %v389 = vadd.f32 0.0, %v388
    %v390 = vpop.f32.mrb[0].mxu0
    %391 = vmatprep.mubr.f32.mxu0 0.0
    %392 = vmatmul.mubr.f32.gmra.mrb[0].mxu0 %v115
    %v393 = vpop.f32.mrb[0].mxu0
    %v394 = vadd.f32 0.0, %v393
    %v395 = vpop.f32.mrb[0].mxu0
    %396 = vmatprep.mubr.f32.mxu0 0.0
    %397 = vmatmul.mubr.f32.gmra.mrb[0].mxu0 %v118
    %v398 = vpop.f32.mrb[0].mxu0
    %v399 = vadd.f32 0.0, %v398
    %v400 = vpop.f32.mrb[0].mxu0
    %401 = vmatprep.mubr.f32.mxu0 0.0
    %402 = vmatmul.mubr.f32.gmra.mrb[0].mxu0 %v121
    %v403 = vpop.f32.mrb[0].mxu0
    %v404 = vadd.f32 0.0, %v403
    %v405 = vpop.f32.mrb[0].mxu0
    %406 = vmatprep.mubr.f32.mxu0 0.0
    %407 = vmatmul.mubr.f32.gmra.mrb[0].mxu0 %v124
    %v408 = vpop.f32.mrb[0].mxu0
    %v409 = vadd.f32 0.0, %v408
    %v410 = vpop.f32.mrb[0].mxu0
    %411 = vmatprep.mubr.f32.mxu0 0.0
    %412 = vmatmul.mubr.f32.gmra.mrb[0].mxu0 %v127
    %v413 = vpop.f32.mrb[0].mxu0
    %v414 = vadd.f32 0.0, %v413
    %v415 = vpop.f32.mrb[0].mxu0
    %416 = vmatprep.mubr.f32.mxu0 0.0
    %417 = vmatmul.mubr.f32.gmra.mrb[0].mxu0 %v130
    %v418 = vpop.f32.mrb[0].mxu0
    %v419 = vadd.f32 0.0, %v418
    %v420 = vpop.f32.mrb[0].mxu0
    %421 = vmatprep.mubr.f32.mxu0 0.0
    %422 = vmatmul.mubr.f32.gmra.mrb[0].mxu0 %v133
    %v423 = vpop.f32.mrb[0].mxu0
    %v424 = vadd.f32 0.0, %v423
    %v425 = vpop.f32.mrb[0].mxu0
    %426 = vmatprep.mubr.f32.mxu0 0.0
    %427 = vmatmul.mubr.f32.gmra.mrb[0].mxu0 %v136
    %v428 = vpop.f32.mrb[0].mxu0
    %v429 = vadd.f32 0.0, %v428
    %v430 = vpop.f32.mrb[0].mxu0
    %431 = vmatprep.mubr.f32.mxu0 0.0
    %432 = vmatmul.mubr.f32.gmra.mrb[0].mxu0 %v139
    %v433 = vpop.f32.mrb[0].mxu0
    %v434 = vadd.f32 0.0, %v433
    %v435 = vpop.f32.mrb[0].mxu0
    %436 = vdwg.mxu0
    %v453 = vrot.slane %v359, 7
    %v454 = vrot.slane %v364, 7
    %v455 = vrot.slane %v369, 7
    %v456 = vrot.slane %v374, 7
    %v457 = vrot.slane %v379, 7
    %v458 = vrot.slane %v384, 7
    %v459 = vrot.slane %v389, 7
    %v460 = vrot.slane %v394, 7
    %v461 = vrot.slane %v399, 7
    %v462 = vrot.slane %v404, 7
    %v463 = vrot.slane %v409, 7
    %v464 = vrot.slane %v414, 7
    %v465 = vrot.slane %v419, 7
    %v466 = vrot.slane %v424, 7
    %v467 = vrot.slane %v429, 7
    %v468 = vrot.slane %v434, 7
    %v485 = vrot.slane %v359, 5
    %v486 = vrot.slane %v364, 5
    %v487 = vrot.slane %v369, 5
    %v488 = vrot.slane %v374, 5
    %v489 = vrot.slane %v379, 5
    %v490 = vrot.slane %v384, 5
    %v491 = vrot.slane %v389, 5
    %v492 = vrot.slane %v394, 5
    %v493 = vrot.slane %v399, 5
    %v494 = vrot.slane %v404, 5
    %v495 = vrot.slane %v409, 5
    %v496 = vrot.slane %v414, 5
    %v497 = vrot.slane %v419, 5
    %v498 = vrot.slane %v424, 5
    %v499 = vrot.slane %v429, 5
    %v500 = vrot.slane %v434, 5
    %v517 = vrot.slane %v359, 3
    %v518 = vrot.slane %v364, 3
    %v519 = vrot.slane %v369, 3
    %v520 = vrot.slane %v374, 3
    %v521 = vrot.slane %v379, 3
    %v522 = vrot.slane %v384, 3
    %v523 = vrot.slane %v389, 3
    %v524 = vrot.slane %v394, 3
    %v525 = vrot.slane %v399, 3
    %v526 = vrot.slane %v404, 3
    %v527 = vrot.slane %v409, 3
    %v528 = vrot.slane %v414, 3
    %v529 = vrot.slane %v419, 3
    %v530 = vrot.slane %v424, 3
    %v531 = vrot.slane %v429, 3
    %v532 = vrot.slane %v434, 3
    %v549 = vrot.slane %v359, 1
    %v550 = vrot.slane %v364, 1
    %v551 = vrot.slane %v369, 1
    %v552 = vrot.slane %v374, 1
    %v553 = vrot.slane %v379, 1
    %v554 = vrot.slane %v384, 1
    %v555 = vrot.slane %v389, 1
    %v556 = vrot.slane %v394, 1
    %v557 = vrot.slane %v399, 1
    %v558 = vrot.slane %v404, 1
    %v559 = vrot.slane %v409, 1
    %v560 = vrot.slane %v414, 1
    %v561 = vrot.slane %v419, 1
    %v562 = vrot.slane %v424, 1
    %v563 = vrot.slane %v429, 1
    %v564 = vrot.slane %v434, 1
    %vm581 = vcmask 1040384
    %v582 = vsel %vm581, %v453, %v485
    %v583 = vsel %vm581, %v454, %v486
    %v584 = vsel %vm581, %v455, %v487
    %v585 = vsel %vm581, %v456, %v488
    %v586 = vsel %vm581, %v457, %v489
    %v587 = vsel %vm581, %v458, %v490
    %v588 = vsel %vm581, %v459, %v491
    %v589 = vsel %vm581, %v460, %v492
    %v590 = vsel %vm581, %v461, %v493
    %v591 = vsel %vm581, %v462, %v494
    %v592 = vsel %vm581, %v463, %v495
    %v593 = vsel %vm581, %v464, %v496
    %v594 = vsel %vm581, %v465, %v497
    %v595 = vsel %vm581, %v466, %v498
    %v596 = vsel %vm581, %v467, %v499
    %v597 = vsel %vm581, %v468, %v500
    %vm598 = vcmask 1041408
    %v599 = vsel %vm598, %v582, %v517
    %v600 = vsel %vm598, %v583, %v518
    %v601 = vsel %vm598, %v584, %v519
    %v602 = vsel %vm598, %v585, %v520
    %v603 = vsel %vm598, %v586, %v521
    %v604 = vsel %vm598, %v587, %v522
    %v605 = vsel %vm598, %v588, %v523
    %v606 = vsel %vm598, %v589, %v524
    %v607 = vsel %vm598, %v590, %v525
    %v608 = vsel %vm598, %v591, %v526
    %v609 = vsel %vm598, %v592, %v527
    %v610 = vsel %vm598, %v593, %v528
    %v611 = vsel %vm598, %v594, %v529
    %v612 = vsel %vm598, %v595, %v530
    %v613 = vsel %vm598, %v596, %v531
    %v614 = vsel %vm598, %v597, %v532
    %vm615 = vcmask 1042432
    %v616 = vsel %vm615, %v599, %v549
    %v617 = vsel %vm615, %v600, %v550
    %v618 = vsel %vm615, %v601, %v551
    %v619 = vsel %vm615, %v602, %v552
    %v620 = vsel %vm615, %v603, %v553
    %v621 = vsel %vm615, %v604, %v554
    %v622 = vsel %vm615, %v605, %v555
    %v623 = vsel %vm615, %v606, %v556
    %v624 = vsel %vm615, %v607, %v557
    %v625 = vsel %vm615, %v608, %v558
    %v626 = vsel %vm615, %v609, %v559
    %v627 = vsel %vm615, %v610, %v560
    %v628 = vsel %vm615, %v611, %v561
    %v629 = vsel %vm615, %v612, %v562
    %v630 = vsel %vm615, %v613, %v563
    %v631 = vsel %vm615, %v614, %v564
    %vm632 = vcmask 1043456
    %v633 = vsel %vm632, %v616, %v453
    %v634 = vsel %vm632, %v617, %v454
    %v635 = vsel %vm632, %v618, %v455
    %v636 = vsel %vm632, %v619, %v456
    %v637 = vsel %vm632, %v620, %v457
    %v638 = vsel %vm632, %v621, %v458
    %v639 = vsel %vm632, %v622, %v459
    %v640 = vsel %vm632, %v623, %v460
    %v641 = vsel %vm632, %v624, %v461
    %v642 = vsel %vm632, %v625, %v462
    %v643 = vsel %vm632, %v626, %v463
    %v644 = vsel %vm632, %v627, %v464
    %v645 = vsel %vm632, %v628, %v465
    %v646 = vsel %vm632, %v629, %v466
    %v647 = vsel %vm632, %v630, %v467
    %v648 = vsel %vm632, %v631, %v468
    %vm649 = vcmask 1044480
    %v650 = vsel %vm649, %v633, %v485
    %v651 = vsel %vm649, %v634, %v486
    %v652 = vsel %vm649, %v635, %v487
    %v653 = vsel %vm649, %v636, %v488
    %v654 = vsel %vm649, %v637, %v489
    %v655 = vsel %vm649, %v638, %v490
    %v656 = vsel %vm649, %v639, %v491
    %v657 = vsel %vm649, %v640, %v492
    %v658 = vsel %vm649, %v641, %v493
    %v659 = vsel %vm649, %v642, %v494
    %v660 = vsel %vm649, %v643, %v495
    %v661 = vsel %vm649, %v644, %v496
    %v662 = vsel %vm649, %v645, %v497
    %v663 = vsel %vm649, %v646, %v498
    %v664 = vsel %vm649, %v647, %v499
    %v665 = vsel %vm649, %v648, %v500
    %vm666 = vcmask 1045504
    %v667 = vsel %vm666, %v650, %v517
    %v668 = vsel %vm666, %v651, %v518
    %v669 = vsel %vm666, %v652, %v519
    %v670 = vsel %vm666, %v653, %v520
    %v671 = vsel %vm666, %v654, %v521
    %v672 = vsel %vm666, %v655, %v522
    %v673 = vsel %vm666, %v656, %v523
    %v674 = vsel %vm666, %v657, %v524
    %v675 = vsel %vm666, %v658, %v525
    %v676 = vsel %vm666, %v659, %v526
    %v677 = vsel %vm666, %v660, %v527
    %v678 = vsel %vm666, %v661, %v528
    %v679 = vsel %vm666, %v662, %v529
    %v680 = vsel %vm666, %v663, %v530
    %v681 = vsel %vm666, %v664, %v531
    %v682 = vsel %vm666, %v665, %v532
    %vm683 = vcmask 1046528
    %v684 = vsel %vm683, %v667, %v549
    %v685 = vsel %vm683, %v668, %v550
    %v686 = vsel %vm683, %v669, %v551
    %v687 = vsel %vm683, %v670, %v552
    %v688 = vsel %vm683, %v671, %v553
    %v689 = vsel %vm683, %v672, %v554
    %v690 = vsel %vm683, %v673, %v555
    %v691 = vsel %vm683, %v674, %v556
    %v692 = vsel %vm683, %v675, %v557
    %v693 = vsel %vm683, %v676, %v558
    %v694 = vsel %vm683, %v677, %v559
    %v695 = vsel %vm683, %v678, %v560
    %v696 = vsel %vm683, %v679, %v561
    %v697 = vsel %vm683, %v680, %v562
    %v698 = vsel %vm683, %v681, %v563
    %v699 = vsel %vm683, %v682, %v564
    %v700 = vadd.f32 %v208, %v684
    %v701 = vadd.f32 %v213, %v685
    %v702 = vadd.f32 %v218, %v686
    %v703 = vadd.f32 %v223, %v687
    %v704 = vadd.f32 %v228, %v688
    %v705 = vadd.f32 %v233, %v689
    %v706 = vadd.f32 %v238, %v690
    %v707 = vadd.f32 %v243, %v691
    %v708 = vadd.f32 %v248, %v692
    %v709 = vadd.f32 %v253, %v693
    %v710 = vadd.f32 %v258, %v694
    %v711 = vadd.f32 %v263, %v695
    %v712 = vadd.f32 %v268, %v696
    %v713 = vadd.f32 %v273, %v697
    %v714 = vadd.f32 %v278, %v698
    %v715 = vadd.f32 %v283, %v699
    %v716 = vld [vmem:[%s4] sm:$0x1]
    %v718 = vlaneseq
    %v719 = vshrl.u32 %v718, 7
    %v720 = vsub.s32 0, %v719
    %v721 = vrot.slane %v716, %v720
    %v723 = vadd.f32 %v700, %v721
    %v724 = vadd.f32 %v701, %v721
    %v725 = vadd.f32 %v702, %v721
    %v726 = vadd.f32 %v703, %v721
    %v727 = vadd.f32 %v704, %v721
    %v728 = vadd.f32 %v705, %v721
    %v729 = vadd.f32 %v706, %v721
    %v730 = vadd.f32 %v707, %v721
    %v731 = vadd.f32 %v708, %v721
    %v732 = vadd.f32 %v709, %v721
    %v733 = vadd.f32 %v710, %v721
    %v734 = vadd.f32 %v711, %v721
    %v735 = vadd.f32 %v712, %v721
    %v736 = vadd.f32 %v713, %v721
    %v737 = vadd.f32 %v714, %v721
    %v738 = vadd.f32 %v715, %v721
    %739 = vst [vmem:[#allocation2] sm:$0xff] %v723
    %740 = vst [vmem:[#allocation2 + $0x8] sm:$0xff] %v724
    %741 = vst [vmem:[#allocation2 + $0x10] sm:$0xff] %v725
    %742 = vst [vmem:[#allocation2 + $0x18] sm:$0xff] %v726
    %743 = vst [vmem:[#allocation2 + $0x20] sm:$0xff] %v727
    %744 = vst [vmem:[#allocation2 + $0x28] sm:$0xff] %v728
    %745 = vst [vmem:[#allocation2 + $0x30] sm:$0xff] %v729
    %746 = vst [vmem:[#allocation2 + $0x38] sm:$0xff] %v730
    %747 = vst [vmem:[#allocation2 + $0x40] sm:$0xff] %v731
    %748 = vst [vmem:[#allocation2 + $0x48] sm:$0xff] %v732
    %749 = vst [vmem:[#allocation2 + $0x50] sm:$0xff] %v733
    %750 = vst [vmem:[#allocation2 + $0x58] sm:$0xff] %v734
    %751 = vst [vmem:[#allocation2 + $0x60] sm:$0xff] %v735
    %752 = vst [vmem:[#allocation2 + $0x68] sm:$0xff] %v736
    %753 = vst [vmem:[#allocation2 + $0x70] sm:$0xff] %v737
    %754 = vst [vmem:[#allocation2 + $0x78] sm:$0xff] %v738
    %v755 = vld [vmem:[%s3] sm:$0xff]
    %v756 = vld [vmem:[%s3 + $0x8] sm:$0xff]
    %v757 = vld [vmem:[%s3 + $0x10] sm:$0xff]
    %v758 = vld [vmem:[%s3 + $0x18] sm:$0xff]
    %v759 = vld [vmem:[#allocation2] sm:$0x1]
    %v760 = vld [vmem:[#allocation2 + $0x8] sm:$0x1]
    %v761 = vld [vmem:[#allocation2 + $0x10] sm:$0x1]
    %v762 = vld [vmem:[#allocation2 + $0x18] sm:$0x1]
    %v763 = vld [vmem:[#allocation2 + $0x20] sm:$0x1]
    %v764 = vld [vmem:[#allocation2 + $0x28] sm:$0x1]
    %v765 = vld [vmem:[#allocation2 + $0x30] sm:$0x1]
    %v766 = vld [vmem:[#allocation2 + $0x38] sm:$0x1]
    %v767 = vld [vmem:[#allocation2 + $0x40] sm:$0x1]
    %v768 = vld [vmem:[#allocation2 + $0x48] sm:$0x1]
    %v769 = vld [vmem:[#allocation2 + $0x50] sm:$0x1]
    %v770 = vld [vmem:[#allocation2 + $0x58] sm:$0x1]
    %v771 = vld [vmem:[#allocation2 + $0x60] sm:$0x1]
    %v772 = vld [vmem:[#allocation2 + $0x68] sm:$0x1]
    %v773 = vld [vmem:[#allocation2 + $0x70] sm:$0x1]
    %v774 = vld [vmem:[#allocation2 + $0x78] sm:$0x1]
    %vm775 = vcmask 261120
    %v777 = vsel %vm775, 0.0, 0
    %779 = vmatprep.subr.mxu0 0.0
    %780 = vmatpush1.msra.mxu0 %v755
    %781 = vmatprep.subr.mxu0 0.0
    %782 = vmatpush1.msra.mxu0 %v756
    %783 = vmatprep.subr.mxu0 0.0
    %784 = vmatpush1.msra.mxu0 %v757
    %785 = vmatprep.subr.mxu0 0.0
    %786 = vmatpush1.msra.mxu0 %v758
    %787 = vmatprep.subr.mxu0 0.0
    %788 = vmatpush1.msra.mxu0 0.0
    %789 = vmatprep.subr.mxu0 0.0
    %790 = vmatpush1.msra.mxu0 0.0
    %791 = vmatprep.subr.mxu0 0.0
    %792 = vmatpush1.msra.mxu0 0.0
    %793 = vmatprep.subr.mxu0 0.0
    %794 = vmatpush1.msra.mxu0 0.0
    %795 = vmatprep.subr.mxu0 0.0
    %796 = vmatpush1.msra.mxu0 0.0
    %797 = vmatprep.subr.mxu0 0.0
    %798 = vmatpush1.msra.mxu0 0.0
    %799 = vmatprep.subr.mxu0 0.0
    %800 = vmatpush1.msra.mxu0 0.0
    %801 = vmatprep.subr.mxu0 0.0
    %802 = vmatpush1.msra.mxu0 0.0
    %803 = vmatprep.subr.mxu0 0.0
    %804 = vmatpush1.msra.mxu0 0.0
    %805 = vmatprep.subr.mxu0 0.0
    %806 = vmatpush1.msra.mxu0 0.0
    %807 = vmatprep.subr.mxu0 0.0
    %808 = vmatpush1.msra.mxu0 0.0
    %809 = vmatprep.subr.mxu0 0.0
    %810 = vmatpush1.msra.mxu0 0.0
    %811 = vmatprep.subr.mxu0 0.0
    %812 = vmatpush1.msra.mxu0 0.0
    %813 = vmatprep.subr.mxu0 0.0
    %814 = vmatpush1.msra.mxu0 0.0
    %815 = vmatprep.subr.mxu0 0.0
    %816 = vmatpush1.msra.mxu0 0.0
    %817 = vmatprep.subr.mxu0 0.0
    %818 = vmatpush1.msra.mxu0 0.0
    %819 = vmatprep.subr.mxu0 0.0
    %820 = vmatpush1.msra.mxu0 0.0
    %821 = vmatprep.subr.mxu0 0.0
    %822 = vmatpush1.msra.mxu0 0.0
    %823 = vmatprep.subr.mxu0 0.0
    %824 = vmatpush1.msra.mxu0 0.0
    %825 = vmatprep.subr.mxu0 0.0
    %826 = vmatpush1.msra.mxu0 0.0
    %827 = vmatprep.subr.mxu0 0.0
    %828 = vmatpush1.msra.mxu0 0.0
    %829 = vmatprep.subr.mxu0 0.0
    %830 = vmatpush1.msra.mxu0 0.0
    %831 = vmatprep.subr.mxu0 0.0
    %832 = vmatpush1.msra.mxu0 0.0
    %833 = vmatprep.subr.mxu0 0.0
    %834 = vmatpush1.msra.mxu0 0.0
    %835 = vmatprep.subr.mxu0 0.0
    %836 = vmatpush1.msra.mxu0 0.0
    %837 = vmatprep.subr.mxu0 0.0
    %838 = vmatpush1.msra.mxu0 0.0
    %839 = vmatprep.subr.mxu0 0.0
    %840 = vmatpush1.msra.mxu0 0.0
    %841 = vmatprep.subr.mxu0 0.0
    %842 = vmatpush1.msra.mxu0 0.0
    %843 = vmatprep.mubr.f32.mxu0 0.0
    %844 = vmatmul.mubr.f32.gmra.mrb[0].mxu0 %v777
    %v845 = vpop.f32.mrb[0].mxu0
    %v846 = vadd.f32 0.0, %v845
    %v847 = vpop.f32.mrb[0].mxu0
    %848 = vmatprep.mubr.f32.mxu0 0.0
    %849 = vmatmul.mubr.f32.gmra.mrb[0].mxu0 %v777
    %v850 = vpop.f32.mrb[0].mxu0
    %v851 = vadd.f32 0.0, %v850
    %v852 = vpop.f32.mrb[0].mxu0
    %853 = vdwg.mxu0
    %v856 = vrot.slane %v846, 1
    %v857 = vrot.slane %v846, 2
    %v858 = vrot.slane %v846, 3
    %v859 = vrot.slane %v846, 4
    %v860 = vrot.slane %v846, 5
    %v861 = vrot.slane %v846, 6
    %v862 = vrot.slane %v846, 7
    %v863 = vrot.slane %v851, 1
    %v864 = vrot.slane %v851, 2
    %v865 = vrot.slane %v851, 3
    %v866 = vrot.slane %v851, 4
    %v867 = vrot.slane %v851, 5
    %v868 = vrot.slane %v851, 6
    %v869 = vrot.slane %v851, 7
    %v886 = vadd.f32 %v759, %v846
    %v887 = vadd.f32 %v760, %v856
    %v888 = vadd.f32 %v761, %v857
    %v889 = vadd.f32 %v762, %v858
    %v890 = vadd.f32 %v763, %v859
    %v891 = vadd.f32 %v764, %v860
    %v892 = vadd.f32 %v765, %v861
    %v893 = vadd.f32 %v766, %v862
    %v894 = vadd.f32 %v767, %v851
    %v895 = vadd.f32 %v768, %v863
    %v896 = vadd.f32 %v769, %v864
    %v897 = vadd.f32 %v770, %v865
    %v898 = vadd.f32 %v771, %v866
    %v899 = vadd.f32 %v772, %v867
    %v900 = vadd.f32 %v773, %v868
    %v901 = vadd.f32 %v774, %v869
    %v902 = vxor.u32 %v886, 2147483648
    %v903 = vxor.u32 %v887, 2147483648
    %v904 = vxor.u32 %v888, 2147483648
    %v905 = vxor.u32 %v889, 2147483648
    %v906 = vxor.u32 %v890, 2147483648
    %v907 = vxor.u32 %v891, 2147483648
    %v908 = vxor.u32 %v892, 2147483648
    %v909 = vxor.u32 %v893, 2147483648
    %v910 = vxor.u32 %v894, 2147483648
    %v911 = vxor.u32 %v895, 2147483648
    %v912 = vxor.u32 %v896, 2147483648
    %v913 = vxor.u32 %v897, 2147483648
    %v914 = vxor.u32 %v898, 2147483648
    %v915 = vxor.u32 %v899, 2147483648
    %v916 = vxor.u32 %v900, 2147483648
    %v917 = vxor.u32 %v901, 2147483648
    %v918 = vmul.f32 %v902, 1.442695
    %v919 = vpow.pop %v918
    %v920 = vmul.f32 %v903, 1.442695
    %v921 = vpow.pop %v920
    %v922 = vmul.f32 %v904, 1.442695
    %v923 = vpow.pop %v922
    %v924 = vmul.f32 %v905, 1.442695
    %v925 = vpow.pop %v924
    %v926 = vmul.f32 %v906, 1.442695
    %v927 = vpow.pop %v926
    %v928 = vmul.f32 %v907, 1.442695
    %v929 = vpow.pop %v928
    %v930 = vmul.f32 %v908, 1.442695
    %v931 = vpow.pop %v930
    %v932 = vmul.f32 %v909, 1.442695
    %v933 = vpow.pop %v932
    %v934 = vmul.f32 %v910, 1.442695
    %v935 = vpow.pop %v934
    %v936 = vmul.f32 %v911, 1.442695
    %v937 = vpow.pop %v936
    %v938 = vmul.f32 %v912, 1.442695
    %v939 = vpow.pop %v938
    %v940 = vmul.f32 %v913, 1.442695
    %v941 = vpow.pop %v940
    %v942 = vmul.f32 %v914, 1.442695
    %v943 = vpow.pop %v942
    %v944 = vmul.f32 %v915, 1.442695
    %v945 = vpow.pop %v944
    %v946 = vmul.f32 %v916, 1.442695
    %v947 = vpow.pop %v946
    %v948 = vmul.f32 %v917, 1.442695
    %v949 = vpow.pop %v948
    %v950 = vadd.f32 %v919, 1.0
    %v951 = vadd.f32 %v921, 1.0
    %v952 = vadd.f32 %v923, 1.0
    %v953 = vadd.f32 %v925, 1.0
    %v954 = vadd.f32 %v927, 1.0
    %v955 = vadd.f32 %v929, 1.0
    %v956 = vadd.f32 %v931, 1.0
    %v957 = vadd.f32 %v933, 1.0
    %v958 = vadd.f32 %v935, 1.0
    %v959 = vadd.f32 %v937, 1.0
    %v960 = vadd.f32 %v939, 1.0
    %v961 = vadd.f32 %v941, 1.0
    %v962 = vadd.f32 %v943, 1.0
    %v963 = vadd.f32 %v945, 1.0
    %v964 = vadd.f32 %v947, 1.0
    %v965 = vadd.f32 %v949, 1.0
    %v966 = vrcp.pop %v950
    %v967 = vmul.f32 1.0, %v966
    %v968 = vrcp.pop %v951
    %v969 = vmul.f32 1.0, %v968
    %v970 = vrcp.pop %v952
    %v971 = vmul.f32 1.0, %v970
    %v972 = vrcp.pop %v953
    %v973 = vmul.f32 1.0, %v972
    %v974 = vrcp.pop %v954
    %v975 = vmul.f32 1.0, %v974
    %v976 = vrcp.pop %v955
    %v977 = vmul.f32 1.0, %v976
    %v978 = vrcp.pop %v956
    %v979 = vmul.f32 1.0, %v978
    %v980 = vrcp.pop %v957
    %v981 = vmul.f32 1.0, %v980
    %v982 = vrcp.pop %v958
    %v983 = vmul.f32 1.0, %v982
    %v984 = vrcp.pop %v959
    %v985 = vmul.f32 1.0, %v984
    %v986 = vrcp.pop %v960
    %v987 = vmul.f32 1.0, %v986
    %v988 = vrcp.pop %v961
    %v989 = vmul.f32 1.0, %v988
    %v990 = vrcp.pop %v962
    %v991 = vmul.f32 1.0, %v990
    %v992 = vrcp.pop %v963
    %v993 = vmul.f32 1.0, %v992
    %v994 = vrcp.pop %v964
    %v995 = vmul.f32 1.0, %v994
    %v996 = vrcp.pop %v965
    %v997 = vmul.f32 1.0, %v996
    %v998 = vtanh.pop %v886
    %v999 = vtanh.pop %v887
    %v1000 = vtanh.pop %v888
    %v1001 = vtanh.pop %v889
    %v1002 = vtanh.pop %v890
    %v1003 = vtanh.pop %v891
    %v1004 = vtanh.pop %v892
    %v1005 = vtanh.pop %v893
    %v1006 = vtanh.pop %v894
    %v1007 = vtanh.pop %v895
    %v1008 = vtanh.pop %v896
    %v1009 = vtanh.pop %v897
    %v1010 = vtanh.pop %v898
    %v1011 = vtanh.pop %v899
    %v1012 = vtanh.pop %v900
    %v1013 = vtanh.pop %v901
    %v1014 = vmul.f32 %v967, 0.0
    %v1015 = vmul.f32 %v969, 0.0
    %v1016 = vmul.f32 %v971, 0.0
    %v1017 = vmul.f32 %v973, 0.0
    %v1018 = vmul.f32 %v975, 0.0
    %v1019 = vmul.f32 %v977, 0.0
    %v1020 = vmul.f32 %v979, 0.0
    %v1021 = vmul.f32 %v981, 0.0
    %v1022 = vmul.f32 %v983, 0.0
    %v1023 = vmul.f32 %v985, 0.0
    %v1024 = vmul.f32 %v987, 0.0
    %v1025 = vmul.f32 %v989, 0.0
    %v1026 = vmul.f32 %v991, 0.0
    %v1027 = vmul.f32 %v993, 0.0
    %v1028 = vmul.f32 %v995, 0.0
    %v1029 = vmul.f32 %v997, 0.0
    %1046 = vrot.lane.b32.xlu0 %v998, 32
    %v1047 = vpop.permute.xlu0 %1046
    %1048 = vrot.lane.b32.xlu0 %v999, 32
    %v1049 = vpop.permute.xlu0 %1048
    %1050 = vrot.lane.b32.xlu0 %v1000, 32
    %v1051 = vpop.permute.xlu0 %1050
    %1052 = vrot.lane.b32.xlu0 %v1001, 32
    %v1053 = vpop.permute.xlu0 %1052
    %1054 = vrot.lane.b32.xlu0 %v1002, 32
    %v1055 = vpop.permute.xlu0 %1054
    %1056 = vrot.lane.b32.xlu0 %v1003, 32
    %v1057 = vpop.permute.xlu0 %1056
    %1058 = vrot.lane.b32.xlu0 %v1004, 32
    %v1059 = vpop.permute.xlu0 %1058
    %1060 = vrot.lane.b32.xlu0 %v1005, 32
    %v1061 = vpop.permute.xlu0 %1060
    %1062 = vrot.lane.b32.xlu0 %v1006, 32
    %v1063 = vpop.permute.xlu0 %1062
    %1064 = vrot.lane.b32.xlu0 %v1007, 32
    %v1065 = vpop.permute.xlu0 %1064
    %1066 = vrot.lane.b32.xlu0 %v1008, 32
    %v1067 = vpop.permute.xlu0 %1066
    %1068 = vrot.lane.b32.xlu0 %v1009, 32
    %v1069 = vpop.permute.xlu0 %1068
    %1070 = vrot.lane.b32.xlu0 %v1010, 32
    %v1071 = vpop.permute.xlu0 %1070
    %1072 = vrot.lane.b32.xlu0 %v1011, 32
    %v1073 = vpop.permute.xlu0 %1072
    %1074 = vrot.lane.b32.xlu0 %v1012, 32
    %v1075 = vpop.permute.xlu0 %1074
    %1076 = vrot.lane.b32.xlu0 %v1013, 32
    %v1077 = vpop.permute.xlu0 %1076
    %v1094 = vmul.f32 %v967, %v1047
    %v1095 = vmul.f32 %v969, %v1049
    %v1096 = vmul.f32 %v971, %v1051
    %v1097 = vmul.f32 %v973, %v1053
    %v1098 = vmul.f32 %v975, %v1055
    %v1099 = vmul.f32 %v977, %v1057
    %v1100 = vmul.f32 %v979, %v1059
    %v1101 = vmul.f32 %v981, %v1061
    %v1102 = vmul.f32 %v983, %v1063
    %v1103 = vmul.f32 %v985, %v1065
    %v1104 = vmul.f32 %v987, %v1067
    %v1105 = vmul.f32 %v989, %v1069
    %v1106 = vmul.f32 %v991, %v1071
    %v1107 = vmul.f32 %v993, %v1073
    %v1108 = vmul.f32 %v995, %v1075
    %v1109 = vmul.f32 %v997, %v1077
    %1126 = vrot.lane.b32.xlu0 %v1094, 32
    %v1127 = vpop.permute.xlu0 %1126
    %1128 = vrot.lane.b32.xlu0 %v1095, 32
    %v1129 = vpop.permute.xlu0 %1128
    %1130 = vrot.lane.b32.xlu0 %v1096, 32
    %v1131 = vpop.permute.xlu0 %1130
    %1132 = vrot.lane.b32.xlu0 %v1097, 32
    %v1133 = vpop.permute.xlu0 %1132
    %1134 = vrot.lane.b32.xlu0 %v1098, 32
    %v1135 = vpop.permute.xlu0 %1134
    %1136 = vrot.lane.b32.xlu0 %v1099, 32
    %v1137 = vpop.permute.xlu0 %1136
    %1138 = vrot.lane.b32.xlu0 %v1100, 32
    %v1139 = vpop.permute.xlu0 %1138
    %1140 = vrot.lane.b32.xlu0 %v1101, 32
    %v1141 = vpop.permute.xlu0 %1140
    %1142 = vrot.lane.b32.xlu0 %v1102, 32
    %v1143 = vpop.permute.xlu0 %1142
    %1144 = vrot.lane.b32.xlu0 %v1103, 32
    %v1145 = vpop.permute.xlu0 %1144
    %1146 = vrot.lane.b32.xlu0 %v1104, 32
    %v1147 = vpop.permute.xlu0 %1146
    %1148 = vrot.lane.b32.xlu0 %v1105, 32
    %v1149 = vpop.permute.xlu0 %1148
    %1150 = vrot.lane.b32.xlu0 %v1106, 32
    %v1151 = vpop.permute.xlu0 %1150
    %1152 = vrot.lane.b32.xlu0 %v1107, 32
    %v1153 = vpop.permute.xlu0 %1152
    %1154 = vrot.lane.b32.xlu0 %v1108, 32
    %v1155 = vpop.permute.xlu0 %1154
    %1156 = vrot.lane.b32.xlu0 %v1109, 32
    %v1157 = vpop.permute.xlu0 %1156
    %v1174 = vadd.f32 %v1014, %v1127
    %v1175 = vadd.f32 %v1015, %v1129
    %v1176 = vadd.f32 %v1016, %v1131
    %v1177 = vadd.f32 %v1017, %v1133
    %v1178 = vadd.f32 %v1018, %v1135
    %v1179 = vadd.f32 %v1019, %v1137
    %v1180 = vadd.f32 %v1020, %v1139
    %v1181 = vadd.f32 %v1021, %v1141
    %v1182 = vadd.f32 %v1022, %v1143
    %v1183 = vadd.f32 %v1023, %v1145
    %v1184 = vadd.f32 %v1024, %v1147
    %v1185 = vadd.f32 %v1025, %v1149
    %v1186 = vadd.f32 %v1026, %v1151
    %v1187 = vadd.f32 %v1027, %v1153
    %v1188 = vadd.f32 %v1028, %v1155
    %v1189 = vadd.f32 %v1029, %v1157
    %v1190 = vtanh.pop %v1174
    %v1191 = vtanh.pop %v1175
    %v1192 = vtanh.pop %v1176
    %v1193 = vtanh.pop %v1177
    %v1194 = vtanh.pop %v1178
    %v1195 = vtanh.pop %v1179
    %v1196 = vtanh.pop %v1180
    %v1197 = vtanh.pop %v1181
    %v1198 = vtanh.pop %v1182
    %v1199 = vtanh.pop %v1183
    %v1200 = vtanh.pop %v1184
    %v1201 = vtanh.pop %v1185
    %v1202 = vtanh.pop %v1186
    %v1203 = vtanh.pop %v1187
    %v1204 = vtanh.pop %v1188
    %v1205 = vtanh.pop %v1189
    %1222 = vrot.lane.b32.xlu0 %v1190, 32
    %v1223 = vpop.permute.xlu0 %1222
    %1224 = vrot.lane.b32.xlu0 %v1191, 32
    %v1225 = vpop.permute.xlu0 %1224
    %1226 = vrot.lane.b32.xlu0 %v1192, 32
    %v1227 = vpop.permute.xlu0 %1226
    %1228 = vrot.lane.b32.xlu0 %v1193, 32
    %v1229 = vpop.permute.xlu0 %1228
    %1230 = vrot.lane.b32.xlu0 %v1194, 32
    %v1231 = vpop.permute.xlu0 %1230
    %1232 = vrot.lane.b32.xlu0 %v1195, 32
    %v1233 = vpop.permute.xlu0 %1232
    %1234 = vrot.lane.b32.xlu0 %v1196, 32
    %v1235 = vpop.permute.xlu0 %1234
    %1236 = vrot.lane.b32.xlu0 %v1197, 32
    %v1237 = vpop.permute.xlu0 %1236
    %1238 = vrot.lane.b32.xlu0 %v1198, 32
    %v1239 = vpop.permute.xlu0 %1238
    %1240 = vrot.lane.b32.xlu0 %v1199, 32
    %v1241 = vpop.permute.xlu0 %1240
    %1242 = vrot.lane.b32.xlu0 %v1200, 32
    %v1243 = vpop.permute.xlu0 %1242
    %1244 = vrot.lane.b32.xlu0 %v1201, 32
    %v1245 = vpop.permute.xlu0 %1244
    %1246 = vrot.lane.b32.xlu0 %v1202, 32
    %v1247 = vpop.permute.xlu0 %1246
    %1248 = vrot.lane.b32.xlu0 %v1203, 32
    %v1249 = vpop.permute.xlu0 %1248
    %1250 = vrot.lane.b32.xlu0 %v1204, 32
    %v1251 = vpop.permute.xlu0 %1250
    %1252 = vrot.lane.b32.xlu0 %v1205, 32
    %v1253 = vpop.permute.xlu0 %1252
    %v1270 = vmul.f32 %v967, %v1223
    %v1271 = vmul.f32 %v969, %v1225
    %v1272 = vmul.f32 %v971, %v1227
    %v1273 = vmul.f32 %v973, %v1229
    %v1274 = vmul.f32 %v975, %v1231
    %v1275 = vmul.f32 %v977, %v1233
    %v1276 = vmul.f32 %v979, %v1235
    %v1277 = vmul.f32 %v981, %v1237
    %v1278 = vmul.f32 %v983, %v1239
    %v1279 = vmul.f32 %v985, %v1241
    %v1280 = vmul.f32 %v987, %v1243
    %v1281 = vmul.f32 %v989, %v1245
    %v1282 = vmul.f32 %v991, %v1247
    %v1283 = vmul.f32 %v993, %v1249
    %v1284 = vmul.f32 %v995, %v1251
    %v1285 = vmul.f32 %v997, %v1253
    %1302 = vrot.lane.b32.xlu0 %v1270, 64
    %v1303 = vpop.permute.xlu0 %1302
    %1304 = vrot.lane.b32.xlu0 %v1271, 64
    %v1305 = vpop.permute.xlu0 %1304
    %1306 = vrot.lane.b32.xlu0 %v1272, 64
    %v1307 = vpop.permute.xlu0 %1306
    %1308 = vrot.lane.b32.xlu0 %v1273, 64
    %v1309 = vpop.permute.xlu0 %1308
    %1310 = vrot.lane.b32.xlu0 %v1274, 64
    %v1311 = vpop.permute.xlu0 %1310
    %1312 = vrot.lane.b32.xlu0 %v1275, 64
    %v1313 = vpop.permute.xlu0 %1312
    %1314 = vrot.lane.b32.xlu0 %v1276, 64
    %v1315 = vpop.permute.xlu0 %1314
    %1316 = vrot.lane.b32.xlu0 %v1277, 64
    %v1317 = vpop.permute.xlu0 %1316
    %1318 = vrot.lane.b32.xlu0 %v1278, 64
    %v1319 = vpop.permute.xlu0 %1318
    %1320 = vrot.lane.b32.xlu0 %v1279, 64
    %v1321 = vpop.permute.xlu0 %1320
    %1322 = vrot.lane.b32.xlu0 %v1280, 64
    %v1323 = vpop.permute.xlu0 %1322
    %1324 = vrot.lane.b32.xlu0 %v1281, 64
    %v1325 = vpop.permute.xlu0 %1324
    %1326 = vrot.lane.b32.xlu0 %v1282, 64
    %v1327 = vpop.permute.xlu0 %1326
    %1328 = vrot.lane.b32.xlu0 %v1283, 64
    %v1329 = vpop.permute.xlu0 %1328
    %1330 = vrot.lane.b32.xlu0 %v1284, 64
    %v1331 = vpop.permute.xlu0 %1330
    %1332 = vrot.lane.b32.xlu0 %v1285, 64
    %v1333 = vpop.permute.xlu0 %1332
    %vm1350 = vcmask 253952
    %1351 = vst.msk [vmem:[#allocation3] sm:$0x1] %vm1350, %v1303
    %1352 = vst.msk [vmem:[#allocation3 + $0x8] sm:$0x1] %vm1350, %v1305
    %1353 = vst.msk [vmem:[#allocation3 + $0x10] sm:$0x1] %vm1350, %v1307
    %1354 = vst.msk [vmem:[#allocation3 + $0x18] sm:$0x1] %vm1350, %v1309
    %1355 = vst.msk [vmem:[#allocation3 + $0x20] sm:$0x1] %vm1350, %v1311
    %1356 = vst.msk [vmem:[#allocation3 + $0x28] sm:$0x1] %vm1350, %v1313
    %1357 = vst.msk [vmem:[#allocation3 + $0x30] sm:$0x1] %vm1350, %v1315
    %1358 = vst.msk [vmem:[#allocation3 + $0x38] sm:$0x1] %vm1350, %v1317
    %1359 = vst.msk [vmem:[#allocation3 + $0x40] sm:$0x1] %vm1350, %v1319
    %1360 = vst.msk [vmem:[#allocation3 + $0x48] sm:$0x1] %vm1350, %v1321
    %1361 = vst.msk [vmem:[#allocation3 + $0x50] sm:$0x1] %vm1350, %v1323
    %1362 = vst.msk [vmem:[#allocation3 + $0x58] sm:$0x1] %vm1350, %v1325
    %1363 = vst.msk [vmem:[#allocation3 + $0x60] sm:$0x1] %vm1350, %v1327
    %1364 = vst.msk [vmem:[#allocation3 + $0x68] sm:$0x1] %vm1350, %v1329
    %1365 = vst.msk [vmem:[#allocation3 + $0x70] sm:$0x1] %vm1350, %v1331
    %1366 = vst.msk [vmem:[#allocation3 + $0x78] sm:$0x1] %vm1350, %v1333
    %v1367 = vld [vmem:[#allocation2 + $0x1] sm:$0x1]
    %v1368 = vld [vmem:[#allocation2 + $0x9] sm:$0x1]
    %v1369 = vld [vmem:[#allocation2 + $0x11] sm:$0x1]
    %v1370 = vld [vmem:[#allocation2 + $0x19] sm:$0x1]
    %v1371 = vld [vmem:[#allocation2 + $0x21] sm:$0x1]
    %v1372 = vld [vmem:[#allocation2 + $0x29] sm:$0x1]
    %v1373 = vld [vmem:[#allocation2 + $0x31] sm:$0x1]
    %v1374 = vld [vmem:[#allocation2 + $0x39] sm:$0x1]
    %v1375 = vld [vmem:[#allocation2 + $0x41] sm:$0x1]
    %v1376 = vld [vmem:[#allocation2 + $0x49] sm:$0x1]
    %v1377 = vld [vmem:[#allocation2 + $0x51] sm:$0x1]
    %v1378 = vld [vmem:[#allocation2 + $0x59] sm:$0x1]
    %v1379 = vld [vmem:[#allocation2 + $0x61] sm:$0x1]
    %v1380 = vld [vmem:[#allocation2 + $0x69] sm:$0x1]
    %v1381 = vld [vmem:[#allocation2 + $0x71] sm:$0x1]
    %v1382 = vld [vmem:[#allocation2 + $0x79] sm:$0x1]
    %v1383 = vrot.slane %v1271, 7
    %vm1384 = vcmask 1041409
    %v1385 = vsel %vm1384, %v1383, %v1270
    %v1386 = vrot.slane %v1272, 6
    %vm1387 = vcmask 1042434
    %v1388 = vsel %vm1387, %v1386, %v1385
    %v1389 = vrot.slane %v1273, 5
    %vm1390 = vcmask 1043459
    %v1391 = vsel %vm1390, %v1389, %v1388
    %v1392 = vrot.slane %v1274, 4
    %vm1393 = vcmask 1044484
    %v1394 = vsel %vm1393, %v1392, %v1391
    %v1395 = vrot.slane %v1275, 3
    %vm1396 = vcmask 1045509
    %v1397 = vsel %vm1396, %v1395, %v1394
    %v1398 = vrot.slane %v1276, 2
    %vm1399 = vcmask 1046534
    %v1400 = vsel %vm1399, %v1398, %v1397
    %v1401 = vrot.slane %v1277, 1
    %vm1402 = vcmask 1047559
    %v1403 = vsel %vm1402, %v1401, %v1400
    %v1404 = vrot.slane %v1279, 7
    %v1405 = vsel %vm1384, %v1404, %v1278
    %v1406 = vrot.slane %v1280, 6
    %v1407 = vsel %vm1387, %v1406, %v1405
    %v1408 = vrot.slane %v1281, 5
    %v1409 = vsel %vm1390, %v1408, %v1407
    %v1410 = vrot.slane %v1282, 4
    %v1411 = vsel %vm1393, %v1410, %v1409
    %v1412 = vrot.slane %v1283, 3
    %v1413 = vsel %vm1396, %v1412, %v1411
    %v1414 = vrot.slane %v1284, 2
    %v1415 = vsel %vm1399, %v1414, %v1413
    %v1416 = vrot.slane %v1285, 1
    %v1417 = vsel %vm1402, %v1416, %v1415
    %1418 = vrot.lane.b32.xlu0 %v1403, 64
    %v1419 = vpop.permute.xlu0 %1418
    %1420 = vrot.lane.b32.xlu0 %v1417, 64
    %v1421 = vpop.permute.xlu0 %1420
    %v1422 = vsel %vm775, %v1419, 0
    %v1424 = vsel %vm775, %v1421, 0
    %1426 = vmatprep.subr.mxu0 0.0
    %1427 = vmatpush1.msra.mxu0 %v755
    %1428 = vmatprep.subr.mxu0 0.0
    %1429 = vmatpush1.msra.mxu0 %v756
    %1430 = vmatprep.subr.mxu0 0.0
    %1431 = vmatpush1.msra.mxu0 %v757
    %1432 = vmatprep.subr.mxu0 0.0
    %1433 = vmatpush1.msra.mxu0 %v758
    %1434 = vmatprep.subr.mxu0 0.0
    %1435 = vmatpush1.msra.mxu0 0.0
    %1436 = vmatprep.subr.mxu0 0.0
    %1437 = vmatpush1.msra.mxu0 0.0
    %1438 = vmatprep.subr.mxu0 0.0
    %1439 = vmatpush1.msra.mxu0 0.0
    %1440 = vmatprep.subr.mxu0 0.0
    %1441 = vmatpush1.msra.mxu0 0.0
    %1442 = vmatprep.subr.mxu0 0.0
    %1443 = vmatpush1.msra.mxu0 0.0
    %1444 = vmatprep.subr.mxu0 0.0
    %1445 = vmatpush1.msra.mxu0 0.0
    %1446 = vmatprep.subr.mxu0 0.0
    %1447 = vmatpush1.msra.mxu0 0.0
    %1448 = vmatprep.subr.mxu0 0.0
    %1449 = vmatpush1.msra.mxu0 0.0
    %1450 = vmatprep.subr.mxu0 0.0
    %1451 = vmatpush1.msra.mxu0 0.0
    %1452 = vmatprep.subr.mxu0 0.0
    %1453 = vmatpush1.msra.mxu0 0.0
    %1454 = vmatprep.subr.mxu0 0.0
    %1455 = vmatpush1.msra.mxu0 0.0
    %1456 = vmatprep.subr.mxu0 0.0
    %1457 = vmatpush1.msra.mxu0 0.0
    %1458 = vmatprep.subr.mxu0 0.0
    %1459 = vmatpush1.msra.mxu0 0.0
    %1460 = vmatprep.subr.mxu0 0.0
    %1461 = vmatpush1.msra.mxu0 0.0
    %1462 = vmatprep.subr.mxu0 0.0
    %1463 = vmatpush1.msra.mxu0 0.0
    %1464 = vmatprep.subr.mxu0 0.0
    %1465 = vmatpush1.msra.mxu0 0.0
    %1466 = vmatprep.subr.mxu0 0.0
    %1467 = vmatpush1.msra.mxu0 0.0
    %1468 = vmatprep.subr.mxu0 0.0
    %1469 = vmatpush1.msra.mxu0 0.0
    %1470 = vmatprep.subr.mxu0 0.0
    %1471 = vmatpush1.msra.mxu0 0.0
    %1472 = vmatprep.subr.mxu0 0.0
    %1473 = vmatpush1.msra.mxu0 0.0
    %1474 = vmatprep.subr.mxu0 0.0
    %1475 = vmatpush1.msra.mxu0 0.0
    %1476 = vmatprep.subr.mxu0 0.0
    %1477 = vmatpush1.msra.mxu0 0.0
    %1478 = vmatprep.subr.mxu0 0.0
    %1479 = vmatpush1.msra.mxu0 0.0
    %1480 = vmatprep.subr.mxu0 0.0
    %1481 = vmatpush1.msra.mxu0 0.0
    %1482 = vmatprep.subr.mxu0 0.0
    %1483 = vmatpush1.msra.mxu0 0.0
    %1484 = vmatprep.subr.mxu0 0.0
    %1485 = vmatpush1.msra.mxu0 0.0
    %1486 = vmatprep.subr.mxu0 0.0
    %1487 = vmatpush1.msra.mxu0 0.0
    %1488 = vmatprep.subr.mxu0 0.0
    %1489 = vmatpush1.msra.mxu0 0.0
    %1490 = vmatprep.mubr.f32.mxu0 0.0
    %1491 = vmatmul.mubr.f32.gmra.mrb[0].mxu0 %v1422
    %v1492 = vpop.f32.mrb[0].mxu0
    %v1493 = vadd.f32 0.0, %v1492
    %v1494 = vpop.f32.mrb[0].mxu0
    %1495 = vmatprep.mubr.f32.mxu0 0.0
    %1496 = vmatmul.mubr.f32.gmra.mrb[0].mxu0 %v1424
    %v1497 = vpop.f32.mrb[0].mxu0
    %v1498 = vadd.f32 0.0, %v1497
    %v1499 = vpop.f32.mrb[0].mxu0
    %1500 = vdwg.mxu0
    %v1503 = vrot.slane %v1493, 1
    %v1504 = vrot.slane %v1493, 2
    %v1505 = vrot.slane %v1493, 3
    %v1506 = vrot.slane %v1493, 4
    %v1507 = vrot.slane %v1493, 5
    %v1508 = vrot.slane %v1493, 6
    %v1509 = vrot.slane %v1493, 7
    %v1510 = vrot.slane %v1498, 1
    %v1511 = vrot.slane %v1498, 2
    %v1512 = vrot.slane %v1498, 3
    %v1513 = vrot.slane %v1498, 4
    %v1514 = vrot.slane %v1498, 5
    %v1515 = vrot.slane %v1498, 6
    %v1516 = vrot.slane %v1498, 7
    %v1533 = vadd.f32 %v1367, %v1493
    %v1534 = vadd.f32 %v1368, %v1503
    %v1535 = vadd.f32 %v1369, %v1504
    %v1536 = vadd.f32 %v1370, %v1505
    %v1537 = vadd.f32 %v1371, %v1506
    %v1538 = vadd.f32 %v1372, %v1507
    %v1539 = vadd.f32 %v1373, %v1508
    %v1540 = vadd.f32 %v1374, %v1509
    %v1541 = vadd.f32 %v1375, %v1498
    %v1542 = vadd.f32 %v1376, %v1510
    %v1543 = vadd.f32 %v1377, %v1511
    %v1544 = vadd.f32 %v1378, %v1512
    %v1545 = vadd.f32 %v1379, %v1513
    %v1546 = vadd.f32 %v1380, %v1514
    %v1547 = vadd.f32 %v1381, %v1515
    %v1548 = vadd.f32 %v1382, %v1516
    %v1549 = vxor.u32 %v1533, 2147483648
    %v1550 = vxor.u32 %v1534, 2147483648
    %v1551 = vxor.u32 %v1535, 2147483648
    %v1552 = vxor.u32 %v1536, 2147483648
    %v1553 = vxor.u32 %v1537, 2147483648
    %v1554 = vxor.u32 %v1538, 2147483648
    %v1555 = vxor.u32 %v1539, 2147483648
    %v1556 = vxor.u32 %v1540, 2147483648
    %v1557 = vxor.u32 %v1541, 2147483648
    %v1558 = vxor.u32 %v1542, 2147483648
    %v1559 = vxor.u32 %v1543, 2147483648
    %v1560 = vxor.u32 %v1544, 2147483648
    %v1561 = vxor.u32 %v1545, 2147483648
    %v1562 = vxor.u32 %v1546, 2147483648
    %v1563 = vxor.u32 %v1547, 2147483648
    %v1564 = vxor.u32 %v1548, 2147483648
    %v1565 = vmul.f32 %v1549, 1.442695
    %v1566 = vpow.pop %v1565
    %v1567 = vmul.f32 %v1550, 1.442695
    %v1568 = vpow.pop %v1567
    %v1569 = vmul.f32 %v1551, 1.442695
    %v1570 = vpow.pop %v1569
    %v1571 = vmul.f32 %v1552, 1.442695
    %v1572 = vpow.pop %v1571
    %v1573 = vmul.f32 %v1553, 1.442695
    %v1574 = vpow.pop %v1573
    %v1575 = vmul.f32 %v1554, 1.442695
    %v1576 = vpow.pop %v1575
    %v1577 = vmul.f32 %v1555, 1.442695
    %v1578 = vpow.pop %v1577
    %v1579 = vmul.f32 %v1556, 1.442695
    %v1580 = vpow.pop %v1579
    %v1581 = vmul.f32 %v1557, 1.442695
    %v1582 = vpow.pop %v1581
    %v1583 = vmul.f32 %v1558, 1.442695
    %v1584 = vpow.pop %v1583
    %v1585 = vmul.f32 %v1559, 1.442695
    %v1586 = vpow.pop %v1585
    %v1587 = vmul.f32 %v1560, 1.442695
    %v1588 = vpow.pop %v1587
    %v1589 = vmul.f32 %v1561, 1.442695
    %v1590 = vpow.pop %v1589
    %v1591 = vmul.f32 %v1562, 1.442695
    %v1592 = vpow.pop %v1591
    %v1593 = vmul.f32 %v1563, 1.442695
    %v1594 = vpow.pop %v1593
    %v1595 = vmul.f32 %v1564, 1.442695
    %v1596 = vpow.pop %v1595
    %v1597 = vadd.f32 %v1566, 1.0
    %v1598 = vadd.f32 %v1568, 1.0
    %v1599 = vadd.f32 %v1570, 1.0
    %v1600 = vadd.f32 %v1572, 1.0
    %v1601 = vadd.f32 %v1574, 1.0
    %v1602 = vadd.f32 %v1576, 1.0
    %v1603 = vadd.f32 %v1578, 1.0
    %v1604 = vadd.f32 %v1580, 1.0
    %v1605 = vadd.f32 %v1582, 1.0
    %v1606 = vadd.f32 %v1584, 1.0
    %v1607 = vadd.f32 %v1586, 1.0
    %v1608 = vadd.f32 %v1588, 1.0
    %v1609 = vadd.f32 %v1590, 1.0
    %v1610 = vadd.f32 %v1592, 1.0
    %v1611 = vadd.f32 %v1594, 1.0
    %v1612 = vadd.f32 %v1596, 1.0
    %v1613 = vrcp.pop %v1597
    %v1614 = vmul.f32 1.0, %v1613
    %v1615 = vrcp.pop %v1598
    %v1616 = vmul.f32 1.0, %v1615
    %v1617 = vrcp.pop %v1599
    %v1618 = vmul.f32 1.0, %v1617
    %v1619 = vrcp.pop %v1600
    %v1620 = vmul.f32 1.0, %v1619
    %v1621 = vrcp.pop %v1601
    %v1622 = vmul.f32 1.0, %v1621
    %v1623 = vrcp.pop %v1602
    %v1624 = vmul.f32 1.0, %v1623
    %v1625 = vrcp.pop %v1603
    %v1626 = vmul.f32 1.0, %v1625
    %v1627 = vrcp.pop %v1604
    %v1628 = vmul.f32 1.0, %v1627
    %v1629 = vrcp.pop %v1605
    %v1630 = vmul.f32 1.0, %v1629
    %v1631 = vrcp.pop %v1606
    %v1632 = vmul.f32 1.0, %v1631
    %v1633 = vrcp.pop %v1607
    %v1634 = vmul.f32 1.0, %v1633
    %v1635 = vrcp.pop %v1608
    %v1636 = vmul.f32 1.0, %v1635
    %v1637 = vrcp.pop %v1609
    %v1638 = vmul.f32 1.0, %v1637
    %v1639 = vrcp.pop %v1610
    %v1640 = vmul.f32 1.0, %v1639
    %v1641 = vrcp.pop %v1611
    %v1642 = vmul.f32 1.0, %v1641
    %v1643 = vrcp.pop %v1612
    %v1644 = vmul.f32 1.0, %v1643
    %v1645 = vtanh.pop %v1533
    %v1646 = vtanh.pop %v1534
    %v1647 = vtanh.pop %v1535
    %v1648 = vtanh.pop %v1536
    %v1649 = vtanh.pop %v1537
    %v1650 = vtanh.pop %v1538
    %v1651 = vtanh.pop %v1539
    %v1652 = vtanh.pop %v1540
    %v1653 = vtanh.pop %v1541
    %v1654 = vtanh.pop %v1542
    %v1655 = vtanh.pop %v1543
    %v1656 = vtanh.pop %v1544
    %v1657 = vtanh.pop %v1545
    %v1658 = vtanh.pop %v1546
    %v1659 = vtanh.pop %v1547
    %v1660 = vtanh.pop %v1548
    %v1661 = vmul.f32 %v1614, %v1174
    %v1662 = vmul.f32 %v1616, %v1175
    %v1663 = vmul.f32 %v1618, %v1176
    %v1664 = vmul.f32 %v1620, %v1177
    %v1665 = vmul.f32 %v1622, %v1178
    %v1666 = vmul.f32 %v1624, %v1179
    %v1667 = vmul.f32 %v1626, %v1180
    %v1668 = vmul.f32 %v1628, %v1181
    %v1669 = vmul.f32 %v1630, %v1182
    %v1670 = vmul.f32 %v1632, %v1183
    %v1671 = vmul.f32 %v1634, %v1184
    %v1672 = vmul.f32 %v1636, %v1185
    %v1673 = vmul.f32 %v1638, %v1186
    %v1674 = vmul.f32 %v1640, %v1187
    %v1675 = vmul.f32 %v1642, %v1188
    %v1676 = vmul.f32 %v1644, %v1189
    %1693 = vrot.lane.b32.xlu0 %v1645, 32
    %v1694 = vpop.permute.xlu0 %1693
    %1695 = vrot.lane.b32.xlu0 %v1646, 32
    %v1696 = vpop.permute.xlu0 %1695
    %1697 = vrot.lane.b32.xlu0 %v1647, 32
    %v1698 = vpop.permute.xlu0 %1697
    %1699 = vrot.lane.b32.xlu0 %v1648, 32
    %v1700 = vpop.permute.xlu0 %1699
    %1701 = vrot.lane.b32.xlu0 %v1649, 32
    %v1702 = vpop.permute.xlu0 %1701
    %1703 = vrot.lane.b32.xlu0 %v1650, 32
    %v1704 = vpop.permute.xlu0 %1703
    %1705 = vrot.lane.b32.xlu0 %v1651, 32
    %v1706 = vpop.permute.xlu0 %1705
    %1707 = vrot.lane.b32.xlu0 %v1652, 32
    %v1708 = vpop.permute.xlu0 %1707
    %1709 = vrot.lane.b32.xlu0 %v1653, 32
    %v1710 = vpop.permute.xlu0 %1709
    %1711 = vrot.lane.b32.xlu0 %v1654, 32
    %v1712 = vpop.permute.xlu0 %1711
    %1713 = vrot.lane.b32.xlu0 %v1655, 32
    %v1714 = vpop.permute.xlu0 %1713
    %1715 = vrot.lane.b32.xlu0 %v1656, 32
    %v1716 = vpop.permute.xlu0 %1715
    %1717 = vrot.lane.b32.xlu0 %v1657, 32
    %v1718 = vpop.permute.xlu0 %1717
    %1719 = vrot.lane.b32.xlu0 %v1658, 32
    %v1720 = vpop.permute.xlu0 %1719
    %1721 = vrot.lane.b32.xlu0 %v1659, 32
    %v1722 = vpop.permute.xlu0 %1721
    %1723 = vrot.lane.b32.xlu0 %v1660, 32
    %v1724 = vpop.permute.xlu0 %1723
    %v1741 = vmul.f32 %v1614, %v1694
    %v1742 = vmul.f32 %v1616, %v1696
    %v1743 = vmul.f32 %v1618, %v1698
    %v1744 = vmul.f32 %v1620, %v1700
    %v1745 = vmul.f32 %v1622, %v1702
    %v1746 = vmul.f32 %v1624, %v1704
    %v1747 = vmul.f32 %v1626, %v1706
    %v1748 = vmul.f32 %v1628, %v1708
    %v1749 = vmul.f32 %v1630, %v1710
    %v1750 = vmul.f32 %v1632, %v1712
    %v1751 = vmul.f32 %v1634, %v1714
    %v1752 = vmul.f32 %v1636, %v1716
    %v1753 = vmul.f32 %v1638, %v1718
    %v1754 = vmul.f32 %v1640, %v1720
    %v1755 = vmul.f32 %v1642, %v1722
    %v1756 = vmul.f32 %v1644, %v1724
    %1773 = vrot.lane.b32.xlu0 %v1741, 32
    %v1774 = vpop.permute.xlu0 %1773
    %1775 = vrot.lane.b32.xlu0 %v1742, 32
    %v1776 = vpop.permute.xlu0 %1775
    %1777 = vrot.lane.b32.xlu0 %v1743, 32
    %v1778 = vpop.permute.xlu0 %1777
    %1779 = vrot.lane.b32.xlu0 %v1744, 32
    %v1780 = vpop.permute.xlu0 %1779
    %1781 = vrot.lane.b32.xlu0 %v1745, 32
    %v1782 = vpop.permute.xlu0 %1781
    %1783 = vrot.lane.b32.xlu0 %v1746, 32
    %v1784 = vpop.permute.xlu0 %1783
    %1785 = vrot.lane.b32.xlu0 %v1747, 32
    %v1786 = vpop.permute.xlu0 %1785
    %1787 = vrot.lane.b32.xlu0 %v1748, 32
    %v1788 = vpop.permute.xlu0 %1787
    %1789 = vrot.lane.b32.xlu0 %v1749, 32
    %v1790 = vpop.permute.xlu0 %1789
    %1791 = vrot.lane.b32.xlu0 %v1750, 32
    %v1792 = vpop.permute.xlu0 %1791
    %1793 = vrot.lane.b32.xlu0 %v1751, 32
    %v1794 = vpop.permute.xlu0 %1793
    %1795 = vrot.lane.b32.xlu0 %v1752, 32
    %v1796 = vpop.permute.xlu0 %1795
    %1797 = vrot.lane.b32.xlu0 %v1753, 32
    %v1798 = vpop.permute.xlu0 %1797
    %1799 = vrot.lane.b32.xlu0 %v1754, 32
    %v1800 = vpop.permute.xlu0 %1799
    %1801 = vrot.lane.b32.xlu0 %v1755, 32
    %v1802 = vpop.permute.xlu0 %1801
    %1803 = vrot.lane.b32.xlu0 %v1756, 32
    %v1804 = vpop.permute.xlu0 %1803
    %v1821 = vadd.f32 %v1661, %v1774
    %v1822 = vadd.f32 %v1662, %v1776
    %v1823 = vadd.f32 %v1663, %v1778
    %v1824 = vadd.f32 %v1664, %v1780
    %v1825 = vadd.f32 %v1665, %v1782
    %v1826 = vadd.f32 %v1666, %v1784
    %v1827 = vadd.f32 %v1667, %v1786
    %v1828 = vadd.f32 %v1668, %v1788
    %v1829 = vadd.f32 %v1669, %v1790
    %v1830 = vadd.f32 %v1670, %v1792
    %v1831 = vadd.f32 %v1671, %v1794
    %v1832 = vadd.f32 %v1672, %v1796
    %v1833 = vadd.f32 %v1673, %v1798
    %v1834 = vadd.f32 %v1674, %v1800
    %v1835 = vadd.f32 %v1675, %v1802
    %v1836 = vadd.f32 %v1676, %v1804
    %v1837 = vtanh.pop %v1821
    %v1838 = vtanh.pop %v1822
    %v1839 = vtanh.pop %v1823
    %v1840 = vtanh.pop %v1824
    %v1841 = vtanh.pop %v1825
    %v1842 = vtanh.pop %v1826
    %v1843 = vtanh.pop %v1827
    %v1844 = vtanh.pop %v1828
    %v1845 = vtanh.pop %v1829
    %v1846 = vtanh.pop %v1830
    %v1847 = vtanh.pop %v1831
    %v1848 = vtanh.pop %v1832
    %v1849 = vtanh.pop %v1833
    %v1850 = vtanh.pop %v1834
    %v1851 = vtanh.pop %v1835
    %v1852 = vtanh.pop %v1836
    %1869 = vrot.lane.b32.xlu0 %v1837, 32
    %v1870 = vpop.permute.xlu0 %1869
    %1871 = vrot.lane.b32.xlu0 %v1838, 32
    %v1872 = vpop.permute.xlu0 %1871
    %1873 = vrot.lane.b32.xlu0 %v1839, 32
    %v1874 = vpop.permute.xlu0 %1873
    %1875 = vrot.lane.b32.xlu0 %v1840, 32
    %v1876 = vpop.permute.xlu0 %1875
    %1877 = vrot.lane.b32.xlu0 %v1841, 32
    %v1878 = vpop.permute.xlu0 %1877
    %1879 = vrot.lane.b32.xlu0 %v1842, 32
    %v1880 = vpop.permute.xlu0 %1879
    %1881 = vrot.lane.b32.xlu0 %v1843, 32
    %v1882 = vpop.permute.xlu0 %1881
    %1883 = vrot.lane.b32.xlu0 %v1844, 32
    %v1884 = vpop.permute.xlu0 %1883
    %1885 = vrot.lane.b32.xlu0 %v1845, 32
    %v1886 = vpop.permute.xlu0 %1885
    %1887 = vrot.lane.b32.xlu0 %v1846, 32
    %v1888 = vpop.permute.xlu0 %1887
    %1889 = vrot.lane.b32.xlu0 %v1847, 32
    %v1890 = vpop.permute.xlu0 %1889
    %1891 = vrot.lane.b32.xlu0 %v1848, 32
    %v1892 = vpop.permute.xlu0 %1891
    %1893 = vrot.lane.b32.xlu0 %v1849, 32
    %v1894 = vpop.permute.xlu0 %1893
    %1895 = vrot.lane.b32.xlu0 %v1850, 32
    %v1896 = vpop.permute.xlu0 %1895
    %1897 = vrot.lane.b32.xlu0 %v1851, 32
    %v1898 = vpop.permute.xlu0 %1897
    %1899 = vrot.lane.b32.xlu0 %v1852, 32
    %v1900 = vpop.permute.xlu0 %1899
    %v1917 = vmul.f32 %v1614, %v1870
    %v1918 = vmul.f32 %v1616, %v1872
    %v1919 = vmul.f32 %v1618, %v1874
    %v1920 = vmul.f32 %v1620, %v1876
    %v1921 = vmul.f32 %v1622, %v1878
    %v1922 = vmul.f32 %v1624, %v1880
    %v1923 = vmul.f32 %v1626, %v1882
    %v1924 = vmul.f32 %v1628, %v1884
    %v1925 = vmul.f32 %v1630, %v1886
    %v1926 = vmul.f32 %v1632, %v1888
    %v1927 = vmul.f32 %v1634, %v1890
    %v1928 = vmul.f32 %v1636, %v1892
    %v1929 = vmul.f32 %v1638, %v1894
    %v1930 = vmul.f32 %v1640, %v1896
    %v1931 = vmul.f32 %v1642, %v1898
    %v1932 = vmul.f32 %v1644, %v1900
    %1949 = vrot.lane.b32.xlu0 %v1917, 64
    %v1950 = vpop.permute.xlu0 %1949
    %1951 = vrot.lane.b32.xlu0 %v1918, 64
    %v1952 = vpop.permute.xlu0 %1951
    %1953 = vrot.lane.b32.xlu0 %v1919, 64
    %v1954 = vpop.permute.xlu0 %1953
    %1955 = vrot.lane.b32.xlu0 %v1920, 64
    %v1956 = vpop.permute.xlu0 %1955
    %1957 = vrot.lane.b32.xlu0 %v1921, 64
    %v1958 = vpop.permute.xlu0 %1957
    %1959 = vrot.lane.b32.xlu0 %v1922, 64
    %v1960 = vpop.permute.xlu0 %1959
    %1961 = vrot.lane.b32.xlu0 %v1923, 64
    %v1962 = vpop.permute.xlu0 %1961
    %1963 = vrot.lane.b32.xlu0 %v1924, 64
    %v1964 = vpop.permute.xlu0 %1963
    %1965 = vrot.lane.b32.xlu0 %v1925, 64
    %v1966 = vpop.permute.xlu0 %1965
    %1967 = vrot.lane.b32.xlu0 %v1926, 64
    %v1968 = vpop.permute.xlu0 %1967
    %1969 = vrot.lane.b32.xlu0 %v1927, 64
    %v1970 = vpop.permute.xlu0 %1969
    %1971 = vrot.lane.b32.xlu0 %v1928, 64
    %v1972 = vpop.permute.xlu0 %1971
    %1973 = vrot.lane.b32.xlu0 %v1929, 64
    %v1974 = vpop.permute.xlu0 %1973
    %1975 = vrot.lane.b32.xlu0 %v1930, 64
    %v1976 = vpop.permute.xlu0 %1975
    %1977 = vrot.lane.b32.xlu0 %v1931, 64
    %v1978 = vpop.permute.xlu0 %1977
    %1979 = vrot.lane.b32.xlu0 %v1932, 64
    %v1980 = vpop.permute.xlu0 %1979
    %1997 = vst.msk [vmem:[#allocation3 + $0x1] sm:$0x1] %vm1350, %v1950
    %1998 = vst.msk [vmem:[#allocation3 + $0x9] sm:$0x1] %vm1350, %v1952
    %1999 = vst.msk [vmem:[#allocation3 + $0x11] sm:$0x1] %vm1350, %v1954
    %2000 = vst.msk [vmem:[#allocation3 + $0x19] sm:$0x1] %vm1350, %v1956
    %2001 = vst.msk [vmem:[#allocation3 + $0x21] sm:$0x1] %vm1350, %v1958
    %2002 = vst.msk [vmem:[#allocation3 + $0x29] sm:$0x1] %vm1350, %v1960
    %2003 = vst.msk [vmem:[#allocation3 + $0x31] sm:$0x1] %vm1350, %v1962
    %2004 = vst.msk [vmem:[#allocation3 + $0x39] sm:$0x1] %vm1350, %v1964
    %2005 = vst.msk [vmem:[#allocation3 + $0x41] sm:$0x1] %vm1350, %v1966
    %2006 = vst.msk [vmem:[#allocation3 + $0x49] sm:$0x1] %vm1350, %v1968
    %2007 = vst.msk [vmem:[#allocation3 + $0x51] sm:$0x1] %vm1350, %v1970
    %2008 = vst.msk [vmem:[#allocation3 + $0x59] sm:$0x1] %vm1350, %v1972
    %2009 = vst.msk [vmem:[#allocation3 + $0x61] sm:$0x1] %vm1350, %v1974
    %2010 = vst.msk [vmem:[#allocation3 + $0x69] sm:$0x1] %vm1350, %v1976
    %2011 = vst.msk [vmem:[#allocation3 + $0x71] sm:$0x1] %vm1350, %v1978
    %2012 = vst.msk [vmem:[#allocation3 + $0x79] sm:$0x1] %vm1350, %v1980
    %v2013 = vld [vmem:[#allocation2 + $0x2] sm:$0x1]
    %v2014 = vld [vmem:[#allocation2 + $0xa] sm:$0x1]
    %v2015 = vld [vmem:[#allocation2 + $0x12] sm:$0x1]
    %v2016 = vld [vmem:[#allocation2 + $0x1a] sm:$0x1]
    %v2017 = vld [vmem:[#allocation2 + $0x22] sm:$0x1]
    %v2018 = vld [vmem:[#allocation2 + $0x2a] sm:$0x1]
    %v2019 = vld [vmem:[#allocation2 + $0x32] sm:$0x1]
    %v2020 = vld [vmem:[#allocation2 + $0x3a] sm:$0x1]
    %v2021 = vld [vmem:[#allocation2 + $0x42] sm:$0x1]
    %v2022 = vld [vmem:[#allocation2 + $0x4a] sm:$0x1]
    %v2023 = vld [vmem:[#allocation2 + $0x52] sm:$0x1]
    %v2024 = vld [vmem:[#allocation2 + $0x5a] sm:$0x1]
    %v2025 = vld [vmem:[#allocation2 + $0x62] sm:$0x1]
    %v2026 = vld [vmem:[#allocation2 + $0x6a] sm:$0x1]
    %v2027 = vld [vmem:[#allocation2 + $0x72] sm:$0x1]
    %v2028 = vld [vmem:[#allocation2 + $0x7a] sm:$0x1]
    %v2029 = vrot.slane %v1918, 7
    %v2030 = vsel %vm1384, %v2029, %v1917
    %v2031 = vrot.slane %v1919, 6
    %v2032 = vsel %vm1387, %v2031, %v2030
    %v2033 = vrot.slane %v1920, 5
    %v2034 = vsel %vm1390, %v2033, %v2032
    %v2035 = vrot.slane %v1921, 4
    %v2036 = vsel %vm1393, %v2035, %v2034
    %v2037 = vrot.slane %v1922, 3
    %v2038 = vsel %vm1396, %v2037, %v2036
    %v2039 = vrot.slane %v1923, 2
    %v2040 = vsel %vm1399, %v2039, %v2038
    %v2041 = vrot.slane %v1924, 1
    %v2042 = vsel %vm1402, %v2041, %v2040
    %v2043 = vrot.slane %v1926, 7
    %v2044 = vsel %vm1384, %v2043, %v1925
    %v2045 = vrot.slane %v1927, 6
    %v2046 = vsel %vm1387, %v2045, %v2044
    %v2047 = vrot.slane %v1928, 5
    %v2048 = vsel %vm1390, %v2047, %v2046
    %v2049 = vrot.slane %v1929, 4
    %v2050 = vsel %vm1393, %v2049, %v2048
    %v2051 = vrot.slane %v1930, 3
    %v2052 = vsel %vm1396, %v2051, %v2050
    %v2053 = vrot.slane %v1931, 2
    %v2054 = vsel %vm1399, %v2053, %v2052
    %v2055 = vrot.slane %v1932, 1
    %v2056 = vsel %vm1402, %v2055, %v2054
    %2057 = vrot.lane.b32.xlu0 %v2042, 64
    %v2058 = vpop.permute.xlu0 %2057
    %2059 = vrot.lane.b32.xlu0 %v2056, 64
    %v2060 = vpop.permute.xlu0 %2059
    %v2061 = vsel %vm775, %v2058, 0
    %v2063 = vsel %vm775, %v2060, 0
    %2065 = vmatprep.subr.mxu0 0.0
    %2066 = vmatpush1.msra.mxu0 %v755
    %2067 = vmatprep.subr.mxu0 0.0
    %2068 = vmatpush1.msra.mxu0 %v756
    %2069 = vmatprep.subr.mxu0 0.0
    %2070 = vmatpush1.msra.mxu0 %v757
    %2071 = vmatprep.subr.mxu0 0.0
    %2072 = vmatpush1.msra.mxu0 %v758
    %2073 = vmatprep.subr.mxu0 0.0
    %2074 = vmatpush1.msra.mxu0 0.0
    %2075 = vmatprep.subr.mxu0 0.0
    %2076 = vmatpush1.msra.mxu0 0.0
    %2077 = vmatprep.subr.mxu0 0.0
    %2078 = vmatpush1.msra.mxu0 0.0
    %2079 = vmatprep.subr.mxu0 0.0
    %2080 = vmatpush1.msra.mxu0 0.0
    %2081 = vmatprep.subr.mxu0 0.0
    %2082 = vmatpush1.msra.mxu0 0.0
    %2083 = vmatprep.subr.mxu0 0.0
    %2084 = vmatpush1.msra.mxu0 0.0
    %2085 = vmatprep.subr.mxu0 0.0
    %2086 = vmatpush1.msra.mxu0 0.0
    %2087 = vmatprep.subr.mxu0 0.0
    %2088 = vmatpush1.msra.mxu0 0.0
    %2089 = vmatprep.subr.mxu0 0.0
    %2090 = vmatpush1.msra.mxu0 0.0
    %2091 = vmatprep.subr.mxu0 0.0
    %2092 = vmatpush1.msra.mxu0 0.0
    %2093 = vmatprep.subr.mxu0 0.0
    %2094 = vmatpush1.msra.mxu0 0.0
    %2095 = vmatprep.subr.mxu0 0.0
    %2096 = vmatpush1.msra.mxu0 0.0
    %2097 = vmatprep.subr.mxu0 0.0
    %2098 = vmatpush1.msra.mxu0 0.0
    %2099 = vmatprep.subr.mxu0 0.0
    %2100 = vmatpush1.msra.mxu0 0.0
    %2101 = vmatprep.subr.mxu0 0.0
    %2102 = vmatpush1.msra.mxu0 0.0
    %2103 = vmatprep.subr.mxu0 0.0
    %2104 = vmatpush1.msra.mxu0 0.0
    %2105 = vmatprep.subr.mxu0 0.0
    %2106 = vmatpush1.msra.mxu0 0.0
    %2107 = vmatprep.subr.mxu0 0.0
    %2108 = vmatpush1.msra.mxu0 0.0
    %2109 = vmatprep.subr.mxu0 0.0
    %2110 = vmatpush1.msra.mxu0 0.0
    %2111 = vmatprep.subr.mxu0 0.0
    %2112 = vmatpush1.msra.mxu0 0.0
    %2113 = vmatprep.subr.mxu0 0.0
    %2114 = vmatpush1.msra.mxu0 0.0
    %2115 = vmatprep.subr.mxu0 0.0
    %2116 = vmatpush1.msra.mxu0 0.0
    %2117 = vmatprep.subr.mxu0 0.0
    %2118 = vmatpush1.msra.mxu0 0.0
    %2119 = vmatprep.subr.mxu0 0.0
    %2120 = vmatpush1.msra.mxu0 0.0
    %2121 = vmatprep.subr.mxu0 0.0
    %2122 = vmatpush1.msra.mxu0 0.0
    %2123 = vmatprep.subr.mxu0 0.0
    %2124 = vmatpush1.msra.mxu0 0.0
    %2125 = vmatprep.subr.mxu0 0.0
    %2126 = vmatpush1.msra.mxu0 0.0
    %2127 = vmatprep.subr.mxu0 0.0
    %2128 = vmatpush1.msra.mxu0 0.0
    %2129 = vmatprep.mubr.f32.mxu0 0.0
    %2130 = vmatmul.mubr.f32.gmra.mrb[0].mxu0 %v2061
    %v2131 = vpop.f32.mrb[0].mxu0
    %v2132 = vadd.f32 0.0, %v2131
    %v2133 = vpop.f32.mrb[0].mxu0
    %2134 = vmatprep.mubr.f32.mxu0 0.0
    %2135 = vmatmul.mubr.f32.gmra.mrb[0].mxu0 %v2063
    %v2136 = vpop.f32.mrb[0].mxu0
    %v2137 = vadd.f32 0.0, %v2136
    %v2138 = vpop.f32.mrb[0].mxu0
    %2139 = vdwg.mxu0
    %v2142 = vrot.slane %v2132, 1
    %v2143 = vrot.slane %v2132, 2
    %v2144 = vrot.slane %v2132, 3
    %v2145 = vrot.slane %v2132, 4
    %v2146 = vrot.slane %v2132, 5
    %v2147 = vrot.slane %v2132, 6
    %v2148 = vrot.slane %v2132, 7
    %v2149 = vrot.slane %v2137, 1
    %v2150 = vrot.slane %v2137, 2
    %v2151 = vrot.slane %v2137, 3
    %v2152 = vrot.slane %v2137, 4
    %v2153 = vrot.slane %v2137, 5
    %v2154 = vrot.slane %v2137, 6
    %v2155 = vrot.slane %v2137, 7
    %v2172 = vadd.f32 %v2013, %v2132
    %v2173 = vadd.f32 %v2014, %v2142
    %v2174 = vadd.f32 %v2015, %v2143
    %v2175 = vadd.f32 %v2016, %v2144
    %v2176 = vadd.f32 %v2017, %v2145
    %v2177 = vadd.f32 %v2018, %v2146
    %v2178 = vadd.f32 %v2019, %v2147
    %v2179 = vadd.f32 %v2020, %v2148
    %v2180 = vadd.f32 %v2021, %v2137
    %v2181 = vadd.f32 %v2022, %v2149
    %v2182 = vadd.f32 %v2023, %v2150
    %v2183 = vadd.f32 %v2024, %v2151
    %v2184 = vadd.f32 %v2025, %v2152
    %v2185 = vadd.f32 %v2026, %v2153
    %v2186 = vadd.f32 %v2027, %v2154
    %v2187 = vadd.f32 %v2028, %v2155
    %v2188 = vxor.u32 %v2172, 2147483648
    %v2189 = vxor.u32 %v2173, 2147483648
    %v2190 = vxor.u32 %v2174, 2147483648
    %v2191 = vxor.u32 %v2175, 2147483648
    %v2192 = vxor.u32 %v2176, 2147483648
    %v2193 = vxor.u32 %v2177, 2147483648
    %v2194 = vxor.u32 %v2178, 2147483648
    %v2195 = vxor.u32 %v2179, 2147483648
    %v2196 = vxor.u32 %v2180, 2147483648
    %v2197 = vxor.u32 %v2181, 2147483648
    %v2198 = vxor.u32 %v2182, 2147483648
    %v2199 = vxor.u32 %v2183, 2147483648
    %v2200 = vxor.u32 %v2184, 2147483648
    %v2201 = vxor.u32 %v2185, 2147483648
    %v2202 = vxor.u32 %v2186, 2147483648
    %v2203 = vxor.u32 %v2187, 2147483648
    %v2204 = vmul.f32 %v2188, 1.442695
    %v2205 = vpow.pop %v2204
    %v2206 = vmul.f32 %v2189, 1.442695
    %v2207 = vpow.pop %v2206
    %v2208 = vmul.f32 %v2190, 1.442695
    %v2209 = vpow.pop %v2208
    %v2210 = vmul.f32 %v2191, 1.442695
    %v2211 = vpow.pop %v2210
    %v2212 = vmul.f32 %v2192, 1.442695
    %v2213 = vpow.pop %v2212
    %v2214 = vmul.f32 %v2193, 1.442695
    %v2215 = vpow.pop %v2214
    %v2216 = vmul.f32 %v2194, 1.442695
    %v2217 = vpow.pop %v2216
    %v2218 = vmul.f32 %v2195, 1.442695
    %v2219 = vpow.pop %v2218
    %v2220 = vmul.f32 %v2196, 1.442695
    %v2221 = vpow.pop %v2220
    %v2222 = vmul.f32 %v2197, 1.442695
    %v2223 = vpow.pop %v2222
    %v2224 = vmul.f32 %v2198, 1.442695
    %v2225 = vpow.pop %v2224
    %v2226 = vmul.f32 %v2199, 1.442695
    %v2227 = vpow.pop %v2226
    %v2228 = vmul.f32 %v2200, 1.442695
    %v2229 = vpow.pop %v2228
    %v2230 = vmul.f32 %v2201, 1.442695
    %v2231 = vpow.pop %v2230
    %v2232 = vmul.f32 %v2202, 1.442695
    %v2233 = vpow.pop %v2232
    %v2234 = vmul.f32 %v2203, 1.442695
    %v2235 = vpow.pop %v2234
    %v2236 = vadd.f32 %v2205, 1.0
    %v2237 = vadd.f32 %v2207, 1.0
    %v2238 = vadd.f32 %v2209, 1.0
    %v2239 = vadd.f32 %v2211, 1.0
    %v2240 = vadd.f32 %v2213, 1.0
    %v2241 = vadd.f32 %v2215, 1.0
    %v2242 = vadd.f32 %v2217, 1.0
    %v2243 = vadd.f32 %v2219, 1.0
    %v2244 = vadd.f32 %v2221, 1.0
    %v2245 = vadd.f32 %v2223, 1.0
    %v2246 = vadd.f32 %v2225, 1.0
    %v2247 = vadd.f32 %v2227, 1.0
    %v2248 = vadd.f32 %v2229, 1.0
    %v2249 = vadd.f32 %v2231, 1.0
    %v2250 = vadd.f32 %v2233, 1.0
    %v2251 = vadd.f32 %v2235, 1.0
    %v2252 = vrcp.pop %v2236
    %v2253 = vmul.f32 1.0, %v2252
    %v2254 = vrcp.pop %v2237
    %v2255 = vmul.f32 1.0, %v2254
    %v2256 = vrcp.pop %v2238
    %v2257 = vmul.f32 1.0, %v2256
    %v2258 = vrcp.pop %v2239
    %v2259 = vmul.f32 1.0, %v2258
    %v2260 = vrcp.pop %v2240
    %v2261 = vmul.f32 1.0, %v2260
    %v2262 = vrcp.pop %v2241
    %v2263 = vmul.f32 1.0, %v2262
    %v2264 = vrcp.pop %v2242
    %v2265 = vmul.f32 1.0, %v2264
    %v2266 = vrcp.pop %v2243
    %v2267 = vmul.f32 1.0, %v2266
    %v2268 = vrcp.pop %v2244
    %v2269 = vmul.f32 1.0, %v2268
    %v2270 = vrcp.pop %v2245
    %v2271 = vmul.f32 1.0, %v2270
    %v2272 = vrcp.pop %v2246
    %v2273 = vmul.f32 1.0, %v2272
    %v2274 = vrcp.pop %v2247
    %v2275 = vmul.f32 1.0, %v2274
    %v2276 = vrcp.pop %v2248
    %v2277 = vmul.f32 1.0, %v2276
    %v2278 = vrcp.pop %v2249
    %v2279 = vmul.f32 1.0, %v2278
    %v2280 = vrcp.pop %v2250
    %v2281 = vmul.f32 1.0, %v2280
    %v2282 = vrcp.pop %v2251
    %v2283 = vmul.f32 1.0, %v2282
    %v2284 = vtanh.pop %v2172
    %v2285 = vtanh.pop %v2173
    %v2286 = vtanh.pop %v2174
    %v2287 = vtanh.pop %v2175
    %v2288 = vtanh.pop %v2176
    %v2289 = vtanh.pop %v2177
    %v2290 = vtanh.pop %v2178
    %v2291 = vtanh.pop %v2179
    %v2292 = vtanh.pop %v2180
    %v2293 = vtanh.pop %v2181
    %v2294 = vtanh.pop %v2182
    %v2295 = vtanh.pop %v2183
    %v2296 = vtanh.pop %v2184
    %v2297 = vtanh.pop %v2185
    %v2298 = vtanh.pop %v2186
    %v2299 = vtanh.pop %v2187
    %v2300 = vmul.f32 %v2253, %v1821
    %v2301 = vmul.f32 %v2255, %v1822
    %v2302 = vmul.f32 %v2257, %v1823
    %v2303 = vmul.f32 %v2259, %v1824
    %v2304 = vmul.f32 %v2261, %v1825
    %v2305 = vmul.f32 %v2263, %v1826
    %v2306 = vmul.f32 %v2265, %v1827
    %v2307 = vmul.f32 %v2267, %v1828
    %v2308 = vmul.f32 %v2269, %v1829
    %v2309 = vmul.f32 %v2271, %v1830
    %v2310 = vmul.f32 %v2273, %v1831
    %v2311 = vmul.f32 %v2275, %v1832
    %v2312 = vmul.f32 %v2277, %v1833
    %v2313 = vmul.f32 %v2279, %v1834
    %v2314 = vmul.f32 %v2281, %v1835
    %v2315 = vmul.f32 %v2283, %v1836
    %2332 = vrot.lane.b32.xlu0 %v2284, 32
    %v2333 = vpop.permute.xlu0 %2332
    %2334 = vrot.lane.b32.xlu0 %v2285, 32
    %v2335 = vpop.permute.xlu0 %2334
    %2336 = vrot.lane.b32.xlu0 %v2286, 32
    %v2337 = vpop.permute.xlu0 %2336
    %2338 = vrot.lane.b32.xlu0 %v2287, 32
    %v2339 = vpop.permute.xlu0 %2338
    %2340 = vrot.lane.b32.xlu0 %v2288, 32
    %v2341 = vpop.permute.xlu0 %2340
    %2342 = vrot.lane.b32.xlu0 %v2289, 32
    %v2343 = vpop.permute.xlu0 %2342
    %2344 = vrot.lane.b32.xlu0 %v2290, 32
    %v2345 = vpop.permute.xlu0 %2344
    %2346 = vrot.lane.b32.xlu0 %v2291, 32
    %v2347 = vpop.permute.xlu0 %2346
    %2348 = vrot.lane.b32.xlu0 %v2292, 32
    %v2349 = vpop.permute.xlu0 %2348
    %2350 = vrot.lane.b32.xlu0 %v2293, 32
    %v2351 = vpop.permute.xlu0 %2350
    %2352 = vrot.lane.b32.xlu0 %v2294, 32
    %v2353 = vpop.permute.xlu0 %2352
    %2354 = vrot.lane.b32.xlu0 %v2295, 32
    %v2355 = vpop.permute.xlu0 %2354
    %2356 = vrot.lane.b32.xlu0 %v2296, 32
    %v2357 = vpop.permute.xlu0 %2356
    %2358 = vrot.lane.b32.xlu0 %v2297, 32
    %v2359 = vpop.permute.xlu0 %2358
    %2360 = vrot.lane.b32.xlu0 %v2298, 32
    %v2361 = vpop.permute.xlu0 %2360
    %2362 = vrot.lane.b32.xlu0 %v2299, 32
    %v2363 = vpop.permute.xlu0 %2362
    %v2380 = vmul.f32 %v2253, %v2333
    %v2381 = vmul.f32 %v2255, %v2335
    %v2382 = vmul.f32 %v2257, %v2337
    %v2383 = vmul.f32 %v2259, %v2339
    %v2384 = vmul.f32 %v2261, %v2341
    %v2385 = vmul.f32 %v2263, %v2343
    %v2386 = vmul.f32 %v2265, %v2345
    %v2387 = vmul.f32 %v2267, %v2347
    %v2388 = vmul.f32 %v2269, %v2349
    %v2389 = vmul.f32 %v2271, %v2351
    %v2390 = vmul.f32 %v2273, %v2353
    %v2391 = vmul.f32 %v2275, %v2355
    %v2392 = vmul.f32 %v2277, %v2357
    %v2393 = vmul.f32 %v2279, %v2359
    %v2394 = vmul.f32 %v2281, %v2361
    %v2395 = vmul.f32 %v2283, %v2363
    %2412 = vrot.lane.b32.xlu0 %v2380, 32
    %v2413 = vpop.permute.xlu0 %2412
    %2414 = vrot.lane.b32.xlu0 %v2381, 32
    %v2415 = vpop.permute.xlu0 %2414
    %2416 = vrot.lane.b32.xlu0 %v2382, 32
    %v2417 = vpop.permute.xlu0 %2416
    %2418 = vrot.lane.b32.xlu0 %v2383, 32
    %v2419 = vpop.permute.xlu0 %2418
    %2420 = vrot.lane.b32.xlu0 %v2384, 32
    %v2421 = vpop.permute.xlu0 %2420
    %2422 = vrot.lane.b32.xlu0 %v2385, 32
    %v2423 = vpop.permute.xlu0 %2422
    %2424 = vrot.lane.b32.xlu0 %v2386, 32
    %v2425 = vpop.permute.xlu0 %2424
    %2426 = vrot.lane.b32.xlu0 %v2387, 32
    %v2427 = vpop.permute.xlu0 %2426
    %2428 = vrot.lane.b32.xlu0 %v2388, 32
    %v2429 = vpop.permute.xlu0 %2428
    %2430 = vrot.lane.b32.xlu0 %v2389, 32
    %v2431 = vpop.permute.xlu0 %2430
    %2432 = vrot.lane.b32.xlu0 %v2390, 32
    %v2433 = vpop.permute.xlu0 %2432
    %2434 = vrot.lane.b32.xlu0 %v2391, 32
    %v2435 = vpop.permute.xlu0 %2434
    %2436 = vrot.lane.b32.xlu0 %v2392, 32
    %v2437 = vpop.permute.xlu0 %2436
    %2438 = vrot.lane.b32.xlu0 %v2393, 32
    %v2439 = vpop.permute.xlu0 %2438
    %2440 = vrot.lane.b32.xlu0 %v2394, 32
    %v2441 = vpop.permute.xlu0 %2440
    %2442 = vrot.lane.b32.xlu0 %v2395, 32
    %v2443 = vpop.permute.xlu0 %2442
    %v2460 = vadd.f32 %v2300, %v2413
    %v2461 = vadd.f32 %v2301, %v2415
    %v2462 = vadd.f32 %v2302, %v2417
    %v2463 = vadd.f32 %v2303, %v2419
    %v2464 = vadd.f32 %v2304, %v2421
    %v2465 = vadd.f32 %v2305, %v2423
    %v2466 = vadd.f32 %v2306, %v2425
    %v2467 = vadd.f32 %v2307, %v2427
    %v2468 = vadd.f32 %v2308, %v2429
    %v2469 = vadd.f32 %v2309, %v2431
    %v2470 = vadd.f32 %v2310, %v2433
    %v2471 = vadd.f32 %v2311, %v2435
    %v2472 = vadd.f32 %v2312, %v2437
    %v2473 = vadd.f32 %v2313, %v2439
    %v2474 = vadd.f32 %v2314, %v2441
    %v2475 = vadd.f32 %v2315, %v2443
    %v2476 = vtanh.pop %v2460
    %v2477 = vtanh.pop %v2461
    %v2478 = vtanh.pop %v2462
    %v2479 = vtanh.pop %v2463
    %v2480 = vtanh.pop %v2464
    %v2481 = vtanh.pop %v2465
    %v2482 = vtanh.pop %v2466
    %v2483 = vtanh.pop %v2467
    %v2484 = vtanh.pop %v2468
    %v2485 = vtanh.pop %v2469
    %v2486 = vtanh.pop %v2470
    %v2487 = vtanh.pop %v2471
    %v2488 = vtanh.pop %v2472
    %v2489 = vtanh.pop %v2473
    %v2490 = vtanh.pop %v2474
    %v2491 = vtanh.pop %v2475
    %2508 = vrot.lane.b32.xlu0 %v2476, 32
    %v2509 = vpop.permute.xlu0 %2508
    %2510 = vrot.lane.b32.xlu0 %v2477, 32
    %v2511 = vpop.permute.xlu0 %2510
    %2512 = vrot.lane.b32.xlu0 %v2478, 32
    %v2513 = vpop.permute.xlu0 %2512
    %2514 = vrot.lane.b32.xlu0 %v2479, 32
    %v2515 = vpop.permute.xlu0 %2514
    %2516 = vrot.lane.b32.xlu0 %v2480, 32
    %v2517 = vpop.permute.xlu0 %2516
    %2518 = vrot.lane.b32.xlu0 %v2481, 32
    %v2519 = vpop.permute.xlu0 %2518
    %2520 = vrot.lane.b32.xlu0 %v2482, 32
    %v2521 = vpop.permute.xlu0 %2520
    %2522 = vrot.lane.b32.xlu0 %v2483, 32
    %v2523 = vpop.permute.xlu0 %2522
    %2524 = vrot.lane.b32.xlu0 %v2484, 32
    %v2525 = vpop.permute.xlu0 %2524
    %2526 = vrot.lane.b32.xlu0 %v2485, 32
    %v2527 = vpop.permute.xlu0 %2526
    %2528 = vrot.lane.b32.xlu0 %v2486, 32
    %v2529 = vpop.permute.xlu0 %2528
    %2530 = vrot.lane.b32.xlu0 %v2487, 32
    %v2531 = vpop.permute.xlu0 %2530
    %2532 = vrot.lane.b32.xlu0 %v2488, 32
    %v2533 = vpop.permute.xlu0 %2532
    %2534 = vrot.lane.b32.xlu0 %v2489, 32
    %v2535 = vpop.permute.xlu0 %2534
    %2536 = vrot.lane.b32.xlu0 %v2490, 32
    %v2537 = vpop.permute.xlu0 %2536
    %2538 = vrot.lane.b32.xlu0 %v2491, 32
    %v2539 = vpop.permute.xlu0 %2538
    %v2556 = vmul.f32 %v2253, %v2509
    %v2557 = vmul.f32 %v2255, %v2511
    %v2558 = vmul.f32 %v2257, %v2513
    %v2559 = vmul.f32 %v2259, %v2515
    %v2560 = vmul.f32 %v2261, %v2517
    %v2561 = vmul.f32 %v2263, %v2519
    %v2562 = vmul.f32 %v2265, %v2521
    %v2563 = vmul.f32 %v2267, %v2523
    %v2564 = vmul.f32 %v2269, %v2525
    %v2565 = vmul.f32 %v2271, %v2527
    %v2566 = vmul.f32 %v2273, %v2529
    %v2567 = vmul.f32 %v2275, %v2531
    %v2568 = vmul.f32 %v2277, %v2533
    %v2569 = vmul.f32 %v2279, %v2535
    %v2570 = vmul.f32 %v2281, %v2537
    %v2571 = vmul.f32 %v2283, %v2539
    %2588 = vrot.lane.b32.xlu0 %v2556, 64
    %v2589 = vpop.permute.xlu0 %2588
    %2590 = vrot.lane.b32.xlu0 %v2557, 64
    %v2591 = vpop.permute.xlu0 %2590
    %2592 = vrot.lane.b32.xlu0 %v2558, 64
    %v2593 = vpop.permute.xlu0 %2592
    %2594 = vrot.lane.b32.xlu0 %v2559, 64
    %v2595 = vpop.permute.xlu0 %2594
    %2596 = vrot.lane.b32.xlu0 %v2560, 64
    %v2597 = vpop.permute.xlu0 %2596
    %2598 = vrot.lane.b32.xlu0 %v2561, 64
    %v2599 = vpop.permute.xlu0 %2598
    %2600 = vrot.lane.b32.xlu0 %v2562, 64
    %v2601 = vpop.permute.xlu0 %2600
    %2602 = vrot.lane.b32.xlu0 %v2563, 64
    %v2603 = vpop.permute.xlu0 %2602
    %2604 = vrot.lane.b32.xlu0 %v2564, 64
    %v2605 = vpop.permute.xlu0 %2604
    %2606 = vrot.lane.b32.xlu0 %v2565, 64
    %v2607 = vpop.permute.xlu0 %2606
    %2608 = vrot.lane.b32.xlu0 %v2566, 64
    %v2609 = vpop.permute.xlu0 %2608
    %2610 = vrot.lane.b32.xlu0 %v2567, 64
    %v2611 = vpop.permute.xlu0 %2610
    %2612 = vrot.lane.b32.xlu0 %v2568, 64
    %v2613 = vpop.permute.xlu0 %2612
    %2614 = vrot.lane.b32.xlu0 %v2569, 64
    %v2615 = vpop.permute.xlu0 %2614
    %2616 = vrot.lane.b32.xlu0 %v2570, 64
    %v2617 = vpop.permute.xlu0 %2616
    %2618 = vrot.lane.b32.xlu0 %v2571, 64
    %v2619 = vpop.permute.xlu0 %2618
    %2636 = vst.msk [vmem:[#allocation3 + $0x2] sm:$0x1] %vm1350, %v2589
    %2637 = vst.msk [vmem:[#allocation3 + $0xa] sm:$0x1] %vm1350, %v2591
    %2638 = vst.msk [vmem:[#allocation3 + $0x12] sm:$0x1] %vm1350, %v2593
    %2639 = vst.msk [vmem:[#allocation3 + $0x1a] sm:$0x1] %vm1350, %v2595
    %2640 = vst.msk [vmem:[#allocation3 + $0x22] sm:$0x1] %vm1350, %v2597
    %2641 = vst.msk [vmem:[#allocation3 + $0x2a] sm:$0x1] %vm1350, %v2599
    %2642 = vst.msk [vmem:[#allocation3 + $0x32] sm:$0x1] %vm1350, %v2601
    %2643 = vst.msk [vmem:[#allocation3 + $0x3a] sm:$0x1] %vm1350, %v2603
    %2644 = vst.msk [vmem:[#allocation3 + $0x42] sm:$0x1] %vm1350, %v2605
    %2645 = vst.msk [vmem:[#allocation3 + $0x4a] sm:$0x1] %vm1350, %v2607
    %2646 = vst.msk [vmem:[#allocation3 + $0x52] sm:$0x1] %vm1350, %v2609
    %2647 = vst.msk [vmem:[#allocation3 + $0x5a] sm:$0x1] %vm1350, %v2611
    %2648 = vst.msk [vmem:[#allocation3 + $0x62] sm:$0x1] %vm1350, %v2613
    %2649 = vst.msk [vmem:[#allocation3 + $0x6a] sm:$0x1] %vm1350, %v2615
    %2650 = vst.msk [vmem:[#allocation3 + $0x72] sm:$0x1] %vm1350, %v2617
    %2651 = vst.msk [vmem:[#allocation3 + $0x7a] sm:$0x1] %vm1350, %v2619
    %v2652 = vld [vmem:[#allocation2 + $0x3] sm:$0x1]
    %v2653 = vld [vmem:[#allocation2 + $0xb] sm:$0x1]
    %v2654 = vld [vmem:[#allocation2 + $0x13] sm:$0x1]
    %v2655 = vld [vmem:[#allocation2 + $0x1b] sm:$0x1]
    %v2656 = vld [vmem:[#allocation2 + $0x23] sm:$0x1]
    %v2657 = vld [vmem:[#allocation2 + $0x2b] sm:$0x1]
    %v2658 = vld [vmem:[#allocation2 + $0x33] sm:$0x1]
    %v2659 = vld [vmem:[#allocation2 + $0x3b] sm:$0x1]
    %v2660 = vld [vmem:[#allocation2 + $0x43] sm:$0x1]
    %v2661 = vld [vmem:[#allocation2 + $0x4b] sm:$0x1]
    %v2662 = vld [vmem:[#allocation2 + $0x53] sm:$0x1]
    %v2663 = vld [vmem:[#allocation2 + $0x5b] sm:$0x1]
    %v2664 = vld [vmem:[#allocation2 + $0x63] sm:$0x1]
    %v2665 = vld [vmem:[#allocation2 + $0x6b] sm:$0x1]
    %v2666 = vld [vmem:[#allocation2 + $0x73] sm:$0x1]
    %v2667 = vld [vmem:[#allocation2 + $0x7b] sm:$0x1]
    %v2668 = vrot.slane %v2557, 7
    %v2669 = vsel %vm1384, %v2668, %v2556
    %v2670 = vrot.slane %v2558, 6
    %v2671 = vsel %vm1387, %v2670, %v2669
    %v2672 = vrot.slane %v2559, 5
    %v2673 = vsel %vm1390, %v2672, %v2671
    %v2674 = vrot.slane %v2560, 4
    %v2675 = vsel %vm1393, %v2674, %v2673
    %v2676 = vrot.slane %v2561, 3
    %v2677 = vsel %vm1396, %v2676, %v2675
    %v2678 = vrot.slane %v2562, 2
    %v2679 = vsel %vm1399, %v2678, %v2677
    %v2680 = vrot.slane %v2563, 1
    %v2681 = vsel %vm1402, %v2680, %v2679
    %v2682 = vrot.slane %v2565, 7
    %v2683 = vsel %vm1384, %v2682, %v2564
    %v2684 = vrot.slane %v2566, 6
    %v2685 = vsel %vm1387, %v2684, %v2683
    %v2686 = vrot.slane %v2567, 5
    %v2687 = vsel %vm1390, %v2686, %v2685
    %v2688 = vrot.slane %v2568, 4
    %v2689 = vsel %vm1393, %v2688, %v2687
    %v2690 = vrot.slane %v2569, 3
    %v2691 = vsel %vm1396, %v2690, %v2689
    %v2692 = vrot.slane %v2570, 2
    %v2693 = vsel %vm1399, %v2692, %v2691
    %v2694 = vrot.slane %v2571, 1
    %v2695 = vsel %vm1402, %v2694, %v2693
    %2696 = vrot.lane.b32.xlu0 %v2681, 64
    %v2697 = vpop.permute.xlu0 %2696
    %2698 = vrot.lane.b32.xlu0 %v2695, 64
    %v2699 = vpop.permute.xlu0 %2698
    %v2700 = vsel %vm775, %v2697, 0
    %v2702 = vsel %vm775, %v2699, 0
    %2704 = vmatprep.subr.mxu0 0.0
    %2705 = vmatpush1.msra.mxu0 %v755
    %2706 = vmatprep.subr.mxu0 0.0
    %2707 = vmatpush1.msra.mxu0 %v756
    %2708 = vmatprep.subr.mxu0 0.0
    %2709 = vmatpush1.msra.mxu0 %v757
    %2710 = vmatprep.subr.mxu0 0.0
    %2711 = vmatpush1.msra.mxu0 %v758
    %2712 = vmatprep.subr.mxu0 0.0
    %2713 = vmatpush1.msra.mxu0 0.0
    %2714 = vmatprep.subr.mxu0 0.0
    %2715 = vmatpush1.msra.mxu0 0.0
    %2716 = vmatprep.subr.mxu0 0.0
    %2717 = vmatpush1.msra.mxu0 0.0
    %2718 = vmatprep.subr.mxu0 0.0
    %2719 = vmatpush1.msra.mxu0 0.0
    %2720 = vmatprep.subr.mxu0 0.0
    %2721 = vmatpush1.msra.mxu0 0.0
    %2722 = vmatprep.subr.mxu0 0.0
    %2723 = vmatpush1.msra.mxu0 0.0
    %2724 = vmatprep.subr.mxu0 0.0
    %2725 = vmatpush1.msra.mxu0 0.0
    %2726 = vmatprep.subr.mxu0 0.0
    %2727 = vmatpush1.msra.mxu0 0.0
    %2728 = vmatprep.subr.mxu0 0.0
    %2729 = vmatpush1.msra.mxu0 0.0
    %2730 = vmatprep.subr.mxu0 0.0
    %2731 = vmatpush1.msra.mxu0 0.0
    %2732 = vmatprep.subr.mxu0 0.0
    %2733 = vmatpush1.msra.mxu0 0.0
    %2734 = vmatprep.subr.mxu0 0.0
    %2735 = vmatpush1.msra.mxu0 0.0
    %2736 = vmatprep.subr.mxu0 0.0
    %2737 = vmatpush1.msra.mxu0 0.0
    %2738 = vmatprep.subr.mxu0 0.0
    %2739 = vmatpush1.msra.mxu0 0.0
    %2740 = vmatprep.subr.mxu0 0.0
    %2741 = vmatpush1.msra.mxu0 0.0
    %2742 = vmatprep.subr.mxu0 0.0
    %2743 = vmatpush1.msra.mxu0 0.0
    %2744 = vmatprep.subr.mxu0 0.0
    %2745 = vmatpush1.msra.mxu0 0.0
    %2746 = vmatprep.subr.mxu0 0.0
    %2747 = vmatpush1.msra.mxu0 0.0
    %2748 = vmatprep.subr.mxu0 0.0
    %2749 = vmatpush1.msra.mxu0 0.0
    %2750 = vmatprep.subr.mxu0 0.0
    %2751 = vmatpush1.msra.mxu0 0.0
    %2752 = vmatprep.subr.mxu0 0.0
    %2753 = vmatpush1.msra.mxu0 0.0
    %2754 = vmatprep.subr.mxu0 0.0
    %2755 = vmatpush1.msra.mxu0 0.0
    %2756 = vmatprep.subr.mxu0 0.0
    %2757 = vmatpush1.msra.mxu0 0.0
    %2758 = vmatprep.subr.mxu0 0.0
    %2759 = vmatpush1.msra.mxu0 0.0
    %2760 = vmatprep.subr.mxu0 0.0
    %2761 = vmatpush1.msra.mxu0 0.0
    %2762 = vmatprep.subr.mxu0 0.0
    %2763 = vmatpush1.msra.mxu0 0.0
    %2764 = vmatprep.subr.mxu0 0.0
    %2765 = vmatpush1.msra.mxu0 0.0
    %2766 = vmatprep.subr.mxu0 0.0
    %2767 = vmatpush1.msra.mxu0 0.0
    %2768 = vmatprep.mubr.f32.mxu0 0.0
    %2769 = vmatmul.mubr.f32.gmra.mrb[0].mxu0 %v2700
    %v2770 = vpop.f32.mrb[0].mxu0
    %v2771 = vadd.f32 0.0, %v2770
    %v2772 = vpop.f32.mrb[0].mxu0
    %2773 = vmatprep.mubr.f32.mxu0 0.0
    %2774 = vmatmul.mubr.f32.gmra.mrb[0].mxu0 %v2702
    %v2775 = vpop.f32.mrb[0].mxu0
    %v2776 = vadd.f32 0.0, %v2775
    %v2777 = vpop.f32.mrb[0].mxu0
    %2778 = vdwg.mxu0
    %v2781 = vrot.slane %v2771, 1
    %v2782 = vrot.slane %v2771, 2
    %v2783 = vrot.slane %v2771, 3
    %v2784 = vrot.slane %v2771, 4
    %v2785 = vrot.slane %v2771, 5
    %v2786 = vrot.slane %v2771, 6
    %v2787 = vrot.slane %v2771, 7
    %v2788 = vrot.slane %v2776, 1
    %v2789 = vrot.slane %v2776, 2
    %v2790 = vrot.slane %v2776, 3
    %v2791 = vrot.slane %v2776, 4
    %v2792 = vrot.slane %v2776, 5
    %v2793 = vrot.slane %v2776, 6
    %v2794 = vrot.slane %v2776, 7
    %v2811 = vadd.f32 %v2652, %v2771
    %v2812 = vadd.f32 %v2653, %v2781
    %v2813 = vadd.f32 %v2654, %v2782
    %v2814 = vadd.f32 %v2655, %v2783
    %v2815 = vadd.f32 %v2656, %v2784
    %v2816 = vadd.f32 %v2657, %v2785
    %v2817 = vadd.f32 %v2658, %v2786
    %v2818 = vadd.f32 %v2659, %v2787
    %v2819 = vadd.f32 %v2660, %v2776
    %v2820 = vadd.f32 %v2661, %v2788
    %v2821 = vadd.f32 %v2662, %v2789
    %v2822 = vadd.f32 %v2663, %v2790
    %v2823 = vadd.f32 %v2664, %v2791
    %v2824 = vadd.f32 %v2665, %v2792
    %v2825 = vadd.f32 %v2666, %v2793
    %v2826 = vadd.f32 %v2667, %v2794
    %v2827 = vxor.u32 %v2811, 2147483648
    %v2828 = vxor.u32 %v2812, 2147483648
    %v2829 = vxor.u32 %v2813, 2147483648
    %v2830 = vxor.u32 %v2814, 2147483648
    %v2831 = vxor.u32 %v2815, 2147483648
    %v2832 = vxor.u32 %v2816, 2147483648
    %v2833 = vxor.u32 %v2817, 2147483648
    %v2834 = vxor.u32 %v2818, 2147483648
    %v2835 = vxor.u32 %v2819, 2147483648
    %v2836 = vxor.u32 %v2820, 2147483648
    %v2837 = vxor.u32 %v2821, 2147483648
    %v2838 = vxor.u32 %v2822, 2147483648
    %v2839 = vxor.u32 %v2823, 2147483648
    %v2840 = vxor.u32 %v2824, 2147483648
    %v2841 = vxor.u32 %v2825, 2147483648
    %v2842 = vxor.u32 %v2826, 2147483648
    %v2843 = vmul.f32 %v2827, 1.442695
    %v2844 = vpow.pop %v2843
    %v2845 = vmul.f32 %v2828, 1.442695
    %v2846 = vpow.pop %v2845
    %v2847 = vmul.f32 %v2829, 1.442695
    %v2848 = vpow.pop %v2847
    %v2849 = vmul.f32 %v2830, 1.442695
    %v2850 = vpow.pop %v2849
    %v2851 = vmul.f32 %v2831, 1.442695
    %v2852 = vpow.pop %v2851
    %v2853 = vmul.f32 %v2832, 1.442695
    %v2854 = vpow.pop %v2853
    %v2855 = vmul.f32 %v2833, 1.442695
    %v2856 = vpow.pop %v2855
    %v2857 = vmul.f32 %v2834, 1.442695
    %v2858 = vpow.pop %v2857
    %v2859 = vmul.f32 %v2835, 1.442695
    %v2860 = vpow.pop %v2859
    %v2861 = vmul.f32 %v2836, 1.442695
    %v2862 = vpow.pop %v2861
    %v2863 = vmul.f32 %v2837, 1.442695
    %v2864 = vpow.pop %v2863
    %v2865 = vmul.f32 %v2838, 1.442695
    %v2866 = vpow.pop %v2865
    %v2867 = vmul.f32 %v2839, 1.442695
    %v2868 = vpow.pop %v2867
    %v2869 = vmul.f32 %v2840, 1.442695
    %v2870 = vpow.pop %v2869
    %v2871 = vmul.f32 %v2841, 1.442695
    %v2872 = vpow.pop %v2871
    %v2873 = vmul.f32 %v2842, 1.442695
    %v2874 = vpow.pop %v2873
    %v2875 = vadd.f32 %v2844, 1.0
    %v2876 = vadd.f32 %v2846, 1.0
    %v2877 = vadd.f32 %v2848, 1.0
    %v2878 = vadd.f32 %v2850, 1.0
    %v2879 = vadd.f32 %v2852, 1.0
    %v2880 = vadd.f32 %v2854, 1.0
    %v2881 = vadd.f32 %v2856, 1.0
    %v2882 = vadd.f32 %v2858, 1.0
    %v2883 = vadd.f32 %v2860, 1.0
    %v2884 = vadd.f32 %v2862, 1.0
    %v2885 = vadd.f32 %v2864, 1.0
    %v2886 = vadd.f32 %v2866, 1.0
    %v2887 = vadd.f32 %v2868, 1.0
    %v2888 = vadd.f32 %v2870, 1.0
    %v2889 = vadd.f32 %v2872, 1.0
    %v2890 = vadd.f32 %v2874, 1.0
    %v2891 = vrcp.pop %v2875
    %v2892 = vmul.f32 1.0, %v2891
    %v2893 = vrcp.pop %v2876
    %v2894 = vmul.f32 1.0, %v2893
    %v2895 = vrcp.pop %v2877
    %v2896 = vmul.f32 1.0, %v2895
    %v2897 = vrcp.pop %v2878
    %v2898 = vmul.f32 1.0, %v2897
    %v2899 = vrcp.pop %v2879
    %v2900 = vmul.f32 1.0, %v2899
    %v2901 = vrcp.pop %v2880
    %v2902 = vmul.f32 1.0, %v2901
    %v2903 = vrcp.pop %v2881
    %v2904 = vmul.f32 1.0, %v2903
    %v2905 = vrcp.pop %v2882
    %v2906 = vmul.f32 1.0, %v2905
    %v2907 = vrcp.pop %v2883
    %v2908 = vmul.f32 1.0, %v2907
    %v2909 = vrcp.pop %v2884
    %v2910 = vmul.f32 1.0, %v2909
    %v2911 = vrcp.pop %v2885
    %v2912 = vmul.f32 1.0, %v2911
    %v2913 = vrcp.pop %v2886
    %v2914 = vmul.f32 1.0, %v2913
    %v2915 = vrcp.pop %v2887
    %v2916 = vmul.f32 1.0, %v2915
    %v2917 = vrcp.pop %v2888
    %v2918 = vmul.f32 1.0, %v2917
    %v2919 = vrcp.pop %v2889
    %v2920 = vmul.f32 1.0, %v2919
    %v2921 = vrcp.pop %v2890
    %v2922 = vmul.f32 1.0, %v2921
    %v2923 = vtanh.pop %v2811
    %v2924 = vtanh.pop %v2812
    %v2925 = vtanh.pop %v2813
    %v2926 = vtanh.pop %v2814
    %v2927 = vtanh.pop %v2815
    %v2928 = vtanh.pop %v2816
    %v2929 = vtanh.pop %v2817
    %v2930 = vtanh.pop %v2818
    %v2931 = vtanh.pop %v2819
    %v2932 = vtanh.pop %v2820
    %v2933 = vtanh.pop %v2821
    %v2934 = vtanh.pop %v2822
    %v2935 = vtanh.pop %v2823
    %v2936 = vtanh.pop %v2824
    %v2937 = vtanh.pop %v2825
    %v2938 = vtanh.pop %v2826
    %v2939 = vmul.f32 %v2892, %v2460
    %v2940 = vmul.f32 %v2894, %v2461
    %v2941 = vmul.f32 %v2896, %v2462
    %v2942 = vmul.f32 %v2898, %v2463
    %v2943 = vmul.f32 %v2900, %v2464
    %v2944 = vmul.f32 %v2902, %v2465
    %v2945 = vmul.f32 %v2904, %v2466
    %v2946 = vmul.f32 %v2906, %v2467
    %v2947 = vmul.f32 %v2908, %v2468
    %v2948 = vmul.f32 %v2910, %v2469
    %v2949 = vmul.f32 %v2912, %v2470
    %v2950 = vmul.f32 %v2914, %v2471
    %v2951 = vmul.f32 %v2916, %v2472
    %v2952 = vmul.f32 %v2918, %v2473
    %v2953 = vmul.f32 %v2920, %v2474
    %v2954 = vmul.f32 %v2922, %v2475
    %2971 = vrot.lane.b32.xlu0 %v2923, 32
    %v2972 = vpop.permute.xlu0 %2971
    %2973 = vrot.lane.b32.xlu0 %v2924, 32
    %v2974 = vpop.permute.xlu0 %2973
    %2975 = vrot.lane.b32.xlu0 %v2925, 32
    %v2976 = vpop.permute.xlu0 %2975
    %2977 = vrot.lane.b32.xlu0 %v2926, 32
    %v2978 = vpop.permute.xlu0 %2977
    %2979 = vrot.lane.b32.xlu0 %v2927, 32
    %v2980 = vpop.permute.xlu0 %2979
    %2981 = vrot.lane.b32.xlu0 %v2928, 32
    %v2982 = vpop.permute.xlu0 %2981
    %2983 = vrot.lane.b32.xlu0 %v2929, 32
    %v2984 = vpop.permute.xlu0 %2983
    %2985 = vrot.lane.b32.xlu0 %v2930, 32
    %v2986 = vpop.permute.xlu0 %2985
    %2987 = vrot.lane.b32.xlu0 %v2931, 32
    %v2988 = vpop.permute.xlu0 %2987
    %2989 = vrot.lane.b32.xlu0 %v2932, 32
    %v2990 = vpop.permute.xlu0 %2989
    %2991 = vrot.lane.b32.xlu0 %v2933, 32
    %v2992 = vpop.permute.xlu0 %2991
    %2993 = vrot.lane.b32.xlu0 %v2934, 32
    %v2994 = vpop.permute.xlu0 %2993
    %2995 = vrot.lane.b32.xlu0 %v2935, 32
    %v2996 = vpop.permute.xlu0 %2995
    %2997 = vrot.lane.b32.xlu0 %v2936, 32
    %v2998 = vpop.permute.xlu0 %2997
    %2999 = vrot.lane.b32.xlu0 %v2937, 32
    %v3000 = vpop.permute.xlu0 %2999
    %3001 = vrot.lane.b32.xlu0 %v2938, 32
    %v3002 = vpop.permute.xlu0 %3001
    %v3019 = vmul.f32 %v2892, %v2972
    %v3020 = vmul.f32 %v2894, %v2974
    %v3021 = vmul.f32 %v2896, %v2976
    %v3022 = vmul.f32 %v2898, %v2978
    %v3023 = vmul.f32 %v2900, %v2980
    %v3024 = vmul.f32 %v2902, %v2982
    %v3025 = vmul.f32 %v2904, %v2984
    %v3026 = vmul.f32 %v2906, %v2986
    %v3027 = vmul.f32 %v2908, %v2988
    %v3028 = vmul.f32 %v2910, %v2990
    %v3029 = vmul.f32 %v2912, %v2992
    %v3030 = vmul.f32 %v2914, %v2994
    %v3031 = vmul.f32 %v2916, %v2996
    %v3032 = vmul.f32 %v2918, %v2998
    %v3033 = vmul.f32 %v2920, %v3000
    %v3034 = vmul.f32 %v2922, %v3002
    %3051 = vrot.lane.b32.xlu0 %v3019, 32
    %v3052 = vpop.permute.xlu0 %3051
    %3053 = vrot.lane.b32.xlu0 %v3020, 32
    %v3054 = vpop.permute.xlu0 %3053
    %3055 = vrot.lane.b32.xlu0 %v3021, 32
    %v3056 = vpop.permute.xlu0 %3055
    %3057 = vrot.lane.b32.xlu0 %v3022, 32
    %v3058 = vpop.permute.xlu0 %3057
    %3059 = vrot.lane.b32.xlu0 %v3023, 32
    %v3060 = vpop.permute.xlu0 %3059
    %3061 = vrot.lane.b32.xlu0 %v3024, 32
    %v3062 = vpop.permute.xlu0 %3061
    %3063 = vrot.lane.b32.xlu0 %v3025, 32
    %v3064 = vpop.permute.xlu0 %3063
    %3065 = vrot.lane.b32.xlu0 %v3026, 32
    %v3066 = vpop.permute.xlu0 %3065
    %3067 = vrot.lane.b32.xlu0 %v3027, 32
    %v3068 = vpop.permute.xlu0 %3067
    %3069 = vrot.lane.b32.xlu0 %v3028, 32
    %v3070 = vpop.permute.xlu0 %3069
    %3071 = vrot.lane.b32.xlu0 %v3029, 32
    %v3072 = vpop.permute.xlu0 %3071
    %3073 = vrot.lane.b32.xlu0 %v3030, 32
    %v3074 = vpop.permute.xlu0 %3073
    %3075 = vrot.lane.b32.xlu0 %v3031, 32
    %v3076 = vpop.permute.xlu0 %3075
    %3077 = vrot.lane.b32.xlu0 %v3032, 32
    %v3078 = vpop.permute.xlu0 %3077
    %3079 = vrot.lane.b32.xlu0 %v3033, 32
    %v3080 = vpop.permute.xlu0 %3079
    %3081 = vrot.lane.b32.xlu0 %v3034, 32
    %v3082 = vpop.permute.xlu0 %3081
    %v3099 = vadd.f32 %v2939, %v3052
    %v3100 = vadd.f32 %v2940, %v3054
    %v3101 = vadd.f32 %v2941, %v3056
    %v3102 = vadd.f32 %v2942, %v3058
    %v3103 = vadd.f32 %v2943, %v3060
    %v3104 = vadd.f32 %v2944, %v3062
    %v3105 = vadd.f32 %v2945, %v3064
    %v3106 = vadd.f32 %v2946, %v3066
    %v3107 = vadd.f32 %v2947, %v3068
    %v3108 = vadd.f32 %v2948, %v3070
    %v3109 = vadd.f32 %v2949, %v3072
    %v3110 = vadd.f32 %v2950, %v3074
    %v3111 = vadd.f32 %v2951, %v3076
    %v3112 = vadd.f32 %v2952, %v3078
    %v3113 = vadd.f32 %v2953, %v3080
    %v3114 = vadd.f32 %v2954, %v3082
    %v3115 = vtanh.pop %v3099
    %v3116 = vtanh.pop %v3100
    %v3117 = vtanh.pop %v3101
    %v3118 = vtanh.pop %v3102
    %v3119 = vtanh.pop %v3103
    %v3120 = vtanh.pop %v3104
    %v3121 = vtanh.pop %v3105
    %v3122 = vtanh.pop %v3106
    %v3123 = vtanh.pop %v3107
    %v3124 = vtanh.pop %v3108
    %v3125 = vtanh.pop %v3109
    %v3126 = vtanh.pop %v3110
    %v3127 = vtanh.pop %v3111
    %v3128 = vtanh.pop %v3112
    %v3129 = vtanh.pop %v3113
    %v3130 = vtanh.pop %v3114
    %3147 = vrot.lane.b32.xlu0 %v3115, 32
    %v3148 = vpop.permute.xlu0 %3147
    %3149 = vrot.lane.b32.xlu0 %v3116, 32
    %v3150 = vpop.permute.xlu0 %3149
    %3151 = vrot.lane.b32.xlu0 %v3117, 32
    %v3152 = vpop.permute.xlu0 %3151
    %3153 = vrot.lane.b32.xlu0 %v3118, 32
    %v3154 = vpop.permute.xlu0 %3153
    %3155 = vrot.lane.b32.xlu0 %v3119, 32
    %v3156 = vpop.permute.xlu0 %3155
    %3157 = vrot.lane.b32.xlu0 %v3120, 32
    %v3158 = vpop.permute.xlu0 %3157
    %3159 = vrot.lane.b32.xlu0 %v3121, 32
    %v3160 = vpop.permute.xlu0 %3159
    %3161 = vrot.lane.b32.xlu0 %v3122, 32
    %v3162 = vpop.permute.xlu0 %3161
    %3163 = vrot.lane.b32.xlu0 %v3123, 32
    %v3164 = vpop.permute.xlu0 %3163
    %3165 = vrot.lane.b32.xlu0 %v3124, 32
    %v3166 = vpop.permute.xlu0 %3165
    %3167 = vrot.lane.b32.xlu0 %v3125, 32
    %v3168 = vpop.permute.xlu0 %3167
    %3169 = vrot.lane.b32.xlu0 %v3126, 32
    %v3170 = vpop.permute.xlu0 %3169
    %3171 = vrot.lane.b32.xlu0 %v3127, 32
    %v3172 = vpop.permute.xlu0 %3171
    %3173 = vrot.lane.b32.xlu0 %v3128, 32
    %v3174 = vpop.permute.xlu0 %3173
    %3175 = vrot.lane.b32.xlu0 %v3129, 32
    %v3176 = vpop.permute.xlu0 %3175
    %3177 = vrot.lane.b32.xlu0 %v3130, 32
    %v3178 = vpop.permute.xlu0 %3177
    %v3195 = vmul.f32 %v2892, %v3148
    %v3196 = vmul.f32 %v2894, %v3150
    %v3197 = vmul.f32 %v2896, %v3152
    %v3198 = vmul.f32 %v2898, %v3154
    %v3199 = vmul.f32 %v2900, %v3156
    %v3200 = vmul.f32 %v2902, %v3158
    %v3201 = vmul.f32 %v2904, %v3160
    %v3202 = vmul.f32 %v2906, %v3162
    %v3203 = vmul.f32 %v2908, %v3164
    %v3204 = vmul.f32 %v2910, %v3166
    %v3205 = vmul.f32 %v2912, %v3168
    %v3206 = vmul.f32 %v2914, %v3170
    %v3207 = vmul.f32 %v2916, %v3172
    %v3208 = vmul.f32 %v2918, %v3174
    %v3209 = vmul.f32 %v2920, %v3176
    %v3210 = vmul.f32 %v2922, %v3178
    %3227 = vrot.lane.b32.xlu0 %v3195, 64
    %v3228 = vpop.permute.xlu0 %3227
    %3229 = vrot.lane.b32.xlu0 %v3196, 64
    %v3230 = vpop.permute.xlu0 %3229
    %3231 = vrot.lane.b32.xlu0 %v3197, 64
    %v3232 = vpop.permute.xlu0 %3231
    %3233 = vrot.lane.b32.xlu0 %v3198, 64
    %v3234 = vpop.permute.xlu0 %3233
    %3235 = vrot.lane.b32.xlu0 %v3199, 64
    %v3236 = vpop.permute.xlu0 %3235
    %3237 = vrot.lane.b32.xlu0 %v3200, 64
    %v3238 = vpop.permute.xlu0 %3237
    %3239 = vrot.lane.b32.xlu0 %v3201, 64
    %v3240 = vpop.permute.xlu0 %3239
    %3241 = vrot.lane.b32.xlu0 %v3202, 64
    %v3242 = vpop.permute.xlu0 %3241
    %3243 = vrot.lane.b32.xlu0 %v3203, 64
    %v3244 = vpop.permute.xlu0 %3243
    %3245 = vrot.lane.b32.xlu0 %v3204, 64
    %v3246 = vpop.permute.xlu0 %3245
    %3247 = vrot.lane.b32.xlu0 %v3205, 64
    %v3248 = vpop.permute.xlu0 %3247
    %3249 = vrot.lane.b32.xlu0 %v3206, 64
    %v3250 = vpop.permute.xlu0 %3249
    %3251 = vrot.lane.b32.xlu0 %v3207, 64
    %v3252 = vpop.permute.xlu0 %3251
    %3253 = vrot.lane.b32.xlu0 %v3208, 64
    %v3254 = vpop.permute.xlu0 %3253
    %3255 = vrot.lane.b32.xlu0 %v3209, 64
    %v3256 = vpop.permute.xlu0 %3255
    %3257 = vrot.lane.b32.xlu0 %v3210, 64
    %v3258 = vpop.permute.xlu0 %3257
    %3275 = vst.msk [vmem:[#allocation3 + $0x3] sm:$0x1] %vm1350, %v3228
    %3276 = vst.msk [vmem:[#allocation3 + $0xb] sm:$0x1] %vm1350, %v3230
    %3277 = vst.msk [vmem:[#allocation3 + $0x13] sm:$0x1] %vm1350, %v3232
    %3278 = vst.msk [vmem:[#allocation3 + $0x1b] sm:$0x1] %vm1350, %v3234
    %3279 = vst.msk [vmem:[#allocation3 + $0x23] sm:$0x1] %vm1350, %v3236
    %3280 = vst.msk [vmem:[#allocation3 + $0x2b] sm:$0x1] %vm1350, %v3238
    %3281 = vst.msk [vmem:[#allocation3 + $0x33] sm:$0x1] %vm1350, %v3240
    %3282 = vst.msk [vmem:[#allocation3 + $0x3b] sm:$0x1] %vm1350, %v3242
    %3283 = vst.msk [vmem:[#allocation3 + $0x43] sm:$0x1] %vm1350, %v3244
    %3284 = vst.msk [vmem:[#allocation3 + $0x4b] sm:$0x1] %vm1350, %v3246
    %3285 = vst.msk [vmem:[#allocation3 + $0x53] sm:$0x1] %vm1350, %v3248
    %3286 = vst.msk [vmem:[#allocation3 + $0x5b] sm:$0x1] %vm1350, %v3250
    %3287 = vst.msk [vmem:[#allocation3 + $0x63] sm:$0x1] %vm1350, %v3252
    %3288 = vst.msk [vmem:[#allocation3 + $0x6b] sm:$0x1] %vm1350, %v3254
    %3289 = vst.msk [vmem:[#allocation3 + $0x73] sm:$0x1] %vm1350, %v3256
    %3290 = vst.msk [vmem:[#allocation3 + $0x7b] sm:$0x1] %vm1350, %v3258
    %v3291 = vld [vmem:[#allocation2 + $0x4] sm:$0x1]
    %v3292 = vld [vmem:[#allocation2 + $0xc] sm:$0x1]
    %v3293 = vld [vmem:[#allocation2 + $0x14] sm:$0x1]
    %v3294 = vld [vmem:[#allocation2 + $0x1c] sm:$0x1]
    %v3295 = vld [vmem:[#allocation2 + $0x24] sm:$0x1]
    %v3296 = vld [vmem:[#allocation2 + $0x2c] sm:$0x1]
    %v3297 = vld [vmem:[#allocation2 + $0x34] sm:$0x1]
    %v3298 = vld [vmem:[#allocation2 + $0x3c] sm:$0x1]
    %v3299 = vld [vmem:[#allocation2 + $0x44] sm:$0x1]
    %v3300 = vld [vmem:[#allocation2 + $0x4c] sm:$0x1]
    %v3301 = vld [vmem:[#allocation2 + $0x54] sm:$0x1]
    %v3302 = vld [vmem:[#allocation2 + $0x5c] sm:$0x1]
    %v3303 = vld [vmem:[#allocation2 + $0x64] sm:$0x1]
    %v3304 = vld [vmem:[#allocation2 + $0x6c] sm:$0x1]
    %v3305 = vld [vmem:[#allocation2 + $0x74] sm:$0x1]
    %v3306 = vld [vmem:[#allocation2 + $0x7c] sm:$0x1]
    %v3307 = vrot.slane %v3196, 7
    %v3308 = vsel %vm1384, %v3307, %v3195
    %v3309 = vrot.slane %v3197, 6
    %v3310 = vsel %vm1387, %v3309, %v3308
    %v3311 = vrot.slane %v3198, 5
    %v3312 = vsel %vm1390, %v3311, %v3310
    %v3313 = vrot.slane %v3199, 4
    %v3314 = vsel %vm1393, %v3313, %v3312
    %v3315 = vrot.slane %v3200, 3
    %v3316 = vsel %vm1396, %v3315, %v3314
    %v3317 = vrot.slane %v3201, 2
    %v3318 = vsel %vm1399, %v3317, %v3316
    %v3319 = vrot.slane %v3202, 1
    %v3320 = vsel %vm1402, %v3319, %v3318
    %v3321 = vrot.slane %v3204, 7
    %v3322 = vsel %vm1384, %v3321, %v3203
    %v3323 = vrot.slane %v3205, 6
    %v3324 = vsel %vm1387, %v3323, %v3322
    %v3325 = vrot.slane %v3206, 5
    %v3326 = vsel %vm1390, %v3325, %v3324
    %v3327 = vrot.slane %v3207, 4
    %v3328 = vsel %vm1393, %v3327, %v3326
    %v3329 = vrot.slane %v3208, 3
    %v3330 = vsel %vm1396, %v3329, %v3328
    %v3331 = vrot.slane %v3209, 2
    %v3332 = vsel %vm1399, %v3331, %v3330
    %v3333 = vrot.slane %v3210, 1
    %v3334 = vsel %vm1402, %v3333, %v3332
    %3335 = vrot.lane.b32.xlu0 %v3320, 64
    %v3336 = vpop.permute.xlu0 %3335
    %3337 = vrot.lane.b32.xlu0 %v3334, 64
    %v3338 = vpop.permute.xlu0 %3337
    %v3339 = vsel %vm775, %v3336, 0
    %v3341 = vsel %vm775, %v3338, 0
    %3343 = vmatprep.subr.mxu0 0.0
    %3344 = vmatpush1.msra.mxu0 %v755
    %3345 = vmatprep.subr.mxu0 0.0
    %3346 = vmatpush1.msra.mxu0 %v756
    %3347 = vmatprep.subr.mxu0 0.0
    %3348 = vmatpush1.msra.mxu0 %v757
    %3349 = vmatprep.subr.mxu0 0.0
    %3350 = vmatpush1.msra.mxu0 %v758
    %3351 = vmatprep.subr.mxu0 0.0
    %3352 = vmatpush1.msra.mxu0 0.0
    %3353 = vmatprep.subr.mxu0 0.0
    %3354 = vmatpush1.msra.mxu0 0.0
    %3355 = vmatprep.subr.mxu0 0.0
    %3356 = vmatpush1.msra.mxu0 0.0
    %3357 = vmatprep.subr.mxu0 0.0
    %3358 = vmatpush1.msra.mxu0 0.0
    %3359 = vmatprep.subr.mxu0 0.0
    %3360 = vmatpush1.msra.mxu0 0.0
    %3361 = vmatprep.subr.mxu0 0.0
    %3362 = vmatpush1.msra.mxu0 0.0
    %3363 = vmatprep.subr.mxu0 0.0
    %3364 = vmatpush1.msra.mxu0 0.0
    %3365 = vmatprep.subr.mxu0 0.0
    %3366 = vmatpush1.msra.mxu0 0.0
    %3367 = vmatprep.subr.mxu0 0.0
    %3368 = vmatpush1.msra.mxu0 0.0
    %3369 = vmatprep.subr.mxu0 0.0
    %3370 = vmatpush1.msra.mxu0 0.0
    %3371 = vmatprep.subr.mxu0 0.0
    %3372 = vmatpush1.msra.mxu0 0.0
    %3373 = vmatprep.subr.mxu0 0.0
    %3374 = vmatpush1.msra.mxu0 0.0
    %3375 = vmatprep.subr.mxu0 0.0
    %3376 = vmatpush1.msra.mxu0 0.0
    %3377 = vmatprep.subr.mxu0 0.0
    %3378 = vmatpush1.msra.mxu0 0.0
    %3379 = vmatprep.subr.mxu0 0.0
    %3380 = vmatpush1.msra.mxu0 0.0
    %3381 = vmatprep.subr.mxu0 0.0
    %3382 = vmatpush1.msra.mxu0 0.0
    %3383 = vmatprep.subr.mxu0 0.0
    %3384 = vmatpush1.msra.mxu0 0.0
    %3385 = vmatprep.subr.mxu0 0.0
    %3386 = vmatpush1.msra.mxu0 0.0
    %3387 = vmatprep.subr.mxu0 0.0
    %3388 = vmatpush1.msra.mxu0 0.0
    %3389 = vmatprep.subr.mxu0 0.0
    %3390 = vmatpush1.msra.mxu0 0.0
    %3391 = vmatprep.subr.mxu0 0.0
    %3392 = vmatpush1.msra.mxu0 0.0
    %3393 = vmatprep.subr.mxu0 0.0
    %3394 = vmatpush1.msra.mxu0 0.0
    %3395 = vmatprep.subr.mxu0 0.0
    %3396 = vmatpush1.msra.mxu0 0.0
    %3397 = vmatprep.subr.mxu0 0.0
    %3398 = vmatpush1.msra.mxu0 0.0
    %3399 = vmatprep.subr.mxu0 0.0
    %3400 = vmatpush1.msra.mxu0 0.0
    %3401 = vmatprep.subr.mxu0 0.0
    %3402 = vmatpush1.msra.mxu0 0.0
    %3403 = vmatprep.subr.mxu0 0.0
    %3404 = vmatpush1.msra.mxu0 0.0
    %3405 = vmatprep.subr.mxu0 0.0
    %3406 = vmatpush1.msra.mxu0 0.0
    %3407 = vmatprep.mubr.f32.mxu0 0.0
    %3408 = vmatmul.mubr.f32.gmra.mrb[0].mxu0 %v3339
    %v3409 = vpop.f32.mrb[0].mxu0
    %v3410 = vadd.f32 0.0, %v3409
    %v3411 = vpop.f32.mrb[0].mxu0
    %3412 = vmatprep.mubr.f32.mxu0 0.0
    %3413 = vmatmul.mubr.f32.gmra.mrb[0].mxu0 %v3341
    %v3414 = vpop.f32.mrb[0].mxu0
    %v3415 = vadd.f32 0.0, %v3414
    %v3416 = vpop.f32.mrb[0].mxu0
    %3417 = vdwg.mxu0
    %v3420 = vrot.slane %v3410, 1
    %v3421 = vrot.slane %v3410, 2
    %v3422 = vrot.slane %v3410, 3
    %v3423 = vrot.slane %v3410, 4
    %v3424 = vrot.slane %v3410, 5
    %v3425 = vrot.slane %v3410, 6
    %v3426 = vrot.slane %v3410, 7
    %v3427 = vrot.slane %v3415, 1
    %v3428 = vrot.slane %v3415, 2
    %v3429 = vrot.slane %v3415, 3
    %v3430 = vrot.slane %v3415, 4
    %v3431 = vrot.slane %v3415, 5
    %v3432 = vrot.slane %v3415, 6
    %v3433 = vrot.slane %v3415, 7
    %v3450 = vadd.f32 %v3291, %v3410
    %v3451 = vadd.f32 %v3292, %v3420
    %v3452 = vadd.f32 %v3293, %v3421
    %v3453 = vadd.f32 %v3294, %v3422
    %v3454 = vadd.f32 %v3295, %v3423
    %v3455 = vadd.f32 %v3296, %v3424
    %v3456 = vadd.f32 %v3297, %v3425
    %v3457 = vadd.f32 %v3298, %v3426
    %v3458 = vadd.f32 %v3299, %v3415
    %v3459 = vadd.f32 %v3300, %v3427
    %v3460 = vadd.f32 %v3301, %v3428
    %v3461 = vadd.f32 %v3302, %v3429
    %v3462 = vadd.f32 %v3303, %v3430
    %v3463 = vadd.f32 %v3304, %v3431
    %v3464 = vadd.f32 %v3305, %v3432
    %v3465 = vadd.f32 %v3306, %v3433
    %v3466 = vxor.u32 %v3450, 2147483648
    %v3467 = vxor.u32 %v3451, 2147483648
    %v3468 = vxor.u32 %v3452, 2147483648
    %v3469 = vxor.u32 %v3453, 2147483648
    %v3470 = vxor.u32 %v3454, 2147483648
    %v3471 = vxor.u32 %v3455, 2147483648
    %v3472 = vxor.u32 %v3456, 2147483648
    %v3473 = vxor.u32 %v3457, 2147483648
    %v3474 = vxor.u32 %v3458, 2147483648
    %v3475 = vxor.u32 %v3459, 2147483648
    %v3476 = vxor.u32 %v3460, 2147483648
    %v3477 = vxor.u32 %v3461, 2147483648
    %v3478 = vxor.u32 %v3462, 2147483648
    %v3479 = vxor.u32 %v3463, 2147483648
    %v3480 = vxor.u32 %v3464, 2147483648
    %v3481 = vxor.u32 %v3465, 2147483648
    %v3482 = vmul.f32 %v3466, 1.442695
    %v3483 = vpow.pop %v3482
    %v3484 = vmul.f32 %v3467, 1.442695
    %v3485 = vpow.pop %v3484
    %v3486 = vmul.f32 %v3468, 1.442695
    %v3487 = vpow.pop %v3486
    %v3488 = vmul.f32 %v3469, 1.442695
    %v3489 = vpow.pop %v3488
    %v3490 = vmul.f32 %v3470, 1.442695
    %v3491 = vpow.pop %v3490
    %v3492 = vmul.f32 %v3471, 1.442695
    %v3493 = vpow.pop %v3492
    %v3494 = vmul.f32 %v3472, 1.442695
    %v3495 = vpow.pop %v3494
    %v3496 = vmul.f32 %v3473, 1.442695
    %v3497 = vpow.pop %v3496
    %v3498 = vmul.f32 %v3474, 1.442695
    %v3499 = vpow.pop %v3498
    %v3500 = vmul.f32 %v3475, 1.442695
    %v3501 = vpow.pop %v3500
    %v3502 = vmul.f32 %v3476, 1.442695
    %v3503 = vpow.pop %v3502
    %v3504 = vmul.f32 %v3477, 1.442695
    %v3505 = vpow.pop %v3504
    %v3506 = vmul.f32 %v3478, 1.442695
    %v3507 = vpow.pop %v3506
    %v3508 = vmul.f32 %v3479, 1.442695
    %v3509 = vpow.pop %v3508
    %v3510 = vmul.f32 %v3480, 1.442695
    %v3511 = vpow.pop %v3510
    %v3512 = vmul.f32 %v3481, 1.442695
    %v3513 = vpow.pop %v3512
    %v3514 = vadd.f32 %v3483, 1.0
    %v3515 = vadd.f32 %v3485, 1.0
    %v3516 = vadd.f32 %v3487, 1.0
    %v3517 = vadd.f32 %v3489, 1.0
    %v3518 = vadd.f32 %v3491, 1.0
    %v3519 = vadd.f32 %v3493, 1.0
    %v3520 = vadd.f32 %v3495, 1.0
    %v3521 = vadd.f32 %v3497, 1.0
    %v3522 = vadd.f32 %v3499, 1.0
    %v3523 = vadd.f32 %v3501, 1.0
    %v3524 = vadd.f32 %v3503, 1.0
    %v3525 = vadd.f32 %v3505, 1.0
    %v3526 = vadd.f32 %v3507, 1.0
    %v3527 = vadd.f32 %v3509, 1.0
    %v3528 = vadd.f32 %v3511, 1.0
    %v3529 = vadd.f32 %v3513, 1.0
    %v3530 = vrcp.pop %v3514
    %v3531 = vmul.f32 1.0, %v3530
    %v3532 = vrcp.pop %v3515
    %v3533 = vmul.f32 1.0, %v3532
    %v3534 = vrcp.pop %v3516
    %v3535 = vmul.f32 1.0, %v3534
    %v3536 = vrcp.pop %v3517
    %v3537 = vmul.f32 1.0, %v3536
    %v3538 = vrcp.pop %v3518
    %v3539 = vmul.f32 1.0, %v3538
    %v3540 = vrcp.pop %v3519
    %v3541 = vmul.f32 1.0, %v3540
    %v3542 = vrcp.pop %v3520
    %v3543 = vmul.f32 1.0, %v3542
    %v3544 = vrcp.pop %v3521
    %v3545 = vmul.f32 1.0, %v3544
    %v3546 = vrcp.pop %v3522
    %v3547 = vmul.f32 1.0, %v3546
    %v3548 = vrcp.pop %v3523
    %v3549 = vmul.f32 1.0, %v3548
    %v3550 = vrcp.pop %v3524
    %v3551 = vmul.f32 1.0, %v3550
    %v3552 = vrcp.pop %v3525
    %v3553 = vmul.f32 1.0, %v3552
    %v3554 = vrcp.pop %v3526
    %v3555 = vmul.f32 1.0, %v3554
    %v3556 = vrcp.pop %v3527
    %v3557 = vmul.f32 1.0, %v3556
    %v3558 = vrcp.pop %v3528
    %v3559 = vmul.f32 1.0, %v3558
    %v3560 = vrcp.pop %v3529
    %v3561 = vmul.f32 1.0, %v3560
    %v3562 = vtanh.pop %v3450
    %v3563 = vtanh.pop %v3451
    %v3564 = vtanh.pop %v3452
    %v3565 = vtanh.pop %v3453
    %v3566 = vtanh.pop %v3454
    %v3567 = vtanh.pop %v3455
    %v3568 = vtanh.pop %v3456
    %v3569 = vtanh.pop %v3457
    %v3570 = vtanh.pop %v3458
    %v3571 = vtanh.pop %v3459
    %v3572 = vtanh.pop %v3460
    %v3573 = vtanh.pop %v3461
    %v3574 = vtanh.pop %v3462
    %v3575 = vtanh.pop %v3463
    %v3576 = vtanh.pop %v3464
    %v3577 = vtanh.pop %v3465
    %v3578 = vmul.f32 %v3531, %v3099
    %v3579 = vmul.f32 %v3533, %v3100
    %v3580 = vmul.f32 %v3535, %v3101
    %v3581 = vmul.f32 %v3537, %v3102
    %v3582 = vmul.f32 %v3539, %v3103
    %v3583 = vmul.f32 %v3541, %v3104
    %v3584 = vmul.f32 %v3543, %v3105
    %v3585 = vmul.f32 %v3545, %v3106
    %v3586 = vmul.f32 %v3547, %v3107
    %v3587 = vmul.f32 %v3549, %v3108
    %v3588 = vmul.f32 %v3551, %v3109
    %v3589 = vmul.f32 %v3553, %v3110
    %v3590 = vmul.f32 %v3555, %v3111
    %v3591 = vmul.f32 %v3557, %v3112
    %v3592 = vmul.f32 %v3559, %v3113
    %v3593 = vmul.f32 %v3561, %v3114
    %3610 = vrot.lane.b32.xlu0 %v3562, 32
    %v3611 = vpop.permute.xlu0 %3610
    %3612 = vrot.lane.b32.xlu0 %v3563, 32
    %v3613 = vpop.permute.xlu0 %3612
    %3614 = vrot.lane.b32.xlu0 %v3564, 32
    %v3615 = vpop.permute.xlu0 %3614
    %3616 = vrot.lane.b32.xlu0 %v3565, 32
    %v3617 = vpop.permute.xlu0 %3616
    %3618 = vrot.lane.b32.xlu0 %v3566, 32
    %v3619 = vpop.permute.xlu0 %3618
    %3620 = vrot.lane.b32.xlu0 %v3567, 32
    %v3621 = vpop.permute.xlu0 %3620
    %3622 = vrot.lane.b32.xlu0 %v3568, 32
    %v3623 = vpop.permute.xlu0 %3622
    %3624 = vrot.lane.b32.xlu0 %v3569, 32
    %v3625 = vpop.permute.xlu0 %3624
    %3626 = vrot.lane.b32.xlu0 %v3570, 32
    %v3627 = vpop.permute.xlu0 %3626
    %3628 = vrot.lane.b32.xlu0 %v3571, 32
    %v3629 = vpop.permute.xlu0 %3628
    %3630 = vrot.lane.b32.xlu0 %v3572, 32
    %v3631 = vpop.permute.xlu0 %3630
    %3632 = vrot.lane.b32.xlu0 %v3573, 32
    %v3633 = vpop.permute.xlu0 %3632
    %3634 = vrot.lane.b32.xlu0 %v3574, 32
    %v3635 = vpop.permute.xlu0 %3634
    %3636 = vrot.lane.b32.xlu0 %v3575, 32
    %v3637 = vpop.permute.xlu0 %3636
    %3638 = vrot.lane.b32.xlu0 %v3576, 32
    %v3639 = vpop.permute.xlu0 %3638
    %3640 = vrot.lane.b32.xlu0 %v3577, 32
    %v3641 = vpop.permute.xlu0 %3640
    %v3658 = vmul.f32 %v3531, %v3611
    %v3659 = vmul.f32 %v3533, %v3613
    %v3660 = vmul.f32 %v3535, %v3615
    %v3661 = vmul.f32 %v3537, %v3617
    %v3662 = vmul.f32 %v3539, %v3619
    %v3663 = vmul.f32 %v3541, %v3621
    %v3664 = vmul.f32 %v3543, %v3623
    %v3665 = vmul.f32 %v3545, %v3625
    %v3666 = vmul.f32 %v3547, %v3627
    %v3667 = vmul.f32 %v3549, %v3629
    %v3668 = vmul.f32 %v3551, %v3631
    %v3669 = vmul.f32 %v3553, %v3633
    %v3670 = vmul.f32 %v3555, %v3635
    %v3671 = vmul.f32 %v3557, %v3637
    %v3672 = vmul.f32 %v3559, %v3639
    %v3673 = vmul.f32 %v3561, %v3641
    %3690 = vrot.lane.b32.xlu0 %v3658, 32
    %v3691 = vpop.permute.xlu0 %3690
    %3692 = vrot.lane.b32.xlu0 %v3659, 32
    %v3693 = vpop.permute.xlu0 %3692
    %3694 = vrot.lane.b32.xlu0 %v3660, 32
    %v3695 = vpop.permute.xlu0 %3694
    %3696 = vrot.lane.b32.xlu0 %v3661, 32
    %v3697 = vpop.permute.xlu0 %3696
    %3698 = vrot.lane.b32.xlu0 %v3662, 32
    %v3699 = vpop.permute.xlu0 %3698
    %3700 = vrot.lane.b32.xlu0 %v3663, 32
    %v3701 = vpop.permute.xlu0 %3700
    %3702 = vrot.lane.b32.xlu0 %v3664, 32
    %v3703 = vpop.permute.xlu0 %3702
    %3704 = vrot.lane.b32.xlu0 %v3665, 32
    %v3705 = vpop.permute.xlu0 %3704
    %3706 = vrot.lane.b32.xlu0 %v3666, 32
    %v3707 = vpop.permute.xlu0 %3706
    %3708 = vrot.lane.b32.xlu0 %v3667, 32
    %v3709 = vpop.permute.xlu0 %3708
    %3710 = vrot.lane.b32.xlu0 %v3668, 32
    %v3711 = vpop.permute.xlu0 %3710
    %3712 = vrot.lane.b32.xlu0 %v3669, 32
    %v3713 = vpop.permute.xlu0 %3712
    %3714 = vrot.lane.b32.xlu0 %v3670, 32
    %v3715 = vpop.permute.xlu0 %3714
    %3716 = vrot.lane.b32.xlu0 %v3671, 32
    %v3717 = vpop.permute.xlu0 %3716
    %3718 = vrot.lane.b32.xlu0 %v3672, 32
    %v3719 = vpop.permute.xlu0 %3718
    %3720 = vrot.lane.b32.xlu0 %v3673, 32
    %v3721 = vpop.permute.xlu0 %3720
    %v3738 = vadd.f32 %v3578, %v3691
    %v3739 = vadd.f32 %v3579, %v3693
    %v3740 = vadd.f32 %v3580, %v3695
    %v3741 = vadd.f32 %v3581, %v3697
    %v3742 = vadd.f32 %v3582, %v3699
    %v3743 = vadd.f32 %v3583, %v3701
    %v3744 = vadd.f32 %v3584, %v3703
    %v3745 = vadd.f32 %v3585, %v3705
    %v3746 = vadd.f32 %v3586, %v3707
    %v3747 = vadd.f32 %v3587, %v3709
    %v3748 = vadd.f32 %v3588, %v3711
    %v3749 = vadd.f32 %v3589, %v3713
    %v3750 = vadd.f32 %v3590, %v3715
    %v3751 = vadd.f32 %v3591, %v3717
    %v3752 = vadd.f32 %v3592, %v3719
    %v3753 = vadd.f32 %v3593, %v3721
    %v3754 = vtanh.pop %v3738
    %v3755 = vtanh.pop %v3739
    %v3756 = vtanh.pop %v3740
    %v3757 = vtanh.pop %v3741
    %v3758 = vtanh.pop %v3742
    %v3759 = vtanh.pop %v3743
    %v3760 = vtanh.pop %v3744
    %v3761 = vtanh.pop %v3745
    %v3762 = vtanh.pop %v3746
    %v3763 = vtanh.pop %v3747
    %v3764 = vtanh.pop %v3748
    %v3765 = vtanh.pop %v3749
    %v3766 = vtanh.pop %v3750
    %v3767 = vtanh.pop %v3751
    %v3768 = vtanh.pop %v3752
    %v3769 = vtanh.pop %v3753
    %3786 = vrot.lane.b32.xlu0 %v3754, 32
    %v3787 = vpop.permute.xlu0 %3786
    %3788 = vrot.lane.b32.xlu0 %v3755, 32
    %v3789 = vpop.permute.xlu0 %3788
    %3790 = vrot.lane.b32.xlu0 %v3756, 32
    %v3791 = vpop.permute.xlu0 %3790
    %3792 = vrot.lane.b32.xlu0 %v3757, 32
    %v3793 = vpop.permute.xlu0 %3792
    %3794 = vrot.lane.b32.xlu0 %v3758, 32
    %v3795 = vpop.permute.xlu0 %3794
    %3796 = vrot.lane.b32.xlu0 %v3759, 32
    %v3797 = vpop.permute.xlu0 %3796
    %3798 = vrot.lane.b32.xlu0 %v3760, 32
    %v3799 = vpop.permute.xlu0 %3798
    %3800 = vrot.lane.b32.xlu0 %v3761, 32
    %v3801 = vpop.permute.xlu0 %3800
    %3802 = vrot.lane.b32.xlu0 %v3762, 32
    %v3803 = vpop.permute.xlu0 %3802
    %3804 = vrot.lane.b32.xlu0 %v3763, 32
    %v3805 = vpop.permute.xlu0 %3804
    %3806 = vrot.lane.b32.xlu0 %v3764, 32
    %v3807 = vpop.permute.xlu0 %3806
    %3808 = vrot.lane.b32.xlu0 %v3765, 32
    %v3809 = vpop.permute.xlu0 %3808
    %3810 = vrot.lane.b32.xlu0 %v3766, 32
    %v3811 = vpop.permute.xlu0 %3810
    %3812 = vrot.lane.b32.xlu0 %v3767, 32
    %v3813 = vpop.permute.xlu0 %3812
    %3814 = vrot.lane.b32.xlu0 %v3768, 32
    %v3815 = vpop.permute.xlu0 %3814
    %3816 = vrot.lane.b32.xlu0 %v3769, 32
    %v3817 = vpop.permute.xlu0 %3816
    %v3834 = vmul.f32 %v3531, %v3787
    %v3835 = vmul.f32 %v3533, %v3789
    %v3836 = vmul.f32 %v3535, %v3791
    %v3837 = vmul.f32 %v3537, %v3793
    %v3838 = vmul.f32 %v3539, %v3795
    %v3839 = vmul.f32 %v3541, %v3797
    %v3840 = vmul.f32 %v3543, %v3799
    %v3841 = vmul.f32 %v3545, %v3801
    %v3842 = vmul.f32 %v3547, %v3803
    %v3843 = vmul.f32 %v3549, %v3805
    %v3844 = vmul.f32 %v3551, %v3807
    %v3845 = vmul.f32 %v3553, %v3809
    %v3846 = vmul.f32 %v3555, %v3811
    %v3847 = vmul.f32 %v3557, %v3813
    %v3848 = vmul.f32 %v3559, %v3815
    %v3849 = vmul.f32 %v3561, %v3817
    %3866 = vrot.lane.b32.xlu0 %v3834, 64
    %v3867 = vpop.permute.xlu0 %3866
    %3868 = vrot.lane.b32.xlu0 %v3835, 64
    %v3869 = vpop.permute.xlu0 %3868
    %3870 = vrot.lane.b32.xlu0 %v3836, 64
    %v3871 = vpop.permute.xlu0 %3870
    %3872 = vrot.lane.b32.xlu0 %v3837, 64
    %v3873 = vpop.permute.xlu0 %3872
    %3874 = vrot.lane.b32.xlu0 %v3838, 64
    %v3875 = vpop.permute.xlu0 %3874
    %3876 = vrot.lane.b32.xlu0 %v3839, 64
    %v3877 = vpop.permute.xlu0 %3876
    %3878 = vrot.lane.b32.xlu0 %v3840, 64
    %v3879 = vpop.permute.xlu0 %3878
    %3880 = vrot.lane.b32.xlu0 %v3841, 64
    %v3881 = vpop.permute.xlu0 %3880
    %3882 = vrot.lane.b32.xlu0 %v3842, 64
    %v3883 = vpop.permute.xlu0 %3882
    %3884 = vrot.lane.b32.xlu0 %v3843, 64
    %v3885 = vpop.permute.xlu0 %3884
    %3886 = vrot.lane.b32.xlu0 %v3844, 64
    %v3887 = vpop.permute.xlu0 %3886
    %3888 = vrot.lane.b32.xlu0 %v3845, 64
    %v3889 = vpop.permute.xlu0 %3888
    %3890 = vrot.lane.b32.xlu0 %v3846, 64
    %v3891 = vpop.permute.xlu0 %3890
    %3892 = vrot.lane.b32.xlu0 %v3847, 64
    %v3893 = vpop.permute.xlu0 %3892
    %3894 = vrot.lane.b32.xlu0 %v3848, 64
    %v3895 = vpop.permute.xlu0 %3894
    %3896 = vrot.lane.b32.xlu0 %v3849, 64
    %v3897 = vpop.permute.xlu0 %3896
    %3914 = vst.msk [vmem:[#allocation3 + $0x4] sm:$0x1] %vm1350, %v3867
    %3915 = vst.msk [vmem:[#allocation3 + $0xc] sm:$0x1] %vm1350, %v3869
    %3916 = vst.msk [vmem:[#allocation3 + $0x14] sm:$0x1] %vm1350, %v3871
    %3917 = vst.msk [vmem:[#allocation3 + $0x1c] sm:$0x1] %vm1350, %v3873
    %3918 = vst.msk [vmem:[#allocation3 + $0x24] sm:$0x1] %vm1350, %v3875
    %3919 = vst.msk [vmem:[#allocation3 + $0x2c] sm:$0x1] %vm1350, %v3877
    %3920 = vst.msk [vmem:[#allocation3 + $0x34] sm:$0x1] %vm1350, %v3879
    %3921 = vst.msk [vmem:[#allocation3 + $0x3c] sm:$0x1] %vm1350, %v3881
    %3922 = vst.msk [vmem:[#allocation3 + $0x44] sm:$0x1] %vm1350, %v3883
    %3923 = vst.msk [vmem:[#allocation3 + $0x4c] sm:$0x1] %vm1350, %v3885
    %3924 = vst.msk [vmem:[#allocation3 + $0x54] sm:$0x1] %vm1350, %v3887
    %3925 = vst.msk [vmem:[#allocation3 + $0x5c] sm:$0x1] %vm1350, %v3889
    %3926 = vst.msk [vmem:[#allocation3 + $0x64] sm:$0x1] %vm1350, %v3891
    %3927 = vst.msk [vmem:[#allocation3 + $0x6c] sm:$0x1] %vm1350, %v3893
    %3928 = vst.msk [vmem:[#allocation3 + $0x74] sm:$0x1] %vm1350, %v3895
    %3929 = vst.msk [vmem:[#allocation3 + $0x7c] sm:$0x1] %vm1350, %v3897
    %v3930 = vld [vmem:[#allocation2 + $0x5] sm:$0x1]
    %v3931 = vld [vmem:[#allocation2 + $0xd] sm:$0x1]
    %v3932 = vld [vmem:[#allocation2 + $0x15] sm:$0x1]
    %v3933 = vld [vmem:[#allocation2 + $0x1d] sm:$0x1]
    %v3934 = vld [vmem:[#allocation2 + $0x25] sm:$0x1]
    %v3935 = vld [vmem:[#allocation2 + $0x2d] sm:$0x1]
    %v3936 = vld [vmem:[#allocation2 + $0x35] sm:$0x1]
    %v3937 = vld [vmem:[#allocation2 + $0x3d] sm:$0x1]
    %v3938 = vld [vmem:[#allocation2 + $0x45] sm:$0x1]
    %v3939 = vld [vmem:[#allocation2 + $0x4d] sm:$0x1]
    %v3940 = vld [vmem:[#allocation2 + $0x55] sm:$0x1]
    %v3941 = vld [vmem:[#allocation2 + $0x5d] sm:$0x1]
    %v3942 = vld [vmem:[#allocation2 + $0x65] sm:$0x1]
    %v3943 = vld [vmem:[#allocation2 + $0x6d] sm:$0x1]
    %v3944 = vld [vmem:[#allocation2 + $0x75] sm:$0x1]
    %v3945 = vld [vmem:[#allocation2 + $0x7d] sm:$0x1]
    %v3946 = vrot.slane %v3835, 7
    %v3947 = vsel %vm1384, %v3946, %v3834
    %v3948 = vrot.slane %v3836, 6
    %v3949 = vsel %vm1387, %v3948, %v3947
    %v3950 = vrot.slane %v3837, 5
    %v3951 = vsel %vm1390, %v3950, %v3949
    %v3952 = vrot.slane %v3838, 4
    %v3953 = vsel %vm1393, %v3952, %v3951
    %v3954 = vrot.slane %v3839, 3
    %v3955 = vsel %vm1396, %v3954, %v3953
    %v3956 = vrot.slane %v3840, 2
    %v3957 = vsel %vm1399, %v3956, %v3955
    %v3958 = vrot.slane %v3841, 1
    %v3959 = vsel %vm1402, %v3958, %v3957
    %v3960 = vrot.slane %v3843, 7
    %v3961 = vsel %vm1384, %v3960, %v3842
    %v3962 = vrot.slane %v3844, 6
    %v3963 = vsel %vm1387, %v3962, %v3961
    %v3964 = vrot.slane %v3845, 5
    %v3965 = vsel %vm1390, %v3964, %v3963
    %v3966 = vrot.slane %v3846, 4
    %v3967 = vsel %vm1393, %v3966, %v3965
    %v3968 = vrot.slane %v3847, 3
    %v3969 = vsel %vm1396, %v3968, %v3967
    %v3970 = vrot.slane %v3848, 2
    %v3971 = vsel %vm1399, %v3970, %v3969
    %v3972 = vrot.slane %v3849, 1
    %v3973 = vsel %vm1402, %v3972, %v3971
    %3974 = vrot.lane.b32.xlu0 %v3959, 64
    %v3975 = vpop.permute.xlu0 %3974
    %3976 = vrot.lane.b32.xlu0 %v3973, 64
    %v3977 = vpop.permute.xlu0 %3976
    %v3978 = vsel %vm775, %v3975, 0
    %v3980 = vsel %vm775, %v3977, 0
    %3982 = vmatprep.subr.mxu0 0.0
    %3983 = vmatpush1.msra.mxu0 %v755
    %3984 = vmatprep.subr.mxu0 0.0
    %3985 = vmatpush1.msra.mxu0 %v756
    %3986 = vmatprep.subr.mxu0 0.0
    %3987 = vmatpush1.msra.mxu0 %v757
    %3988 = vmatprep.subr.mxu0 0.0
    %3989 = vmatpush1.msra.mxu0 %v758
    %3990 = vmatprep.subr.mxu0 0.0
    %3991 = vmatpush1.msra.mxu0 0.0
    %3992 = vmatprep.subr.mxu0 0.0
    %3993 = vmatpush1.msra.mxu0 0.0
    %3994 = vmatprep.subr.mxu0 0.0
    %3995 = vmatpush1.msra.mxu0 0.0
    %3996 = vmatprep.subr.mxu0 0.0
    %3997 = vmatpush1.msra.mxu0 0.0
    %3998 = vmatprep.subr.mxu0 0.0
    %3999 = vmatpush1.msra.mxu0 0.0
    %4000 = vmatprep.subr.mxu0 0.0
    %4001 = vmatpush1.msra.mxu0 0.0
    %4002 = vmatprep.subr.mxu0 0.0
    %4003 = vmatpush1.msra.mxu0 0.0
    %4004 = vmatprep.subr.mxu0 0.0
    %4005 = vmatpush1.msra.mxu0 0.0
    %4006 = vmatprep.subr.mxu0 0.0
    %4007 = vmatpush1.msra.mxu0 0.0
    %4008 = vmatprep.subr.mxu0 0.0
    %4009 = vmatpush1.msra.mxu0 0.0
    %4010 = vmatprep.subr.mxu0 0.0
    %4011 = vmatpush1.msra.mxu0 0.0
    %4012 = vmatprep.subr.mxu0 0.0
    %4013 = vmatpush1.msra.mxu0 0.0
    %4014 = vmatprep.subr.mxu0 0.0
    %4015 = vmatpush1.msra.mxu0 0.0
    %4016 = vmatprep.subr.mxu0 0.0
    %4017 = vmatpush1.msra.mxu0 0.0
    %4018 = vmatprep.subr.mxu0 0.0
    %4019 = vmatpush1.msra.mxu0 0.0
    %4020 = vmatprep.subr.mxu0 0.0
    %4021 = vmatpush1.msra.mxu0 0.0
    %4022 = vmatprep.subr.mxu0 0.0
    %4023 = vmatpush1.msra.mxu0 0.0
    %4024 = vmatprep.subr.mxu0 0.0
    %4025 = vmatpush1.msra.mxu0 0.0
    %4026 = vmatprep.subr.mxu0 0.0
    %4027 = vmatpush1.msra.mxu0 0.0
    %4028 = vmatprep.subr.mxu0 0.0
    %4029 = vmatpush1.msra.mxu0 0.0
    %4030 = vmatprep.subr.mxu0 0.0
    %4031 = vmatpush1.msra.mxu0 0.0
    %4032 = vmatprep.subr.mxu0 0.0
    %4033 = vmatpush1.msra.mxu0 0.0
    %4034 = vmatprep.subr.mxu0 0.0
    %4035 = vmatpush1.msra.mxu0 0.0
    %4036 = vmatprep.subr.mxu0 0.0
    %4037 = vmatpush1.msra.mxu0 0.0
    %4038 = vmatprep.subr.mxu0 0.0
    %4039 = vmatpush1.msra.mxu0 0.0
    %4040 = vmatprep.subr.mxu0 0.0
    %4041 = vmatpush1.msra.mxu0 0.0
    %4042 = vmatprep.subr.mxu0 0.0
    %4043 = vmatpush1.msra.mxu0 0.0
    %4044 = vmatprep.subr.mxu0 0.0
    %4045 = vmatpush1.msra.mxu0 0.0
    %4046 = vmatprep.mubr.f32.mxu0 0.0
    %4047 = vmatmul.mubr.f32.gmra.mrb[0].mxu0 %v3978
    %v4048 = vpop.f32.mrb[0].mxu0
    %v4049 = vadd.f32 0.0, %v4048
    %v4050 = vpop.f32.mrb[0].mxu0
    %4051 = vmatprep.mubr.f32.mxu0 0.0
    %4052 = vmatmul.mubr.f32.gmra.mrb[0].mxu0 %v3980
    %v4053 = vpop.f32.mrb[0].mxu0
    %v4054 = vadd.f32 0.0, %v4053
    %v4055 = vpop.f32.mrb[0].mxu0
    %4056 = vdwg.mxu0
    %v4059 = vrot.slane %v4049, 1
    %v4060 = vrot.slane %v4049, 2
    %v4061 = vrot.slane %v4049, 3
    %v4062 = vrot.slane %v4049, 4
    %v4063 = vrot.slane %v4049, 5
    %v4064 = vrot.slane %v4049, 6
    %v4065 = vrot.slane %v4049, 7
    %v4066 = vrot.slane %v4054, 1
    %v4067 = vrot.slane %v4054, 2
    %v4068 = vrot.slane %v4054, 3
    %v4069 = vrot.slane %v4054, 4
    %v4070 = vrot.slane %v4054, 5
    %v4071 = vrot.slane %v4054, 6
    %v4072 = vrot.slane %v4054, 7
    %v4089 = vadd.f32 %v3930, %v4049
    %v4090 = vadd.f32 %v3931, %v4059
    %v4091 = vadd.f32 %v3932, %v4060
    %v4092 = vadd.f32 %v3933, %v4061
    %v4093 = vadd.f32 %v3934, %v4062
    %v4094 = vadd.f32 %v3935, %v4063
    %v4095 = vadd.f32 %v3936, %v4064
    %v4096 = vadd.f32 %v3937, %v4065
    %v4097 = vadd.f32 %v3938, %v4054
    %v4098 = vadd.f32 %v3939, %v4066
    %v4099 = vadd.f32 %v3940, %v4067
    %v4100 = vadd.f32 %v3941, %v4068
    %v4101 = vadd.f32 %v3942, %v4069
    %v4102 = vadd.f32 %v3943, %v4070
    %v4103 = vadd.f32 %v3944, %v4071
    %v4104 = vadd.f32 %v3945, %v4072
    %v4105 = vxor.u32 %v4089, 2147483648
    %v4106 = vxor.u32 %v4090, 2147483648
    %v4107 = vxor.u32 %v4091, 2147483648
    %v4108 = vxor.u32 %v4092, 2147483648
    %v4109 = vxor.u32 %v4093, 2147483648
    %v4110 = vxor.u32 %v4094, 2147483648
    %v4111 = vxor.u32 %v4095, 2147483648
    %v4112 = vxor.u32 %v4096, 2147483648
    %v4113 = vxor.u32 %v4097, 2147483648
    %v4114 = vxor.u32 %v4098, 2147483648
    %v4115 = vxor.u32 %v4099, 2147483648
    %v4116 = vxor.u32 %v4100, 2147483648
    %v4117 = vxor.u32 %v4101, 2147483648
    %v4118 = vxor.u32 %v4102, 2147483648
    %v4119 = vxor.u32 %v4103, 2147483648
    %v4120 = vxor.u32 %v4104, 2147483648
    %v4121 = vmul.f32 %v4105, 1.442695
    %v4122 = vpow.pop %v4121
    %v4123 = vmul.f32 %v4106, 1.442695
    %v4124 = vpow.pop %v4123
    %v4125 = vmul.f32 %v4107, 1.442695
    %v4126 = vpow.pop %v4125
    %v4127 = vmul.f32 %v4108, 1.442695
    %v4128 = vpow.pop %v4127
    %v4129 = vmul.f32 %v4109, 1.442695
    %v4130 = vpow.pop %v4129
    %v4131 = vmul.f32 %v4110, 1.442695
    %v4132 = vpow.pop %v4131
    %v4133 = vmul.f32 %v4111, 1.442695
    %v4134 = vpow.pop %v4133
    %v4135 = vmul.f32 %v4112, 1.442695
    %v4136 = vpow.pop %v4135
    %v4137 = vmul.f32 %v4113, 1.442695
    %v4138 = vpow.pop %v4137
    %v4139 = vmul.f32 %v4114, 1.442695
    %v4140 = vpow.pop %v4139
    %v4141 = vmul.f32 %v4115, 1.442695
    %v4142 = vpow.pop %v4141
    %v4143 = vmul.f32 %v4116, 1.442695
    %v4144 = vpow.pop %v4143
    %v4145 = vmul.f32 %v4117, 1.442695
    %v4146 = vpow.pop %v4145
    %v4147 = vmul.f32 %v4118, 1.442695
    %v4148 = vpow.pop %v4147
    %v4149 = vmul.f32 %v4119, 1.442695
    %v4150 = vpow.pop %v4149
    %v4151 = vmul.f32 %v4120, 1.442695
    %v4152 = vpow.pop %v4151
    %v4153 = vadd.f32 %v4122, 1.0
    %v4154 = vadd.f32 %v4124, 1.0
    %v4155 = vadd.f32 %v4126, 1.0
    %v4156 = vadd.f32 %v4128, 1.0
    %v4157 = vadd.f32 %v4130, 1.0
    %v4158 = vadd.f32 %v4132, 1.0
    %v4159 = vadd.f32 %v4134, 1.0
    %v4160 = vadd.f32 %v4136, 1.0
    %v4161 = vadd.f32 %v4138, 1.0
    %v4162 = vadd.f32 %v4140, 1.0
    %v4163 = vadd.f32 %v4142, 1.0
    %v4164 = vadd.f32 %v4144, 1.0
    %v4165 = vadd.f32 %v4146, 1.0
    %v4166 = vadd.f32 %v4148, 1.0
    %v4167 = vadd.f32 %v4150, 1.0
    %v4168 = vadd.f32 %v4152, 1.0
    %v4169 = vrcp.pop %v4153
    %v4170 = vmul.f32 1.0, %v4169
    %v4171 = vrcp.pop %v4154
    %v4172 = vmul.f32 1.0, %v4171
    %v4173 = vrcp.pop %v4155
    %v4174 = vmul.f32 1.0, %v4173
    %v4175 = vrcp.pop %v4156
    %v4176 = vmul.f32 1.0, %v4175
    %v4177 = vrcp.pop %v4157
    %v4178 = vmul.f32 1.0, %v4177
    %v4179 = vrcp.pop %v4158
    %v4180 = vmul.f32 1.0, %v4179
    %v4181 = vrcp.pop %v4159
    %v4182 = vmul.f32 1.0, %v4181
    %v4183 = vrcp.pop %v4160
    %v4184 = vmul.f32 1.0, %v4183
    %v4185 = vrcp.pop %v4161
    %v4186 = vmul.f32 1.0, %v4185
    %v4187 = vrcp.pop %v4162
    %v4188 = vmul.f32 1.0, %v4187
    %v4189 = vrcp.pop %v4163
    %v4190 = vmul.f32 1.0, %v4189
    %v4191 = vrcp.pop %v4164
    %v4192 = vmul.f32 1.0, %v4191
    %v4193 = vrcp.pop %v4165
    %v4194 = vmul.f32 1.0, %v4193
    %v4195 = vrcp.pop %v4166
    %v4196 = vmul.f32 1.0, %v4195
    %v4197 = vrcp.pop %v4167
    %v4198 = vmul.f32 1.0, %v4197
    %v4199 = vrcp.pop %v4168
    %v4200 = vmul.f32 1.0, %v4199
    %v4201 = vtanh.pop %v4089
    %v4202 = vtanh.pop %v4090
    %v4203 = vtanh.pop %v4091
    %v4204 = vtanh.pop %v4092
    %v4205 = vtanh.pop %v4093
    %v4206 = vtanh.pop %v4094
    %v4207 = vtanh.pop %v4095
    %v4208 = vtanh.pop %v4096
    %v4209 = vtanh.pop %v4097
    %v4210 = vtanh.pop %v4098
    %v4211 = vtanh.pop %v4099
    %v4212 = vtanh.pop %v4100
    %v4213 = vtanh.pop %v4101
    %v4214 = vtanh.pop %v4102
    %v4215 = vtanh.pop %v4103
    %v4216 = vtanh.pop %v4104
    %v4217 = vmul.f32 %v4170, %v3738
    %v4218 = vmul.f32 %v4172, %v3739
    %v4219 = vmul.f32 %v4174, %v3740
    %v4220 = vmul.f32 %v4176, %v3741
    %v4221 = vmul.f32 %v4178, %v3742
    %v4222 = vmul.f32 %v4180, %v3743
    %v4223 = vmul.f32 %v4182, %v3744
    %v4224 = vmul.f32 %v4184, %v3745
    %v4225 = vmul.f32 %v4186, %v3746
    %v4226 = vmul.f32 %v4188, %v3747
    %v4227 = vmul.f32 %v4190, %v3748
    %v4228 = vmul.f32 %v4192, %v3749
    %v4229 = vmul.f32 %v4194, %v3750
    %v4230 = vmul.f32 %v4196, %v3751
    %v4231 = vmul.f32 %v4198, %v3752
    %v4232 = vmul.f32 %v4200, %v3753
    %4249 = vrot.lane.b32.xlu0 %v4201, 32
    %v4250 = vpop.permute.xlu0 %4249
    %4251 = vrot.lane.b32.xlu0 %v4202, 32
    %v4252 = vpop.permute.xlu0 %4251
    %4253 = vrot.lane.b32.xlu0 %v4203, 32
    %v4254 = vpop.permute.xlu0 %4253
    %4255 = vrot.lane.b32.xlu0 %v4204, 32
    %v4256 = vpop.permute.xlu0 %4255
    %4257 = vrot.lane.b32.xlu0 %v4205, 32
    %v4258 = vpop.permute.xlu0 %4257
    %4259 = vrot.lane.b32.xlu0 %v4206, 32
    %v4260 = vpop.permute.xlu0 %4259
    %4261 = vrot.lane.b32.xlu0 %v4207, 32
    %v4262 = vpop.permute.xlu0 %4261
    %4263 = vrot.lane.b32.xlu0 %v4208, 32
    %v4264 = vpop.permute.xlu0 %4263
    %4265 = vrot.lane.b32.xlu0 %v4209, 32
    %v4266 = vpop.permute.xlu0 %4265
    %4267 = vrot.lane.b32.xlu0 %v4210, 32
    %v4268 = vpop.permute.xlu0 %4267
    %4269 = vrot.lane.b32.xlu0 %v4211, 32
    %v4270 = vpop.permute.xlu0 %4269
    %4271 = vrot.lane.b32.xlu0 %v4212, 32
    %v4272 = vpop.permute.xlu0 %4271
    %4273 = vrot.lane.b32.xlu0 %v4213, 32
    %v4274 = vpop.permute.xlu0 %4273
    %4275 = vrot.lane.b32.xlu0 %v4214, 32
    %v4276 = vpop.permute.xlu0 %4275
    %4277 = vrot.lane.b32.xlu0 %v4215, 32
    %v4278 = vpop.permute.xlu0 %4277
    %4279 = vrot.lane.b32.xlu0 %v4216, 32
    %v4280 = vpop.permute.xlu0 %4279
    %v4297 = vmul.f32 %v4170, %v4250
    %v4298 = vmul.f32 %v4172, %v4252
    %v4299 = vmul.f32 %v4174, %v4254
    %v4300 = vmul.f32 %v4176, %v4256
    %v4301 = vmul.f32 %v4178, %v4258
    %v4302 = vmul.f32 %v4180, %v4260
    %v4303 = vmul.f32 %v4182, %v4262
    %v4304 = vmul.f32 %v4184, %v4264
    %v4305 = vmul.f32 %v4186, %v4266
    %v4306 = vmul.f32 %v4188, %v4268
    %v4307 = vmul.f32 %v4190, %v4270
    %v4308 = vmul.f32 %v4192, %v4272
    %v4309 = vmul.f32 %v4194, %v4274
    %v4310 = vmul.f32 %v4196, %v4276
    %v4311 = vmul.f32 %v4198, %v4278
    %v4312 = vmul.f32 %v4200, %v4280
    %4329 = vrot.lane.b32.xlu0 %v4297, 32
    %v4330 = vpop.permute.xlu0 %4329
    %4331 = vrot.lane.b32.xlu0 %v4298, 32
    %v4332 = vpop.permute.xlu0 %4331
    %4333 = vrot.lane.b32.xlu0 %v4299, 32
    %v4334 = vpop.permute.xlu0 %4333
    %4335 = vrot.lane.b32.xlu0 %v4300, 32
    %v4336 = vpop.permute.xlu0 %4335
    %4337 = vrot.lane.b32.xlu0 %v4301, 32
    %v4338 = vpop.permute.xlu0 %4337
    %4339 = vrot.lane.b32.xlu0 %v4302, 32
    %v4340 = vpop.permute.xlu0 %4339
    %4341 = vrot.lane.b32.xlu0 %v4303, 32
    %v4342 = vpop.permute.xlu0 %4341
    %4343 = vrot.lane.b32.xlu0 %v4304, 32
    %v4344 = vpop.permute.xlu0 %4343
    %4345 = vrot.lane.b32.xlu0 %v4305, 32
    %v4346 = vpop.permute.xlu0 %4345
    %4347 = vrot.lane.b32.xlu0 %v4306, 32
    %v4348 = vpop.permute.xlu0 %4347
    %4349 = vrot.lane.b32.xlu0 %v4307, 32
    %v4350 = vpop.permute.xlu0 %4349
    %4351 = vrot.lane.b32.xlu0 %v4308, 32
    %v4352 = vpop.permute.xlu0 %4351
    %4353 = vrot.lane.b32.xlu0 %v4309, 32
    %v4354 = vpop.permute.xlu0 %4353
    %4355 = vrot.lane.b32.xlu0 %v4310, 32
    %v4356 = vpop.permute.xlu0 %4355
    %4357 = vrot.lane.b32.xlu0 %v4311, 32
    %v4358 = vpop.permute.xlu0 %4357
    %4359 = vrot.lane.b32.xlu0 %v4312, 32
    %v4360 = vpop.permute.xlu0 %4359
    %v4377 = vadd.f32 %v4217, %v4330
    %v4378 = vadd.f32 %v4218, %v4332
    %v4379 = vadd.f32 %v4219, %v4334
    %v4380 = vadd.f32 %v4220, %v4336
    %v4381 = vadd.f32 %v4221, %v4338
    %v4382 = vadd.f32 %v4222, %v4340
    %v4383 = vadd.f32 %v4223, %v4342
    %v4384 = vadd.f32 %v4224, %v4344
    %v4385 = vadd.f32 %v4225, %v4346
    %v4386 = vadd.f32 %v4226, %v4348
    %v4387 = vadd.f32 %v4227, %v4350
    %v4388 = vadd.f32 %v4228, %v4352
    %v4389 = vadd.f32 %v4229, %v4354
    %v4390 = vadd.f32 %v4230, %v4356
    %v4391 = vadd.f32 %v4231, %v4358
    %v4392 = vadd.f32 %v4232, %v4360
    %v4393 = vtanh.pop %v4377
    %v4394 = vtanh.pop %v4378
    %v4395 = vtanh.pop %v4379
    %v4396 = vtanh.pop %v4380
    %v4397 = vtanh.pop %v4381
    %v4398 = vtanh.pop %v4382
    %v4399 = vtanh.pop %v4383
    %v4400 = vtanh.pop %v4384
    %v4401 = vtanh.pop %v4385
    %v4402 = vtanh.pop %v4386
    %v4403 = vtanh.pop %v4387
    %v4404 = vtanh.pop %v4388
    %v4405 = vtanh.pop %v4389
    %v4406 = vtanh.pop %v4390
    %v4407 = vtanh.pop %v4391
    %v4408 = vtanh.pop %v4392
    %4425 = vrot.lane.b32.xlu0 %v4393, 32
    %v4426 = vpop.permute.xlu0 %4425
    %4427 = vrot.lane.b32.xlu0 %v4394, 32
    %v4428 = vpop.permute.xlu0 %4427
    %4429 = vrot.lane.b32.xlu0 %v4395, 32
    %v4430 = vpop.permute.xlu0 %4429
    %4431 = vrot.lane.b32.xlu0 %v4396, 32
    %v4432 = vpop.permute.xlu0 %4431
    %4433 = vrot.lane.b32.xlu0 %v4397, 32
    %v4434 = vpop.permute.xlu0 %4433
    %4435 = vrot.lane.b32.xlu0 %v4398, 32
    %v4436 = vpop.permute.xlu0 %4435
    %4437 = vrot.lane.b32.xlu0 %v4399, 32
    %v4438 = vpop.permute.xlu0 %4437
    %4439 = vrot.lane.b32.xlu0 %v4400, 32
    %v4440 = vpop.permute.xlu0 %4439
    %4441 = vrot.lane.b32.xlu0 %v4401, 32
    %v4442 = vpop.permute.xlu0 %4441
    %4443 = vrot.lane.b32.xlu0 %v4402, 32
    %v4444 = vpop.permute.xlu0 %4443
    %4445 = vrot.lane.b32.xlu0 %v4403, 32
    %v4446 = vpop.permute.xlu0 %4445
    %4447 = vrot.lane.b32.xlu0 %v4404, 32
    %v4448 = vpop.permute.xlu0 %4447
    %4449 = vrot.lane.b32.xlu0 %v4405, 32
    %v4450 = vpop.permute.xlu0 %4449
    %4451 = vrot.lane.b32.xlu0 %v4406, 32
    %v4452 = vpop.permute.xlu0 %4451
    %4453 = vrot.lane.b32.xlu0 %v4407, 32
    %v4454 = vpop.permute.xlu0 %4453
    %4455 = vrot.lane.b32.xlu0 %v4408, 32
    %v4456 = vpop.permute.xlu0 %4455
    %v4473 = vmul.f32 %v4170, %v4426
    %v4474 = vmul.f32 %v4172, %v4428
    %v4475 = vmul.f32 %v4174, %v4430
    %v4476 = vmul.f32 %v4176, %v4432
    %v4477 = vmul.f32 %v4178, %v4434
    %v4478 = vmul.f32 %v4180, %v4436
    %v4479 = vmul.f32 %v4182, %v4438
    %v4480 = vmul.f32 %v4184, %v4440
    %v4481 = vmul.f32 %v4186, %v4442
    %v4482 = vmul.f32 %v4188, %v4444
    %v4483 = vmul.f32 %v4190, %v4446
    %v4484 = vmul.f32 %v4192, %v4448
    %v4485 = vmul.f32 %v4194, %v4450
    %v4486 = vmul.f32 %v4196, %v4452
    %v4487 = vmul.f32 %v4198, %v4454
    %v4488 = vmul.f32 %v4200, %v4456
    %4505 = vrot.lane.b32.xlu0 %v4473, 64
    %v4506 = vpop.permute.xlu0 %4505
    %4507 = vrot.lane.b32.xlu0 %v4474, 64
    %v4508 = vpop.permute.xlu0 %4507
    %4509 = vrot.lane.b32.xlu0 %v4475, 64
    %v4510 = vpop.permute.xlu0 %4509
    %4511 = vrot.lane.b32.xlu0 %v4476, 64
    %v4512 = vpop.permute.xlu0 %4511
    %4513 = vrot.lane.b32.xlu0 %v4477, 64
    %v4514 = vpop.permute.xlu0 %4513
    %4515 = vrot.lane.b32.xlu0 %v4478, 64
    %v4516 = vpop.permute.xlu0 %4515
    %4517 = vrot.lane.b32.xlu0 %v4479, 64
    %v4518 = vpop.permute.xlu0 %4517
    %4519 = vrot.lane.b32.xlu0 %v4480, 64
    %v4520 = vpop.permute.xlu0 %4519
    %4521 = vrot.lane.b32.xlu0 %v4481, 64
    %v4522 = vpop.permute.xlu0 %4521
    %4523 = vrot.lane.b32.xlu0 %v4482, 64
    %v4524 = vpop.permute.xlu0 %4523
    %4525 = vrot.lane.b32.xlu0 %v4483, 64
    %v4526 = vpop.permute.xlu0 %4525
    %4527 = vrot.lane.b32.xlu0 %v4484, 64
    %v4528 = vpop.permute.xlu0 %4527
    %4529 = vrot.lane.b32.xlu0 %v4485, 64
    %v4530 = vpop.permute.xlu0 %4529
    %4531 = vrot.lane.b32.xlu0 %v4486, 64
    %v4532 = vpop.permute.xlu0 %4531
    %4533 = vrot.lane.b32.xlu0 %v4487, 64
    %v4534 = vpop.permute.xlu0 %4533
    %4535 = vrot.lane.b32.xlu0 %v4488, 64
    %v4536 = vpop.permute.xlu0 %4535
    %4553 = vst.msk [vmem:[#allocation3 + $0x5] sm:$0x1] %vm1350, %v4506
    %4554 = vst.msk [vmem:[#allocation3 + $0xd] sm:$0x1] %vm1350, %v4508
    %4555 = vst.msk [vmem:[#allocation3 + $0x15] sm:$0x1] %vm1350, %v4510
    %4556 = vst.msk [vmem:[#allocation3 + $0x1d] sm:$0x1] %vm1350, %v4512
    %4557 = vst.msk [vmem:[#allocation3 + $0x25] sm:$0x1] %vm1350, %v4514
    %4558 = vst.msk [vmem:[#allocation3 + $0x2d] sm:$0x1] %vm1350, %v4516
    %4559 = vst.msk [vmem:[#allocation3 + $0x35] sm:$0x1] %vm1350, %v4518
    %4560 = vst.msk [vmem:[#allocation3 + $0x3d] sm:$0x1] %vm1350, %v4520
    %4561 = vst.msk [vmem:[#allocation3 + $0x45] sm:$0x1] %vm1350, %v4522
    %4562 = vst.msk [vmem:[#allocation3 + $0x4d] sm:$0x1] %vm1350, %v4524
    %4563 = vst.msk [vmem:[#allocation3 + $0x55] sm:$0x1] %vm1350, %v4526
    %4564 = vst.msk [vmem:[#allocation3 + $0x5d] sm:$0x1] %vm1350, %v4528
    %4565 = vst.msk [vmem:[#allocation3 + $0x65] sm:$0x1] %vm1350, %v4530
    %4566 = vst.msk [vmem:[#allocation3 + $0x6d] sm:$0x1] %vm1350, %v4532
    %4567 = vst.msk [vmem:[#allocation3 + $0x75] sm:$0x1] %vm1350, %v4534
    %4568 = vst.msk [vmem:[#allocation3 + $0x7d] sm:$0x1] %vm1350, %v4536
    %v4569 = vld [vmem:[#allocation2 + $0x6] sm:$0x1]
    %v4570 = vld [vmem:[#allocation2 + $0xe] sm:$0x1]
    %v4571 = vld [vmem:[#allocation2 + $0x16] sm:$0x1]
    %v4572 = vld [vmem:[#allocation2 + $0x1e] sm:$0x1]
    %v4573 = vld [vmem:[#allocation2 + $0x26] sm:$0x1]
    %v4574 = vld [vmem:[#allocation2 + $0x2e] sm:$0x1]
    %v4575 = vld [vmem:[#allocation2 + $0x36] sm:$0x1]
    %v4576 = vld [vmem:[#allocation2 + $0x3e] sm:$0x1]
    %v4577 = vld [vmem:[#allocation2 + $0x46] sm:$0x1]
    %v4578 = vld [vmem:[#allocation2 + $0x4e] sm:$0x1]
    %v4579 = vld [vmem:[#allocation2 + $0x56] sm:$0x1]
    %v4580 = vld [vmem:[#allocation2 + $0x5e] sm:$0x1]
    %v4581 = vld [vmem:[#allocation2 + $0x66] sm:$0x1]
    %v4582 = vld [vmem:[#allocation2 + $0x6e] sm:$0x1]
    %v4583 = vld [vmem:[#allocation2 + $0x76] sm:$0x1]
    %v4584 = vld [vmem:[#allocation2 + $0x7e] sm:$0x1]
    %v4585 = vrot.slane %v4474, 7
    %v4586 = vsel %vm1384, %v4585, %v4473
    %v4587 = vrot.slane %v4475, 6
    %v4588 = vsel %vm1387, %v4587, %v4586
    %v4589 = vrot.slane %v4476, 5
    %v4590 = vsel %vm1390, %v4589, %v4588
    %v4591 = vrot.slane %v4477, 4
    %v4592 = vsel %vm1393, %v4591, %v4590
    %v4593 = vrot.slane %v4478, 3
    %v4594 = vsel %vm1396, %v4593, %v4592
    %v4595 = vrot.slane %v4479, 2
    %v4596 = vsel %vm1399, %v4595, %v4594
    %v4597 = vrot.slane %v4480, 1
    %v4598 = vsel %vm1402, %v4597, %v4596
    %v4599 = vrot.slane %v4482, 7
    %v4600 = vsel %vm1384, %v4599, %v4481
    %v4601 = vrot.slane %v4483, 6
    %v4602 = vsel %vm1387, %v4601, %v4600
    %v4603 = vrot.slane %v4484, 5
    %v4604 = vsel %vm1390, %v4603, %v4602
    %v4605 = vrot.slane %v4485, 4
    %v4606 = vsel %vm1393, %v4605, %v4604
    %v4607 = vrot.slane %v4486, 3
    %v4608 = vsel %vm1396, %v4607, %v4606
    %v4609 = vrot.slane %v4487, 2
    %v4610 = vsel %vm1399, %v4609, %v4608
    %v4611 = vrot.slane %v4488, 1
    %v4612 = vsel %vm1402, %v4611, %v4610
    %4613 = vrot.lane.b32.xlu0 %v4598, 64
    %v4614 = vpop.permute.xlu0 %4613
    %4615 = vrot.lane.b32.xlu0 %v4612, 64
    %v4616 = vpop.permute.xlu0 %4615
    %v4617 = vsel %vm775, %v4614, 0
    %v4619 = vsel %vm775, %v4616, 0
    %4621 = vmatprep.subr.mxu0 0.0
    %4622 = vmatpush1.msra.mxu0 %v755
    %4623 = vmatprep.subr.mxu0 0.0
    %4624 = vmatpush1.msra.mxu0 %v756
    %4625 = vmatprep.subr.mxu0 0.0
    %4626 = vmatpush1.msra.mxu0 %v757
    %4627 = vmatprep.subr.mxu0 0.0
    %4628 = vmatpush1.msra.mxu0 %v758
    %4629 = vmatprep.subr.mxu0 0.0
    %4630 = vmatpush1.msra.mxu0 0.0
    %4631 = vmatprep.subr.mxu0 0.0
    %4632 = vmatpush1.msra.mxu0 0.0
    %4633 = vmatprep.subr.mxu0 0.0
    %4634 = vmatpush1.msra.mxu0 0.0
    %4635 = vmatprep.subr.mxu0 0.0
    %4636 = vmatpush1.msra.mxu0 0.0
    %4637 = vmatprep.subr.mxu0 0.0
    %4638 = vmatpush1.msra.mxu0 0.0
    %4639 = vmatprep.subr.mxu0 0.0
    %4640 = vmatpush1.msra.mxu0 0.0
    %4641 = vmatprep.subr.mxu0 0.0
    %4642 = vmatpush1.msra.mxu0 0.0
    %4643 = vmatprep.subr.mxu0 0.0
    %4644 = vmatpush1.msra.mxu0 0.0
    %4645 = vmatprep.subr.mxu0 0.0
    %4646 = vmatpush1.msra.mxu0 0.0
    %4647 = vmatprep.subr.mxu0 0.0
    %4648 = vmatpush1.msra.mxu0 0.0
    %4649 = vmatprep.subr.mxu0 0.0
    %4650 = vmatpush1.msra.mxu0 0.0
    %4651 = vmatprep.subr.mxu0 0.0
    %4652 = vmatpush1.msra.mxu0 0.0
    %4653 = vmatprep.subr.mxu0 0.0
    %4654 = vmatpush1.msra.mxu0 0.0
    %4655 = vmatprep.subr.mxu0 0.0
    %4656 = vmatpush1.msra.mxu0 0.0
    %4657 = vmatprep.subr.mxu0 0.0
    %4658 = vmatpush1.msra.mxu0 0.0
    %4659 = vmatprep.subr.mxu0 0.0
    %4660 = vmatpush1.msra.mxu0 0.0
    %4661 = vmatprep.subr.mxu0 0.0
    %4662 = vmatpush1.msra.mxu0 0.0
    %4663 = vmatprep.subr.mxu0 0.0
    %4664 = vmatpush1.msra.mxu0 0.0
    %4665 = vmatprep.subr.mxu0 0.0
    %4666 = vmatpush1.msra.mxu0 0.0
    %4667 = vmatprep.subr.mxu0 0.0
    %4668 = vmatpush1.msra.mxu0 0.0
    %4669 = vmatprep.subr.mxu0 0.0
    %4670 = vmatpush1.msra.mxu0 0.0
    %4671 = vmatprep.subr.mxu0 0.0
    %4672 = vmatpush1.msra.mxu0 0.0
    %4673 = vmatprep.subr.mxu0 0.0
    %4674 = vmatpush1.msra.mxu0 0.0
    %4675 = vmatprep.subr.mxu0 0.0
    %4676 = vmatpush1.msra.mxu0 0.0
    %4677 = vmatprep.subr.mxu0 0.0
    %4678 = vmatpush1.msra.mxu0 0.0
    %4679 = vmatprep.subr.mxu0 0.0
    %4680 = vmatpush1.msra.mxu0 0.0
    %4681 = vmatprep.subr.mxu0 0.0
    %4682 = vmatpush1.msra.mxu0 0.0
    %4683 = vmatprep.subr.mxu0 0.0
    %4684 = vmatpush1.msra.mxu0 0.0
    %4685 = vmatprep.mubr.f32.mxu0 0.0
    %4686 = vmatmul.mubr.f32.gmra.mrb[0].mxu0 %v4617
    %v4687 = vpop.f32.mrb[0].mxu0
    %v4688 = vadd.f32 0.0, %v4687
    %v4689 = vpop.f32.mrb[0].mxu0
    %4690 = vmatprep.mubr.f32.mxu0 0.0
    %4691 = vmatmul.mubr.f32.gmra.mrb[0].mxu0 %v4619
    %v4692 = vpop.f32.mrb[0].mxu0
    %v4693 = vadd.f32 0.0, %v4692
    %v4694 = vpop.f32.mrb[0].mxu0
    %4695 = vdwg.mxu0
    %v4698 = vrot.slane %v4688, 1
    %v4699 = vrot.slane %v4688, 2
    %v4700 = vrot.slane %v4688, 3
    %v4701 = vrot.slane %v4688, 4
    %v4702 = vrot.slane %v4688, 5
    %v4703 = vrot.slane %v4688, 6
    %v4704 = vrot.slane %v4688, 7
    %v4705 = vrot.slane %v4693, 1
    %v4706 = vrot.slane %v4693, 2
    %v4707 = vrot.slane %v4693, 3
    %v4708 = vrot.slane %v4693, 4
    %v4709 = vrot.slane %v4693, 5
    %v4710 = vrot.slane %v4693, 6
    %v4711 = vrot.slane %v4693, 7
    %v4728 = vadd.f32 %v4569, %v4688
    %v4729 = vadd.f32 %v4570, %v4698
    %v4730 = vadd.f32 %v4571, %v4699
    %v4731 = vadd.f32 %v4572, %v4700
    %v4732 = vadd.f32 %v4573, %v4701
    %v4733 = vadd.f32 %v4574, %v4702
    %v4734 = vadd.f32 %v4575, %v4703
    %v4735 = vadd.f32 %v4576, %v4704
    %v4736 = vadd.f32 %v4577, %v4693
    %v4737 = vadd.f32 %v4578, %v4705
    %v4738 = vadd.f32 %v4579, %v4706
    %v4739 = vadd.f32 %v4580, %v4707
    %v4740 = vadd.f32 %v4581, %v4708
    %v4741 = vadd.f32 %v4582, %v4709
    %v4742 = vadd.f32 %v4583, %v4710
    %v4743 = vadd.f32 %v4584, %v4711
    %v4744 = vxor.u32 %v4728, 2147483648
    %v4745 = vxor.u32 %v4729, 2147483648
    %v4746 = vxor.u32 %v4730, 2147483648
    %v4747 = vxor.u32 %v4731, 2147483648
    %v4748 = vxor.u32 %v4732, 2147483648
    %v4749 = vxor.u32 %v4733, 2147483648
    %v4750 = vxor.u32 %v4734, 2147483648
    %v4751 = vxor.u32 %v4735, 2147483648
    %v4752 = vxor.u32 %v4736, 2147483648
    %v4753 = vxor.u32 %v4737, 2147483648
    %v4754 = vxor.u32 %v4738, 2147483648
    %v4755 = vxor.u32 %v4739, 2147483648
    %v4756 = vxor.u32 %v4740, 2147483648
    %v4757 = vxor.u32 %v4741, 2147483648
    %v4758 = vxor.u32 %v4742, 2147483648
    %v4759 = vxor.u32 %v4743, 2147483648
    %v4760 = vmul.f32 %v4744, 1.442695
    %v4761 = vpow.pop %v4760
    %v4762 = vmul.f32 %v4745, 1.442695
    %v4763 = vpow.pop %v4762
    %v4764 = vmul.f32 %v4746, 1.442695
    %v4765 = vpow.pop %v4764
    %v4766 = vmul.f32 %v4747, 1.442695
    %v4767 = vpow.pop %v4766
    %v4768 = vmul.f32 %v4748, 1.442695
    %v4769 = vpow.pop %v4768
    %v4770 = vmul.f32 %v4749, 1.442695
    %v4771 = vpow.pop %v4770
    %v4772 = vmul.f32 %v4750, 1.442695
    %v4773 = vpow.pop %v4772
    %v4774 = vmul.f32 %v4751, 1.442695
    %v4775 = vpow.pop %v4774
    %v4776 = vmul.f32 %v4752, 1.442695
    %v4777 = vpow.pop %v4776
    %v4778 = vmul.f32 %v4753, 1.442695
    %v4779 = vpow.pop %v4778
    %v4780 = vmul.f32 %v4754, 1.442695
    %v4781 = vpow.pop %v4780
    %v4782 = vmul.f32 %v4755, 1.442695
    %v4783 = vpow.pop %v4782
    %v4784 = vmul.f32 %v4756, 1.442695
    %v4785 = vpow.pop %v4784
    %v4786 = vmul.f32 %v4757, 1.442695
    %v4787 = vpow.pop %v4786
    %v4788 = vmul.f32 %v4758, 1.442695
    %v4789 = vpow.pop %v4788
    %v4790 = vmul.f32 %v4759, 1.442695
    %v4791 = vpow.pop %v4790
    %v4792 = vadd.f32 %v4761, 1.0
    %v4793 = vadd.f32 %v4763, 1.0
    %v4794 = vadd.f32 %v4765, 1.0
    %v4795 = vadd.f32 %v4767, 1.0
    %v4796 = vadd.f32 %v4769, 1.0
    %v4797 = vadd.f32 %v4771, 1.0
    %v4798 = vadd.f32 %v4773, 1.0
    %v4799 = vadd.f32 %v4775, 1.0
    %v4800 = vadd.f32 %v4777, 1.0
    %v4801 = vadd.f32 %v4779, 1.0
    %v4802 = vadd.f32 %v4781, 1.0
    %v4803 = vadd.f32 %v4783, 1.0
    %v4804 = vadd.f32 %v4785, 1.0
    %v4805 = vadd.f32 %v4787, 1.0
    %v4806 = vadd.f32 %v4789, 1.0
    %v4807 = vadd.f32 %v4791, 1.0
    %v4808 = vrcp.pop %v4792
    %v4809 = vmul.f32 1.0, %v4808
    %v4810 = vrcp.pop %v4793
    %v4811 = vmul.f32 1.0, %v4810
    %v4812 = vrcp.pop %v4794
    %v4813 = vmul.f32 1.0, %v4812
    %v4814 = vrcp.pop %v4795
    %v4815 = vmul.f32 1.0, %v4814
    %v4816 = vrcp.pop %v4796
    %v4817 = vmul.f32 1.0, %v4816
    %v4818 = vrcp.pop %v4797
    %v4819 = vmul.f32 1.0, %v4818
    %v4820 = vrcp.pop %v4798
    %v4821 = vmul.f32 1.0, %v4820
    %v4822 = vrcp.pop %v4799
    %v4823 = vmul.f32 1.0, %v4822
    %v4824 = vrcp.pop %v4800
    %v4825 = vmul.f32 1.0, %v4824
    %v4826 = vrcp.pop %v4801
    %v4827 = vmul.f32 1.0, %v4826
    %v4828 = vrcp.pop %v4802
    %v4829 = vmul.f32 1.0, %v4828
    %v4830 = vrcp.pop %v4803
    %v4831 = vmul.f32 1.0, %v4830
    %v4832 = vrcp.pop %v4804
    %v4833 = vmul.f32 1.0, %v4832
    %v4834 = vrcp.pop %v4805
    %v4835 = vmul.f32 1.0, %v4834
    %v4836 = vrcp.pop %v4806
    %v4837 = vmul.f32 1.0, %v4836
    %v4838 = vrcp.pop %v4807
    %v4839 = vmul.f32 1.0, %v4838
    %v4840 = vtanh.pop %v4728
    %v4841 = vtanh.pop %v4729
    %v4842 = vtanh.pop %v4730
    %v4843 = vtanh.pop %v4731
    %v4844 = vtanh.pop %v4732
    %v4845 = vtanh.pop %v4733
    %v4846 = vtanh.pop %v4734
    %v4847 = vtanh.pop %v4735
    %v4848 = vtanh.pop %v4736
    %v4849 = vtanh.pop %v4737
    %v4850 = vtanh.pop %v4738
    %v4851 = vtanh.pop %v4739
    %v4852 = vtanh.pop %v4740
    %v4853 = vtanh.pop %v4741
    %v4854 = vtanh.pop %v4742
    %v4855 = vtanh.pop %v4743
    %v4856 = vmul.f32 %v4809, %v4377
    %v4857 = vmul.f32 %v4811, %v4378
    %v4858 = vmul.f32 %v4813, %v4379
    %v4859 = vmul.f32 %v4815, %v4380
    %v4860 = vmul.f32 %v4817, %v4381
    %v4861 = vmul.f32 %v4819, %v4382
    %v4862 = vmul.f32 %v4821, %v4383
    %v4863 = vmul.f32 %v4823, %v4384
    %v4864 = vmul.f32 %v4825, %v4385
    %v4865 = vmul.f32 %v4827, %v4386
    %v4866 = vmul.f32 %v4829, %v4387
    %v4867 = vmul.f32 %v4831, %v4388
    %v4868 = vmul.f32 %v4833, %v4389
    %v4869 = vmul.f32 %v4835, %v4390
    %v4870 = vmul.f32 %v4837, %v4391
    %v4871 = vmul.f32 %v4839, %v4392
    %4888 = vrot.lane.b32.xlu0 %v4840, 32
    %v4889 = vpop.permute.xlu0 %4888
    %4890 = vrot.lane.b32.xlu0 %v4841, 32
    %v4891 = vpop.permute.xlu0 %4890
    %4892 = vrot.lane.b32.xlu0 %v4842, 32
    %v4893 = vpop.permute.xlu0 %4892
    %4894 = vrot.lane.b32.xlu0 %v4843, 32
    %v4895 = vpop.permute.xlu0 %4894
    %4896 = vrot.lane.b32.xlu0 %v4844, 32
    %v4897 = vpop.permute.xlu0 %4896
    %4898 = vrot.lane.b32.xlu0 %v4845, 32
    %v4899 = vpop.permute.xlu0 %4898
    %4900 = vrot.lane.b32.xlu0 %v4846, 32
    %v4901 = vpop.permute.xlu0 %4900
    %4902 = vrot.lane.b32.xlu0 %v4847, 32
    %v4903 = vpop.permute.xlu0 %4902
    %4904 = vrot.lane.b32.xlu0 %v4848, 32
    %v4905 = vpop.permute.xlu0 %4904
    %4906 = vrot.lane.b32.xlu0 %v4849, 32
    %v4907 = vpop.permute.xlu0 %4906
    %4908 = vrot.lane.b32.xlu0 %v4850, 32
    %v4909 = vpop.permute.xlu0 %4908
    %4910 = vrot.lane.b32.xlu0 %v4851, 32
    %v4911 = vpop.permute.xlu0 %4910
    %4912 = vrot.lane.b32.xlu0 %v4852, 32
    %v4913 = vpop.permute.xlu0 %4912
    %4914 = vrot.lane.b32.xlu0 %v4853, 32
    %v4915 = vpop.permute.xlu0 %4914
    %4916 = vrot.lane.b32.xlu0 %v4854, 32
    %v4917 = vpop.permute.xlu0 %4916
    %4918 = vrot.lane.b32.xlu0 %v4855, 32
    %v4919 = vpop.permute.xlu0 %4918
    %v4936 = vmul.f32 %v4809, %v4889
    %v4937 = vmul.f32 %v4811, %v4891
    %v4938 = vmul.f32 %v4813, %v4893
    %v4939 = vmul.f32 %v4815, %v4895
    %v4940 = vmul.f32 %v4817, %v4897
    %v4941 = vmul.f32 %v4819, %v4899
    %v4942 = vmul.f32 %v4821, %v4901
    %v4943 = vmul.f32 %v4823, %v4903
    %v4944 = vmul.f32 %v4825, %v4905
    %v4945 = vmul.f32 %v4827, %v4907
    %v4946 = vmul.f32 %v4829, %v4909
    %v4947 = vmul.f32 %v4831, %v4911
    %v4948 = vmul.f32 %v4833, %v4913
    %v4949 = vmul.f32 %v4835, %v4915
    %v4950 = vmul.f32 %v4837, %v4917
    %v4951 = vmul.f32 %v4839, %v4919
    %4968 = vrot.lane.b32.xlu0 %v4936, 32
    %v4969 = vpop.permute.xlu0 %4968
    %4970 = vrot.lane.b32.xlu0 %v4937, 32
    %v4971 = vpop.permute.xlu0 %4970
    %4972 = vrot.lane.b32.xlu0 %v4938, 32
    %v4973 = vpop.permute.xlu0 %4972
    %4974 = vrot.lane.b32.xlu0 %v4939, 32
    %v4975 = vpop.permute.xlu0 %4974
    %4976 = vrot.lane.b32.xlu0 %v4940, 32
    %v4977 = vpop.permute.xlu0 %4976
    %4978 = vrot.lane.b32.xlu0 %v4941, 32
    %v4979 = vpop.permute.xlu0 %4978
    %4980 = vrot.lane.b32.xlu0 %v4942, 32
    %v4981 = vpop.permute.xlu0 %4980
    %4982 = vrot.lane.b32.xlu0 %v4943, 32
    %v4983 = vpop.permute.xlu0 %4982
    %4984 = vrot.lane.b32.xlu0 %v4944, 32
    %v4985 = vpop.permute.xlu0 %4984
    %4986 = vrot.lane.b32.xlu0 %v4945, 32
    %v4987 = vpop.permute.xlu0 %4986
    %4988 = vrot.lane.b32.xlu0 %v4946, 32
    %v4989 = vpop.permute.xlu0 %4988
    %4990 = vrot.lane.b32.xlu0 %v4947, 32
    %v4991 = vpop.permute.xlu0 %4990
    %4992 = vrot.lane.b32.xlu0 %v4948, 32
    %v4993 = vpop.permute.xlu0 %4992
    %4994 = vrot.lane.b32.xlu0 %v4949, 32
    %v4995 = vpop.permute.xlu0 %4994
    %4996 = vrot.lane.b32.xlu0 %v4950, 32
    %v4997 = vpop.permute.xlu0 %4996
    %4998 = vrot.lane.b32.xlu0 %v4951, 32
    %v4999 = vpop.permute.xlu0 %4998
    %v5016 = vadd.f32 %v4856, %v4969
    %v5017 = vadd.f32 %v4857, %v4971
    %v5018 = vadd.f32 %v4858, %v4973
    %v5019 = vadd.f32 %v4859, %v4975
    %v5020 = vadd.f32 %v4860, %v4977
    %v5021 = vadd.f32 %v4861, %v4979
    %v5022 = vadd.f32 %v4862, %v4981
    %v5023 = vadd.f32 %v4863, %v4983
    %v5024 = vadd.f32 %v4864, %v4985
    %v5025 = vadd.f32 %v4865, %v4987
    %v5026 = vadd.f32 %v4866, %v4989
    %v5027 = vadd.f32 %v4867, %v4991
    %v5028 = vadd.f32 %v4868, %v4993
    %v5029 = vadd.f32 %v4869, %v4995
    %v5030 = vadd.f32 %v4870, %v4997
    %v5031 = vadd.f32 %v4871, %v4999
    %v5032 = vtanh.pop %v5016
    %v5033 = vtanh.pop %v5017
    %v5034 = vtanh.pop %v5018
    %v5035 = vtanh.pop %v5019
    %v5036 = vtanh.pop %v5020
    %v5037 = vtanh.pop %v5021
    %v5038 = vtanh.pop %v5022
    %v5039 = vtanh.pop %v5023
    %v5040 = vtanh.pop %v5024
    %v5041 = vtanh.pop %v5025
    %v5042 = vtanh.pop %v5026
    %v5043 = vtanh.pop %v5027
    %v5044 = vtanh.pop %v5028
    %v5045 = vtanh.pop %v5029
    %v5046 = vtanh.pop %v5030
    %v5047 = vtanh.pop %v5031
    %5064 = vrot.lane.b32.xlu0 %v5032, 32
    %v5065 = vpop.permute.xlu0 %5064
    %5066 = vrot.lane.b32.xlu0 %v5033, 32
    %v5067 = vpop.permute.xlu0 %5066
    %5068 = vrot.lane.b32.xlu0 %v5034, 32
    %v5069 = vpop.permute.xlu0 %5068
    %5070 = vrot.lane.b32.xlu0 %v5035, 32
    %v5071 = vpop.permute.xlu0 %5070
    %5072 = vrot.lane.b32.xlu0 %v5036, 32
    %v5073 = vpop.permute.xlu0 %5072
    %5074 = vrot.lane.b32.xlu0 %v5037, 32
    %v5075 = vpop.permute.xlu0 %5074
    %5076 = vrot.lane.b32.xlu0 %v5038, 32
    %v5077 = vpop.permute.xlu0 %5076
    %5078 = vrot.lane.b32.xlu0 %v5039, 32
    %v5079 = vpop.permute.xlu0 %5078
    %5080 = vrot.lane.b32.xlu0 %v5040, 32
    %v5081 = vpop.permute.xlu0 %5080
    %5082 = vrot.lane.b32.xlu0 %v5041, 32
    %v5083 = vpop.permute.xlu0 %5082
    %5084 = vrot.lane.b32.xlu0 %v5042, 32
    %v5085 = vpop.permute.xlu0 %5084
    %5086 = vrot.lane.b32.xlu0 %v5043, 32
    %v5087 = vpop.permute.xlu0 %5086
    %5088 = vrot.lane.b32.xlu0 %v5044, 32
    %v5089 = vpop.permute.xlu0 %5088
    %5090 = vrot.lane.b32.xlu0 %v5045, 32
    %v5091 = vpop.permute.xlu0 %5090
    %5092 = vrot.lane.b32.xlu0 %v5046, 32
    %v5093 = vpop.permute.xlu0 %5092
    %5094 = vrot.lane.b32.xlu0 %v5047, 32
    %v5095 = vpop.permute.xlu0 %5094
    %v5112 = vmul.f32 %v4809, %v5065
    %v5113 = vmul.f32 %v4811, %v5067
    %v5114 = vmul.f32 %v4813, %v5069
    %v5115 = vmul.f32 %v4815, %v5071
    %v5116 = vmul.f32 %v4817, %v5073
    %v5117 = vmul.f32 %v4819, %v5075
    %v5118 = vmul.f32 %v4821, %v5077
    %v5119 = vmul.f32 %v4823, %v5079
    %v5120 = vmul.f32 %v4825, %v5081
    %v5121 = vmul.f32 %v4827, %v5083
    %v5122 = vmul.f32 %v4829, %v5085
    %v5123 = vmul.f32 %v4831, %v5087
    %v5124 = vmul.f32 %v4833, %v5089
    %v5125 = vmul.f32 %v4835, %v5091
    %v5126 = vmul.f32 %v4837, %v5093
    %v5127 = vmul.f32 %v4839, %v5095
    %5144 = vrot.lane.b32.xlu0 %v5112, 64
    %v5145 = vpop.permute.xlu0 %5144
    %5146 = vrot.lane.b32.xlu0 %v5113, 64
    %v5147 = vpop.permute.xlu0 %5146
    %5148 = vrot.lane.b32.xlu0 %v5114, 64
    %v5149 = vpop.permute.xlu0 %5148
    %5150 = vrot.lane.b32.xlu0 %v5115, 64
    %v5151 = vpop.permute.xlu0 %5150
    %5152 = vrot.lane.b32.xlu0 %v5116, 64
    %v5153 = vpop.permute.xlu0 %5152
    %5154 = vrot.lane.b32.xlu0 %v5117, 64
    %v5155 = vpop.permute.xlu0 %5154
    %5156 = vrot.lane.b32.xlu0 %v5118, 64
    %v5157 = vpop.permute.xlu0 %5156
    %5158 = vrot.lane.b32.xlu0 %v5119, 64
    %v5159 = vpop.permute.xlu0 %5158
    %5160 = vrot.lane.b32.xlu0 %v5120, 64
    %v5161 = vpop.permute.xlu0 %5160
    %5162 = vrot.lane.b32.xlu0 %v5121, 64
    %v5163 = vpop.permute.xlu0 %5162
    %5164 = vrot.lane.b32.xlu0 %v5122, 64
    %v5165 = vpop.permute.xlu0 %5164
    %5166 = vrot.lane.b32.xlu0 %v5123, 64
    %v5167 = vpop.permute.xlu0 %5166
    %5168 = vrot.lane.b32.xlu0 %v5124, 64
    %v5169 = vpop.permute.xlu0 %5168
    %5170 = vrot.lane.b32.xlu0 %v5125, 64
    %v5171 = vpop.permute.xlu0 %5170
    %5172 = vrot.lane.b32.xlu0 %v5126, 64
    %v5173 = vpop.permute.xlu0 %5172
    %5174 = vrot.lane.b32.xlu0 %v5127, 64
    %v5175 = vpop.permute.xlu0 %5174
    %5192 = vst.msk [vmem:[#allocation3 + $0x6] sm:$0x1] %vm1350, %v5145
    %5193 = vst.msk [vmem:[#allocation3 + $0xe] sm:$0x1] %vm1350, %v5147
    %5194 = vst.msk [vmem:[#allocation3 + $0x16] sm:$0x1] %vm1350, %v5149
    %5195 = vst.msk [vmem:[#allocation3 + $0x1e] sm:$0x1] %vm1350, %v5151
    %5196 = vst.msk [vmem:[#allocation3 + $0x26] sm:$0x1] %vm1350, %v5153
    %5197 = vst.msk [vmem:[#allocation3 + $0x2e] sm:$0x1] %vm1350, %v5155
    %5198 = vst.msk [vmem:[#allocation3 + $0x36] sm:$0x1] %vm1350, %v5157
    %5199 = vst.msk [vmem:[#allocation3 + $0x3e] sm:$0x1] %vm1350, %v5159
    %5200 = vst.msk [vmem:[#allocation3 + $0x46] sm:$0x1] %vm1350, %v5161
    %5201 = vst.msk [vmem:[#allocation3 + $0x4e] sm:$0x1] %vm1350, %v5163
    %5202 = vst.msk [vmem:[#allocation3 + $0x56] sm:$0x1] %vm1350, %v5165
    %5203 = vst.msk [vmem:[#allocation3 + $0x5e] sm:$0x1] %vm1350, %v5167
    %5204 = vst.msk [vmem:[#allocation3 + $0x66] sm:$0x1] %vm1350, %v5169
    %5205 = vst.msk [vmem:[#allocation3 + $0x6e] sm:$0x1] %vm1350, %v5171
    %5206 = vst.msk [vmem:[#allocation3 + $0x76] sm:$0x1] %vm1350, %v5173
    %5207 = vst.msk [vmem:[#allocation3 + $0x7e] sm:$0x1] %vm1350, %v5175
    %v5208 = vld [vmem:[#allocation2 + $0x7] sm:$0x1]
    %v5209 = vld [vmem:[#allocation2 + $0xf] sm:$0x1]
    %v5210 = vld [vmem:[#allocation2 + $0x17] sm:$0x1]
    %v5211 = vld [vmem:[#allocation2 + $0x1f] sm:$0x1]
    %v5212 = vld [vmem:[#allocation2 + $0x27] sm:$0x1]
    %v5213 = vld [vmem:[#allocation2 + $0x2f] sm:$0x1]
    %v5214 = vld [vmem:[#allocation2 + $0x37] sm:$0x1]
    %v5215 = vld [vmem:[#allocation2 + $0x3f] sm:$0x1]
    %v5216 = vld [vmem:[#allocation2 + $0x47] sm:$0x1]
    %v5217 = vld [vmem:[#allocation2 + $0x4f] sm:$0x1]
    %v5218 = vld [vmem:[#allocation2 + $0x57] sm:$0x1]
    %v5219 = vld [vmem:[#allocation2 + $0x5f] sm:$0x1]
    %v5220 = vld [vmem:[#allocation2 + $0x67] sm:$0x1]
    %v5221 = vld [vmem:[#allocation2 + $0x6f] sm:$0x1]
    %v5222 = vld [vmem:[#allocation2 + $0x77] sm:$0x1]
    %v5223 = vld [vmem:[#allocation2 + $0x7f] sm:$0x1]
    %v5224 = vrot.slane %v5113, 7
    %v5225 = vsel %vm1384, %v5224, %v5112
    %v5226 = vrot.slane %v5114, 6
    %v5227 = vsel %vm1387, %v5226, %v5225
    %v5228 = vrot.slane %v5115, 5
    %v5229 = vsel %vm1390, %v5228, %v5227
    %v5230 = vrot.slane %v5116, 4
    %v5231 = vsel %vm1393, %v5230, %v5229
    %v5232 = vrot.slane %v5117, 3
    %v5233 = vsel %vm1396, %v5232, %v5231
    %v5234 = vrot.slane %v5118, 2
    %v5235 = vsel %vm1399, %v5234, %v5233
    %v5236 = vrot.slane %v5119, 1
    %v5237 = vsel %vm1402, %v5236, %v5235
    %v5238 = vrot.slane %v5121, 7
    %v5239 = vsel %vm1384, %v5238, %v5120
    %v5240 = vrot.slane %v5122, 6
    %v5241 = vsel %vm1387, %v5240, %v5239
    %v5242 = vrot.slane %v5123, 5
    %v5243 = vsel %vm1390, %v5242, %v5241
    %v5244 = vrot.slane %v5124, 4
    %v5245 = vsel %vm1393, %v5244, %v5243
    %v5246 = vrot.slane %v5125, 3
    %v5247 = vsel %vm1396, %v5246, %v5245
    %v5248 = vrot.slane %v5126, 2
    %v5249 = vsel %vm1399, %v5248, %v5247
    %v5250 = vrot.slane %v5127, 1
    %v5251 = vsel %vm1402, %v5250, %v5249
    %5252 = vrot.lane.b32.xlu0 %v5237, 64
    %v5253 = vpop.permute.xlu0 %5252
    %5254 = vrot.lane.b32.xlu0 %v5251, 64
    %v5255 = vpop.permute.xlu0 %5254
    %v5256 = vsel %vm775, %v5253, 0
    %v5258 = vsel %vm775, %v5255, 0
    %5260 = vmatprep.subr.mxu0 0.0
    %5261 = vmatpush1.msra.mxu0 %v755
    %5262 = vmatprep.subr.mxu0 0.0
    %5263 = vmatpush1.msra.mxu0 %v756
    %5264 = vmatprep.subr.mxu0 0.0
    %5265 = vmatpush1.msra.mxu0 %v757
    %5266 = vmatprep.subr.mxu0 0.0
    %5267 = vmatpush1.msra.mxu0 %v758
    %5268 = vmatprep.subr.mxu0 0.0
    %5269 = vmatpush1.msra.mxu0 0.0
    %5270 = vmatprep.subr.mxu0 0.0
    %5271 = vmatpush1.msra.mxu0 0.0
    %5272 = vmatprep.subr.mxu0 0.0
    %5273 = vmatpush1.msra.mxu0 0.0
    %5274 = vmatprep.subr.mxu0 0.0
    %5275 = vmatpush1.msra.mxu0 0.0
    %5276 = vmatprep.subr.mxu0 0.0
    %5277 = vmatpush1.msra.mxu0 0.0
    %5278 = vmatprep.subr.mxu0 0.0
    %5279 = vmatpush1.msra.mxu0 0.0
    %5280 = vmatprep.subr.mxu0 0.0
    %5281 = vmatpush1.msra.mxu0 0.0
    %5282 = vmatprep.subr.mxu0 0.0
    %5283 = vmatpush1.msra.mxu0 0.0
    %5284 = vmatprep.subr.mxu0 0.0
    %5285 = vmatpush1.msra.mxu0 0.0
    %5286 = vmatprep.subr.mxu0 0.0
    %5287 = vmatpush1.msra.mxu0 0.0
    %5288 = vmatprep.subr.mxu0 0.0
    %5289 = vmatpush1.msra.mxu0 0.0
    %5290 = vmatprep.subr.mxu0 0.0
    %5291 = vmatpush1.msra.mxu0 0.0
    %5292 = vmatprep.subr.mxu0 0.0
    %5293 = vmatpush1.msra.mxu0 0.0
    %5294 = vmatprep.subr.mxu0 0.0
    %5295 = vmatpush1.msra.mxu0 0.0
    %5296 = vmatprep.subr.mxu0 0.0
    %5297 = vmatpush1.msra.mxu0 0.0
    %5298 = vmatprep.subr.mxu0 0.0
    %5299 = vmatpush1.msra.mxu0 0.0
    %5300 = vmatprep.subr.mxu0 0.0
    %5301 = vmatpush1.msra.mxu0 0.0
    %5302 = vmatprep.subr.mxu0 0.0
    %5303 = vmatpush1.msra.mxu0 0.0
    %5304 = vmatprep.subr.mxu0 0.0
    %5305 = vmatpush1.msra.mxu0 0.0
    %5306 = vmatprep.subr.mxu0 0.0
    %5307 = vmatpush1.msra.mxu0 0.0
    %5308 = vmatprep.subr.mxu0 0.0
    %5309 = vmatpush1.msra.mxu0 0.0
    %5310 = vmatprep.subr.mxu0 0.0
    %5311 = vmatpush1.msra.mxu0 0.0
    %5312 = vmatprep.subr.mxu0 0.0
    %5313 = vmatpush1.msra.mxu0 0.0
    %5314 = vmatprep.subr.mxu0 0.0
    %5315 = vmatpush1.msra.mxu0 0.0
    %5316 = vmatprep.subr.mxu0 0.0
    %5317 = vmatpush1.msra.mxu0 0.0
    %5318 = vmatprep.subr.mxu0 0.0
    %5319 = vmatpush1.msra.mxu0 0.0
    %5320 = vmatprep.subr.mxu0 0.0
    %5321 = vmatpush1.msra.mxu0 0.0
    %5322 = vmatprep.subr.mxu0 0.0
    %5323 = vmatpush1.msra.mxu0 0.0
    %5324 = vmatprep.mubr.f32.mxu0 0.0
    %5325 = vmatmul.mubr.f32.gmra.mrb[0].mxu0 %v5256
    %v5326 = vpop.f32.mrb[0].mxu0
    %v5327 = vadd.f32 0.0, %v5326
    %v5328 = vpop.f32.mrb[0].mxu0
    %5329 = vmatprep.mubr.f32.mxu0 0.0
    %5330 = vmatmul.mubr.f32.gmra.mrb[0].mxu0 %v5258
    %v5331 = vpop.f32.mrb[0].mxu0
    %v5332 = vadd.f32 0.0, %v5331
    %v5333 = vpop.f32.mrb[0].mxu0
    %5334 = vdwg.mxu0
    %v5337 = vrot.slane %v5327, 1
    %v5338 = vrot.slane %v5327, 2
    %v5339 = vrot.slane %v5327, 3
    %v5340 = vrot.slane %v5327, 4
    %v5341 = vrot.slane %v5327, 5
    %v5342 = vrot.slane %v5327, 6
    %v5343 = vrot.slane %v5327, 7
    %v5344 = vrot.slane %v5332, 1
    %v5345 = vrot.slane %v5332, 2
    %v5346 = vrot.slane %v5332, 3
    %v5347 = vrot.slane %v5332, 4
    %v5348 = vrot.slane %v5332, 5
    %v5349 = vrot.slane %v5332, 6
    %v5350 = vrot.slane %v5332, 7
    %v5367 = vadd.f32 %v5208, %v5327
    %v5368 = vadd.f32 %v5209, %v5337
    %v5369 = vadd.f32 %v5210, %v5338
    %v5370 = vadd.f32 %v5211, %v5339
    %v5371 = vadd.f32 %v5212, %v5340
    %v5372 = vadd.f32 %v5213, %v5341
    %v5373 = vadd.f32 %v5214, %v5342
    %v5374 = vadd.f32 %v5215, %v5343
    %v5375 = vadd.f32 %v5216, %v5332
    %v5376 = vadd.f32 %v5217, %v5344
    %v5377 = vadd.f32 %v5218, %v5345
    %v5378 = vadd.f32 %v5219, %v5346
    %v5379 = vadd.f32 %v5220, %v5347
    %v5380 = vadd.f32 %v5221, %v5348
    %v5381 = vadd.f32 %v5222, %v5349
    %v5382 = vadd.f32 %v5223, %v5350
    %v5383 = vxor.u32 %v5367, 2147483648
    %v5384 = vxor.u32 %v5368, 2147483648
    %v5385 = vxor.u32 %v5369, 2147483648
    %v5386 = vxor.u32 %v5370, 2147483648
    %v5387 = vxor.u32 %v5371, 2147483648
    %v5388 = vxor.u32 %v5372, 2147483648
    %v5389 = vxor.u32 %v5373, 2147483648
    %v5390 = vxor.u32 %v5374, 2147483648
    %v5391 = vxor.u32 %v5375, 2147483648
    %v5392 = vxor.u32 %v5376, 2147483648
    %v5393 = vxor.u32 %v5377, 2147483648
    %v5394 = vxor.u32 %v5378, 2147483648
    %v5395 = vxor.u32 %v5379, 2147483648
    %v5396 = vxor.u32 %v5380, 2147483648
    %v5397 = vxor.u32 %v5381, 2147483648
    %v5398 = vxor.u32 %v5382, 2147483648
    %v5399 = vmul.f32 %v5383, 1.442695
    %v5400 = vpow.pop %v5399
    %v5401 = vmul.f32 %v5384, 1.442695
    %v5402 = vpow.pop %v5401
    %v5403 = vmul.f32 %v5385, 1.442695
    %v5404 = vpow.pop %v5403
    %v5405 = vmul.f32 %v5386, 1.442695
    %v5406 = vpow.pop %v5405
    %v5407 = vmul.f32 %v5387, 1.442695
    %v5408 = vpow.pop %v5407
    %v5409 = vmul.f32 %v5388, 1.442695
    %v5410 = vpow.pop %v5409
    %v5411 = vmul.f32 %v5389, 1.442695
    %v5412 = vpow.pop %v5411
    %v5413 = vmul.f32 %v5390, 1.442695
    %v5414 = vpow.pop %v5413
    %v5415 = vmul.f32 %v5391, 1.442695
    %v5416 = vpow.pop %v5415
    %v5417 = vmul.f32 %v5392, 1.442695
    %v5418 = vpow.pop %v5417
    %v5419 = vmul.f32 %v5393, 1.442695
    %v5420 = vpow.pop %v5419
    %v5421 = vmul.f32 %v5394, 1.442695
    %v5422 = vpow.pop %v5421
    %v5423 = vmul.f32 %v5395, 1.442695
    %v5424 = vpow.pop %v5423
    %v5425 = vmul.f32 %v5396, 1.442695
    %v5426 = vpow.pop %v5425
    %v5427 = vmul.f32 %v5397, 1.442695
    %v5428 = vpow.pop %v5427
    %v5429 = vmul.f32 %v5398, 1.442695
    %v5430 = vpow.pop %v5429
    %v5431 = vadd.f32 %v5400, 1.0
    %v5432 = vadd.f32 %v5402, 1.0
    %v5433 = vadd.f32 %v5404, 1.0
    %v5434 = vadd.f32 %v5406, 1.0
    %v5435 = vadd.f32 %v5408, 1.0
    %v5436 = vadd.f32 %v5410, 1.0
    %v5437 = vadd.f32 %v5412, 1.0
    %v5438 = vadd.f32 %v5414, 1.0
    %v5439 = vadd.f32 %v5416, 1.0
    %v5440 = vadd.f32 %v5418, 1.0
    %v5441 = vadd.f32 %v5420, 1.0
    %v5442 = vadd.f32 %v5422, 1.0
    %v5443 = vadd.f32 %v5424, 1.0
    %v5444 = vadd.f32 %v5426, 1.0
    %v5445 = vadd.f32 %v5428, 1.0
    %v5446 = vadd.f32 %v5430, 1.0
    %v5447 = vrcp.pop %v5431
    %v5448 = vmul.f32 1.0, %v5447
    %v5449 = vrcp.pop %v5432
    %v5450 = vmul.f32 1.0, %v5449
    %v5451 = vrcp.pop %v5433
    %v5452 = vmul.f32 1.0, %v5451
    %v5453 = vrcp.pop %v5434
    %v5454 = vmul.f32 1.0, %v5453
    %v5455 = vrcp.pop %v5435
    %v5456 = vmul.f32 1.0, %v5455
    %v5457 = vrcp.pop %v5436
    %v5458 = vmul.f32 1.0, %v5457
    %v5459 = vrcp.pop %v5437
    %v5460 = vmul.f32 1.0, %v5459
    %v5461 = vrcp.pop %v5438
    %v5462 = vmul.f32 1.0, %v5461
    %v5463 = vrcp.pop %v5439
    %v5464 = vmul.f32 1.0, %v5463
    %v5465 = vrcp.pop %v5440
    %v5466 = vmul.f32 1.0, %v5465
    %v5467 = vrcp.pop %v5441
    %v5468 = vmul.f32 1.0, %v5467
    %v5469 = vrcp.pop %v5442
    %v5470 = vmul.f32 1.0, %v5469
    %v5471 = vrcp.pop %v5443
    %v5472 = vmul.f32 1.0, %v5471
    %v5473 = vrcp.pop %v5444
    %v5474 = vmul.f32 1.0, %v5473
    %v5475 = vrcp.pop %v5445
    %v5476 = vmul.f32 1.0, %v5475
    %v5477 = vrcp.pop %v5446
    %v5478 = vmul.f32 1.0, %v5477
    %v5479 = vtanh.pop %v5367
    %v5480 = vtanh.pop %v5368
    %v5481 = vtanh.pop %v5369
    %v5482 = vtanh.pop %v5370
    %v5483 = vtanh.pop %v5371
    %v5484 = vtanh.pop %v5372
    %v5485 = vtanh.pop %v5373
    %v5486 = vtanh.pop %v5374
    %v5487 = vtanh.pop %v5375
    %v5488 = vtanh.pop %v5376
    %v5489 = vtanh.pop %v5377
    %v5490 = vtanh.pop %v5378
    %v5491 = vtanh.pop %v5379
    %v5492 = vtanh.pop %v5380
    %v5493 = vtanh.pop %v5381
    %v5494 = vtanh.pop %v5382
    %v5495 = vmul.f32 %v5448, %v5016
    %v5496 = vmul.f32 %v5450, %v5017
    %v5497 = vmul.f32 %v5452, %v5018
    %v5498 = vmul.f32 %v5454, %v5019
    %v5499 = vmul.f32 %v5456, %v5020
    %v5500 = vmul.f32 %v5458, %v5021
    %v5501 = vmul.f32 %v5460, %v5022
    %v5502 = vmul.f32 %v5462, %v5023
    %v5503 = vmul.f32 %v5464, %v5024
    %v5504 = vmul.f32 %v5466, %v5025
    %v5505 = vmul.f32 %v5468, %v5026
    %v5506 = vmul.f32 %v5470, %v5027
    %v5507 = vmul.f32 %v5472, %v5028
    %v5508 = vmul.f32 %v5474, %v5029
    %v5509 = vmul.f32 %v5476, %v5030
    %v5510 = vmul.f32 %v5478, %v5031
    %5527 = vrot.lane.b32.xlu0 %v5479, 32
    %v5528 = vpop.permute.xlu0 %5527
    %5529 = vrot.lane.b32.xlu0 %v5480, 32
    %v5530 = vpop.permute.xlu0 %5529
    %5531 = vrot.lane.b32.xlu0 %v5481, 32
    %v5532 = vpop.permute.xlu0 %5531
    %5533 = vrot.lane.b32.xlu0 %v5482, 32
    %v5534 = vpop.permute.xlu0 %5533
    %5535 = vrot.lane.b32.xlu0 %v5483, 32
    %v5536 = vpop.permute.xlu0 %5535
    %5537 = vrot.lane.b32.xlu0 %v5484, 32
    %v5538 = vpop.permute.xlu0 %5537
    %5539 = vrot.lane.b32.xlu0 %v5485, 32
    %v5540 = vpop.permute.xlu0 %5539
    %5541 = vrot.lane.b32.xlu0 %v5486, 32
    %v5542 = vpop.permute.xlu0 %5541
    %5543 = vrot.lane.b32.xlu0 %v5487, 32
    %v5544 = vpop.permute.xlu0 %5543
    %5545 = vrot.lane.b32.xlu0 %v5488, 32
    %v5546 = vpop.permute.xlu0 %5545
    %5547 = vrot.lane.b32.xlu0 %v5489, 32
    %v5548 = vpop.permute.xlu0 %5547
    %5549 = vrot.lane.b32.xlu0 %v5490, 32
    %v5550 = vpop.permute.xlu0 %5549
    %5551 = vrot.lane.b32.xlu0 %v5491, 32
    %v5552 = vpop.permute.xlu0 %5551
    %5553 = vrot.lane.b32.xlu0 %v5492, 32
    %v5554 = vpop.permute.xlu0 %5553
    %5555 = vrot.lane.b32.xlu0 %v5493, 32
    %v5556 = vpop.permute.xlu0 %5555
    %5557 = vrot.lane.b32.xlu0 %v5494, 32
    %v5558 = vpop.permute.xlu0 %5557
    %v5575 = vmul.f32 %v5448, %v5528
    %v5576 = vmul.f32 %v5450, %v5530
    %v5577 = vmul.f32 %v5452, %v5532
    %v5578 = vmul.f32 %v5454, %v5534
    %v5579 = vmul.f32 %v5456, %v5536
    %v5580 = vmul.f32 %v5458, %v5538
    %v5581 = vmul.f32 %v5460, %v5540
    %v5582 = vmul.f32 %v5462, %v5542
    %v5583 = vmul.f32 %v5464, %v5544
    %v5584 = vmul.f32 %v5466, %v5546
    %v5585 = vmul.f32 %v5468, %v5548
    %v5586 = vmul.f32 %v5470, %v5550
    %v5587 = vmul.f32 %v5472, %v5552
    %v5588 = vmul.f32 %v5474, %v5554
    %v5589 = vmul.f32 %v5476, %v5556
    %v5590 = vmul.f32 %v5478, %v5558
    %5607 = vrot.lane.b32.xlu0 %v5575, 32
    %v5608 = vpop.permute.xlu0 %5607
    %5609 = vrot.lane.b32.xlu0 %v5576, 32
    %v5610 = vpop.permute.xlu0 %5609
    %5611 = vrot.lane.b32.xlu0 %v5577, 32
    %v5612 = vpop.permute.xlu0 %5611
    %5613 = vrot.lane.b32.xlu0 %v5578, 32
    %v5614 = vpop.permute.xlu0 %5613
    %5615 = vrot.lane.b32.xlu0 %v5579, 32
    %v5616 = vpop.permute.xlu0 %5615
    %5617 = vrot.lane.b32.xlu0 %v5580, 32
    %v5618 = vpop.permute.xlu0 %5617
    %5619 = vrot.lane.b32.xlu0 %v5581, 32
    %v5620 = vpop.permute.xlu0 %5619
    %5621 = vrot.lane.b32.xlu0 %v5582, 32
    %v5622 = vpop.permute.xlu0 %5621
    %5623 = vrot.lane.b32.xlu0 %v5583, 32
    %v5624 = vpop.permute.xlu0 %5623
    %5625 = vrot.lane.b32.xlu0 %v5584, 32
    %v5626 = vpop.permute.xlu0 %5625
    %5627 = vrot.lane.b32.xlu0 %v5585, 32
    %v5628 = vpop.permute.xlu0 %5627
    %5629 = vrot.lane.b32.xlu0 %v5586, 32
    %v5630 = vpop.permute.xlu0 %5629
    %5631 = vrot.lane.b32.xlu0 %v5587, 32
    %v5632 = vpop.permute.xlu0 %5631
    %5633 = vrot.lane.b32.xlu0 %v5588, 32
    %v5634 = vpop.permute.xlu0 %5633
    %5635 = vrot.lane.b32.xlu0 %v5589, 32
    %v5636 = vpop.permute.xlu0 %5635
    %5637 = vrot.lane.b32.xlu0 %v5590, 32
    %v5638 = vpop.permute.xlu0 %5637
    %v5655 = vadd.f32 %v5495, %v5608
    %v5656 = vadd.f32 %v5496, %v5610
    %v5657 = vadd.f32 %v5497, %v5612
    %v5658 = vadd.f32 %v5498, %v5614
    %v5659 = vadd.f32 %v5499, %v5616
    %v5660 = vadd.f32 %v5500, %v5618
    %v5661 = vadd.f32 %v5501, %v5620
    %v5662 = vadd.f32 %v5502, %v5622
    %v5663 = vadd.f32 %v5503, %v5624
    %v5664 = vadd.f32 %v5504, %v5626
    %v5665 = vadd.f32 %v5505, %v5628
    %v5666 = vadd.f32 %v5506, %v5630
    %v5667 = vadd.f32 %v5507, %v5632
    %v5668 = vadd.f32 %v5508, %v5634
    %v5669 = vadd.f32 %v5509, %v5636
    %v5670 = vadd.f32 %v5510, %v5638
    %v5671 = vtanh.pop %v5655
    %v5672 = vtanh.pop %v5656
    %v5673 = vtanh.pop %v5657
    %v5674 = vtanh.pop %v5658
    %v5675 = vtanh.pop %v5659
    %v5676 = vtanh.pop %v5660
    %v5677 = vtanh.pop %v5661
    %v5678 = vtanh.pop %v5662
    %v5679 = vtanh.pop %v5663
    %v5680 = vtanh.pop %v5664
    %v5681 = vtanh.pop %v5665
    %v5682 = vtanh.pop %v5666
    %v5683 = vtanh.pop %v5667
    %v5684 = vtanh.pop %v5668
    %v5685 = vtanh.pop %v5669
    %v5686 = vtanh.pop %v5670
    %5703 = vrot.lane.b32.xlu0 %v5671, 32
    %v5704 = vpop.permute.xlu0 %5703
    %5705 = vrot.lane.b32.xlu0 %v5672, 32
    %v5706 = vpop.permute.xlu0 %5705
    %5707 = vrot.lane.b32.xlu0 %v5673, 32
    %v5708 = vpop.permute.xlu0 %5707
    %5709 = vrot.lane.b32.xlu0 %v5674, 32
    %v5710 = vpop.permute.xlu0 %5709
    %5711 = vrot.lane.b32.xlu0 %v5675, 32
    %v5712 = vpop.permute.xlu0 %5711
    %5713 = vrot.lane.b32.xlu0 %v5676, 32
    %v5714 = vpop.permute.xlu0 %5713
    %5715 = vrot.lane.b32.xlu0 %v5677, 32
    %v5716 = vpop.permute.xlu0 %5715
    %5717 = vrot.lane.b32.xlu0 %v5678, 32
    %v5718 = vpop.permute.xlu0 %5717
    %5719 = vrot.lane.b32.xlu0 %v5679, 32
    %v5720 = vpop.permute.xlu0 %5719
    %5721 = vrot.lane.b32.xlu0 %v5680, 32
    %v5722 = vpop.permute.xlu0 %5721
    %5723 = vrot.lane.b32.xlu0 %v5681, 32
    %v5724 = vpop.permute.xlu0 %5723
    %5725 = vrot.lane.b32.xlu0 %v5682, 32
    %v5726 = vpop.permute.xlu0 %5725
    %5727 = vrot.lane.b32.xlu0 %v5683, 32
    %v5728 = vpop.permute.xlu0 %5727
    %5729 = vrot.lane.b32.xlu0 %v5684, 32
    %v5730 = vpop.permute.xlu0 %5729
    %5731 = vrot.lane.b32.xlu0 %v5685, 32
    %v5732 = vpop.permute.xlu0 %5731
    %5733 = vrot.lane.b32.xlu0 %v5686, 32
    %v5734 = vpop.permute.xlu0 %5733
    %v5751 = vmul.f32 %v5448, %v5704
    %v5752 = vmul.f32 %v5450, %v5706
    %v5753 = vmul.f32 %v5452, %v5708
    %v5754 = vmul.f32 %v5454, %v5710
    %v5755 = vmul.f32 %v5456, %v5712
    %v5756 = vmul.f32 %v5458, %v5714
    %v5757 = vmul.f32 %v5460, %v5716
    %v5758 = vmul.f32 %v5462, %v5718
    %v5759 = vmul.f32 %v5464, %v5720
    %v5760 = vmul.f32 %v5466, %v5722
    %v5761 = vmul.f32 %v5468, %v5724
    %v5762 = vmul.f32 %v5470, %v5726
    %v5763 = vmul.f32 %v5472, %v5728
    %v5764 = vmul.f32 %v5474, %v5730
    %v5765 = vmul.f32 %v5476, %v5732
    %v5766 = vmul.f32 %v5478, %v5734
    %5783 = vrot.lane.b32.xlu0 %v5751, 64
    %v5784 = vpop.permute.xlu0 %5783
    %5785 = vrot.lane.b32.xlu0 %v5752, 64
    %v5786 = vpop.permute.xlu0 %5785
    %5787 = vrot.lane.b32.xlu0 %v5753, 64
    %v5788 = vpop.permute.xlu0 %5787
    %5789 = vrot.lane.b32.xlu0 %v5754, 64
    %v5790 = vpop.permute.xlu0 %5789
    %5791 = vrot.lane.b32.xlu0 %v5755, 64
    %v5792 = vpop.permute.xlu0 %5791
    %5793 = vrot.lane.b32.xlu0 %v5756, 64
    %v5794 = vpop.permute.xlu0 %5793
    %5795 = vrot.lane.b32.xlu0 %v5757, 64
    %v5796 = vpop.permute.xlu0 %5795
    %5797 = vrot.lane.b32.xlu0 %v5758, 64
    %v5798 = vpop.permute.xlu0 %5797
    %5799 = vrot.lane.b32.xlu0 %v5759, 64
    %v5800 = vpop.permute.xlu0 %5799
    %5801 = vrot.lane.b32.xlu0 %v5760, 64
    %v5802 = vpop.permute.xlu0 %5801
    %5803 = vrot.lane.b32.xlu0 %v5761, 64
    %v5804 = vpop.permute.xlu0 %5803
    %5805 = vrot.lane.b32.xlu0 %v5762, 64
    %v5806 = vpop.permute.xlu0 %5805
    %5807 = vrot.lane.b32.xlu0 %v5763, 64
    %v5808 = vpop.permute.xlu0 %5807
    %5809 = vrot.lane.b32.xlu0 %v5764, 64
    %v5810 = vpop.permute.xlu0 %5809
    %5811 = vrot.lane.b32.xlu0 %v5765, 64
    %v5812 = vpop.permute.xlu0 %5811
    %5813 = vrot.lane.b32.xlu0 %v5766, 64
    %v5814 = vpop.permute.xlu0 %5813
    %5831 = vst.msk [vmem:[#allocation3 + $0x7] sm:$0x1] %vm1350, %v5784
    %5832 = vst.msk [vmem:[#allocation3 + $0xf] sm:$0x1] %vm1350, %v5786
    %5833 = vst.msk [vmem:[#allocation3 + $0x17] sm:$0x1] %vm1350, %v5788
    %5834 = vst.msk [vmem:[#allocation3 + $0x1f] sm:$0x1] %vm1350, %v5790
    %5835 = vst.msk [vmem:[#allocation3 + $0x27] sm:$0x1] %vm1350, %v5792
    %5836 = vst.msk [vmem:[#allocation3 + $0x2f] sm:$0x1] %vm1350, %v5794
    %5837 = vst.msk [vmem:[#allocation3 + $0x37] sm:$0x1] %vm1350, %v5796
    %5838 = vst.msk [vmem:[#allocation3 + $0x3f] sm:$0x1] %vm1350, %v5798
    %5839 = vst.msk [vmem:[#allocation3 + $0x47] sm:$0x1] %vm1350, %v5800
    %5840 = vst.msk [vmem:[#allocation3 + $0x4f] sm:$0x1] %vm1350, %v5802
    %5841 = vst.msk [vmem:[#allocation3 + $0x57] sm:$0x1] %vm1350, %v5804
    %5842 = vst.msk [vmem:[#allocation3 + $0x5f] sm:$0x1] %vm1350, %v5806
    %5843 = vst.msk [vmem:[#allocation3 + $0x67] sm:$0x1] %vm1350, %v5808
    %5844 = vst.msk [vmem:[#allocation3 + $0x6f] sm:$0x1] %vm1350, %v5810
    %5845 = vst.msk [vmem:[#allocation3 + $0x77] sm:$0x1] %vm1350, %v5812
    %5846 = vst.msk [vmem:[#allocation3 + $0x7f] sm:$0x1] %vm1350, %v5814
    %v5847 = vld [vmem:[#allocation3] sm:$0xff]
    %v5848 = vld [vmem:[#allocation3 + $0x8] sm:$0xff]
    %v5849 = vld [vmem:[#allocation3 + $0x10] sm:$0xff]
    %v5850 = vld [vmem:[#allocation3 + $0x18] sm:$0xff]
    %v5851 = vld [vmem:[#allocation3 + $0x20] sm:$0xff]
    %v5852 = vld [vmem:[#allocation3 + $0x28] sm:$0xff]
    %v5853 = vld [vmem:[#allocation3 + $0x30] sm:$0xff]
    %v5854 = vld [vmem:[#allocation3 + $0x38] sm:$0xff]
    %v5855 = vld [vmem:[#allocation3 + $0x40] sm:$0xff]
    %v5856 = vld [vmem:[#allocation3 + $0x48] sm:$0xff]
    %v5857 = vld [vmem:[#allocation3 + $0x50] sm:$0xff]
    %v5858 = vld [vmem:[#allocation3 + $0x58] sm:$0xff]
    %v5859 = vld [vmem:[#allocation3 + $0x60] sm:$0xff]
    %v5860 = vld [vmem:[#allocation3 + $0x68] sm:$0xff]
    %v5861 = vld [vmem:[#allocation3 + $0x70] sm:$0xff]
    %v5862 = vld [vmem:[#allocation3 + $0x78] sm:$0xff]
    %v5879 = vrot.slane %v5847, 7
    %v5880 = vrot.slane %v5848, 7
    %v5881 = vrot.slane %v5849, 7
    %v5882 = vrot.slane %v5850, 7
    %v5883 = vrot.slane %v5851, 7
    %v5884 = vrot.slane %v5852, 7
    %v5885 = vrot.slane %v5853, 7
    %v5886 = vrot.slane %v5854, 7
    %v5887 = vrot.slane %v5855, 7
    %v5888 = vrot.slane %v5856, 7
    %v5889 = vrot.slane %v5857, 7
    %v5890 = vrot.slane %v5858, 7
    %v5891 = vrot.slane %v5859, 7
    %v5892 = vrot.slane %v5860, 7
    %v5893 = vrot.slane %v5861, 7
    %v5894 = vrot.slane %v5862, 7
    %v5911 = vrot.slane %v5847, 5
    %v5912 = vrot.slane %v5848, 5
    %v5913 = vrot.slane %v5849, 5
    %v5914 = vrot.slane %v5850, 5
    %v5915 = vrot.slane %v5851, 5
    %v5916 = vrot.slane %v5852, 5
    %v5917 = vrot.slane %v5853, 5
    %v5918 = vrot.slane %v5854, 5
    %v5919 = vrot.slane %v5855, 5
    %v5920 = vrot.slane %v5856, 5
    %v5921 = vrot.slane %v5857, 5
    %v5922 = vrot.slane %v5858, 5
    %v5923 = vrot.slane %v5859, 5
    %v5924 = vrot.slane %v5860, 5
    %v5925 = vrot.slane %v5861, 5
    %v5926 = vrot.slane %v5862, 5
    %v5943 = vrot.slane %v5847, 3
    %v5944 = vrot.slane %v5848, 3
    %v5945 = vrot.slane %v5849, 3
    %v5946 = vrot.slane %v5850, 3
    %v5947 = vrot.slane %v5851, 3
    %v5948 = vrot.slane %v5852, 3
    %v5949 = vrot.slane %v5853, 3
    %v5950 = vrot.slane %v5854, 3
    %v5951 = vrot.slane %v5855, 3
    %v5952 = vrot.slane %v5856, 3
    %v5953 = vrot.slane %v5857, 3
    %v5954 = vrot.slane %v5858, 3
    %v5955 = vrot.slane %v5859, 3
    %v5956 = vrot.slane %v5860, 3
    %v5957 = vrot.slane %v5861, 3
    %v5958 = vrot.slane %v5862, 3
    %v5975 = vrot.slane %v5847, 1
    %v5976 = vrot.slane %v5848, 1
    %v5977 = vrot.slane %v5849, 1
    %v5978 = vrot.slane %v5850, 1
    %v5979 = vrot.slane %v5851, 1
    %v5980 = vrot.slane %v5852, 1
    %v5981 = vrot.slane %v5853, 1
    %v5982 = vrot.slane %v5854, 1
    %v5983 = vrot.slane %v5855, 1
    %v5984 = vrot.slane %v5856, 1
    %v5985 = vrot.slane %v5857, 1
    %v5986 = vrot.slane %v5858, 1
    %v5987 = vrot.slane %v5859, 1
    %v5988 = vrot.slane %v5860, 1
    %v5989 = vrot.slane %v5861, 1
    %v5990 = vrot.slane %v5862, 1
    %v6007 = vsel %vm581, %v5879, %v5911
    %v6008 = vsel %vm581, %v5880, %v5912
    %v6009 = vsel %vm581, %v5881, %v5913
    %v6010 = vsel %vm581, %v5882, %v5914
    %v6011 = vsel %vm581, %v5883, %v5915
    %v6012 = vsel %vm581, %v5884, %v5916
    %v6013 = vsel %vm581, %v5885, %v5917
    %v6014 = vsel %vm581, %v5886, %v5918
    %v6015 = vsel %vm581, %v5887, %v5919
    %v6016 = vsel %vm581, %v5888, %v5920
    %v6017 = vsel %vm581, %v5889, %v5921
    %v6018 = vsel %vm581, %v5890, %v5922
    %v6019 = vsel %vm581, %v5891, %v5923
    %v6020 = vsel %vm581, %v5892, %v5924
    %v6021 = vsel %vm581, %v5893, %v5925
    %v6022 = vsel %vm581, %v5894, %v5926
    %v6023 = vsel %vm598, %v6007, %v5943
    %v6024 = vsel %vm598, %v6008, %v5944
    %v6025 = vsel %vm598, %v6009, %v5945
    %v6026 = vsel %vm598, %v6010, %v5946
    %v6027 = vsel %vm598, %v6011, %v5947
    %v6028 = vsel %vm598, %v6012, %v5948
    %v6029 = vsel %vm598, %v6013, %v5949
    %v6030 = vsel %vm598, %v6014, %v5950
    %v6031 = vsel %vm598, %v6015, %v5951
    %v6032 = vsel %vm598, %v6016, %v5952
    %v6033 = vsel %vm598, %v6017, %v5953
    %v6034 = vsel %vm598, %v6018, %v5954
    %v6035 = vsel %vm598, %v6019, %v5955
    %v6036 = vsel %vm598, %v6020, %v5956
    %v6037 = vsel %vm598, %v6021, %v5957
    %v6038 = vsel %vm598, %v6022, %v5958
    %v6039 = vsel %vm615, %v6023, %v5975
    %v6040 = vsel %vm615, %v6024, %v5976
    %v6041 = vsel %vm615, %v6025, %v5977
    %v6042 = vsel %vm615, %v6026, %v5978
    %v6043 = vsel %vm615, %v6027, %v5979
    %v6044 = vsel %vm615, %v6028, %v5980
    %v6045 = vsel %vm615, %v6029, %v5981
    %v6046 = vsel %vm615, %v6030, %v5982
    %v6047 = vsel %vm615, %v6031, %v5983
    %v6048 = vsel %vm615, %v6032, %v5984
    %v6049 = vsel %vm615, %v6033, %v5985
    %v6050 = vsel %vm615, %v6034, %v5986
    %v6051 = vsel %vm615, %v6035, %v5987
    %v6052 = vsel %vm615, %v6036, %v5988
    %v6053 = vsel %vm615, %v6037, %v5989
    %v6054 = vsel %vm615, %v6038, %v5990
    %v6055 = vsel %vm632, %v6039, %v5879
    %v6056 = vsel %vm632, %v6040, %v5880
    %v6057 = vsel %vm632, %v6041, %v5881
    %v6058 = vsel %vm632, %v6042, %v5882
    %v6059 = vsel %vm632, %v6043, %v5883
    %v6060 = vsel %vm632, %v6044, %v5884
    %v6061 = vsel %vm632, %v6045, %v5885
    %v6062 = vsel %vm632, %v6046, %v5886
    %v6063 = vsel %vm632, %v6047, %v5887
    %v6064 = vsel %vm632, %v6048, %v5888
    %v6065 = vsel %vm632, %v6049, %v5889
    %v6066 = vsel %vm632, %v6050, %v5890
    %v6067 = vsel %vm632, %v6051, %v5891
    %v6068 = vsel %vm632, %v6052, %v5892
    %v6069 = vsel %vm632, %v6053, %v5893
    %v6070 = vsel %vm632, %v6054, %v5894
    %v6071 = vsel %vm649, %v6055, %v5911
    %v6072 = vsel %vm649, %v6056, %v5912
    %v6073 = vsel %vm649, %v6057, %v5913
    %v6074 = vsel %vm649, %v6058, %v5914
    %v6075 = vsel %vm649, %v6059, %v5915
    %v6076 = vsel %vm649, %v6060, %v5916
    %v6077 = vsel %vm649, %v6061, %v5917
    %v6078 = vsel %vm649, %v6062, %v5918
    %v6079 = vsel %vm649, %v6063, %v5919
    %v6080 = vsel %vm649, %v6064, %v5920
    %v6081 = vsel %vm649, %v6065, %v5921
    %v6082 = vsel %vm649, %v6066, %v5922
    %v6083 = vsel %vm649, %v6067, %v5923
    %v6084 = vsel %vm649, %v6068, %v5924
    %v6085 = vsel %vm649, %v6069, %v5925
    %v6086 = vsel %vm649, %v6070, %v5926
    %v6087 = vsel %vm666, %v6071, %v5943
    %v6088 = vsel %vm666, %v6072, %v5944
    %v6089 = vsel %vm666, %v6073, %v5945
    %v6090 = vsel %vm666, %v6074, %v5946
    %v6091 = vsel %vm666, %v6075, %v5947
    %v6092 = vsel %vm666, %v6076, %v5948
    %v6093 = vsel %vm666, %v6077, %v5949
    %v6094 = vsel %vm666, %v6078, %v5950
    %v6095 = vsel %vm666, %v6079, %v5951
    %v6096 = vsel %vm666, %v6080, %v5952
    %v6097 = vsel %vm666, %v6081, %v5953
    %v6098 = vsel %vm666, %v6082, %v5954
    %v6099 = vsel %vm666, %v6083, %v5955
    %v6100 = vsel %vm666, %v6084, %v5956
    %v6101 = vsel %vm666, %v6085, %v5957
    %v6102 = vsel %vm666, %v6086, %v5958
    %v6103 = vsel %vm683, %v6087, %v5975
    %v6104 = vsel %vm683, %v6088, %v5976
    %v6105 = vsel %vm683, %v6089, %v5977
    %v6106 = vsel %vm683, %v6090, %v5978
    %v6107 = vsel %vm683, %v6091, %v5979
    %v6108 = vsel %vm683, %v6092, %v5980
    %v6109 = vsel %vm683, %v6093, %v5981
    %v6110 = vsel %vm683, %v6094, %v5982
    %v6111 = vsel %vm683, %v6095, %v5983
    %v6112 = vsel %vm683, %v6096, %v5984
    %v6113 = vsel %vm683, %v6097, %v5985
    %v6114 = vsel %vm683, %v6098, %v5986
    %v6115 = vsel %vm683, %v6099, %v5987
    %v6116 = vsel %vm683, %v6100, %v5988
    %v6117 = vsel %vm683, %v6101, %v5989
    %v6118 = vsel %vm683, %v6102, %v5990
    %vm6119 = vcmask 130048
    %v6120 = vsel %vm6119, %v5847, %v6103
    %v6121 = vsel %vm6119, %v5848, %v6104
    %v6122 = vsel %vm6119, %v5849, %v6105
    %v6123 = vsel %vm6119, %v5850, %v6106
    %v6124 = vsel %vm6119, %v5851, %v6107
    %v6125 = vsel %vm6119, %v5852, %v6108
    %v6126 = vsel %vm6119, %v5853, %v6109
    %v6127 = vsel %vm6119, %v5854, %v6110
    %v6128 = vsel %vm6119, %v5855, %v6111
    %v6129 = vsel %vm6119, %v5856, %v6112
    %v6130 = vsel %vm6119, %v5857, %v6113
    %v6131 = vsel %vm6119, %v5858, %v6114
    %v6132 = vsel %vm6119, %v5859, %v6115
    %v6133 = vsel %vm6119, %v5860, %v6116
    %v6134 = vsel %vm6119, %v5861, %v6117
    %v6135 = vsel %vm6119, %v5862, %v6118
    %v6136 = vtanh.pop %v6120
    %v6137 = vtanh.pop %v6121
    %v6138 = vtanh.pop %v6122
    %v6139 = vtanh.pop %v6123
    %v6140 = vtanh.pop %v6124
    %v6141 = vtanh.pop %v6125
    %v6142 = vtanh.pop %v6126
    %v6143 = vtanh.pop %v6127
    %v6144 = vtanh.pop %v6128
    %v6145 = vtanh.pop %v6129
    %v6146 = vtanh.pop %v6130
    %v6147 = vtanh.pop %v6131
    %v6148 = vtanh.pop %v6132
    %v6149 = vtanh.pop %v6133
    %v6150 = vtanh.pop %v6134
    %v6151 = vtanh.pop %v6135
    %v6152 = vld [vmem:[%s5] sm:$0x1]
    %v6154 = vlaneseq
    %v6155 = vshrl.u32 %v6154, 7
    %v6156 = vsub.s32 0, %v6155
    %v6157 = vrot.slane %v6152, %v6156
    %v6159 = vmul.f32 %v6136, %v6157
    %v6160 = vmul.f32 %v6137, %v6157
    %v6161 = vmul.f32 %v6138, %v6157
    %v6162 = vmul.f32 %v6139, %v6157
    %v6163 = vmul.f32 %v6140, %v6157
    %v6164 = vmul.f32 %v6141, %v6157
    %v6165 = vmul.f32 %v6142, %v6157
    %v6166 = vmul.f32 %v6143, %v6157
    %v6167 = vmul.f32 %v6144, %v6157
    %v6168 = vmul.f32 %v6145, %v6157
    %v6169 = vmul.f32 %v6146, %v6157
    %v6170 = vmul.f32 %v6147, %v6157
    %v6171 = vmul.f32 %v6148, %v6157
    %v6172 = vmul.f32 %v6149, %v6157
    %v6173 = vmul.f32 %v6150, %v6157
    %v6174 = vmul.f32 %v6151, %v6157
    %v6175 = vsel %vm775, %v6159, 0.0
    %6176 = vadd.xlane.f32.xlu0 %v6175
    %v6177 = vpop.xlane.xlu0 %6176
    %v6178 = vsel %vm775, %v6160, 0.0
    %6179 = vadd.xlane.f32.xlu0 %v6178
    %v6180 = vpop.xlane.xlu0 %6179
    %v6181 = vsel %vm775, %v6161, 0.0
    %6182 = vadd.xlane.f32.xlu0 %v6181
    %v6183 = vpop.xlane.xlu0 %6182
    %v6184 = vsel %vm775, %v6162, 0.0
    %6185 = vadd.xlane.f32.xlu0 %v6184
    %v6186 = vpop.xlane.xlu0 %6185
    %v6187 = vsel %vm775, %v6163, 0.0
    %6188 = vadd.xlane.f32.xlu0 %v6187
    %v6189 = vpop.xlane.xlu0 %6188
    %v6190 = vsel %vm775, %v6164, 0.0
    %6191 = vadd.xlane.f32.xlu0 %v6190
    %v6192 = vpop.xlane.xlu0 %6191
    %v6193 = vsel %vm775, %v6165, 0.0
    %6194 = vadd.xlane.f32.xlu0 %v6193
    %v6195 = vpop.xlane.xlu0 %6194
    %v6196 = vsel %vm775, %v6166, 0.0
    %6197 = vadd.xlane.f32.xlu0 %v6196
    %v6198 = vpop.xlane.xlu0 %6197
    %v6199 = vsel %vm775, %v6167, 0.0
    %6200 = vadd.xlane.f32.xlu0 %v6199
    %v6201 = vpop.xlane.xlu0 %6200
    %v6202 = vsel %vm775, %v6168, 0.0
    %6203 = vadd.xlane.f32.xlu0 %v6202
    %v6204 = vpop.xlane.xlu0 %6203
    %v6205 = vsel %vm775, %v6169, 0.0
    %6206 = vadd.xlane.f32.xlu0 %v6205
    %v6207 = vpop.xlane.xlu0 %6206
    %v6208 = vsel %vm775, %v6170, 0.0
    %6209 = vadd.xlane.f32.xlu0 %v6208
    %v6210 = vpop.xlane.xlu0 %6209
    %v6211 = vsel %vm775, %v6171, 0.0
    %6212 = vadd.xlane.f32.xlu0 %v6211
    %v6213 = vpop.xlane.xlu0 %6212
    %v6214 = vsel %vm775, %v6172, 0.0
    %6215 = vadd.xlane.f32.xlu0 %v6214
    %v6216 = vpop.xlane.xlu0 %6215
    %v6217 = vsel %vm775, %v6173, 0.0
    %6218 = vadd.xlane.f32.xlu0 %v6217
    %v6219 = vpop.xlane.xlu0 %6218
    %v6220 = vsel %vm775, %v6174, 0.0
    %6221 = vadd.xlane.f32.xlu0 %v6220
    %v6222 = vpop.xlane.xlu0 %6221
    %v6239 = vlaneseq
    %v6240 = vand.u32 %v6239, 127
    %v6241 = vlaneseq
    %v6242 = vshrl.u32 %v6241, 7
    %v6243 = vsub.s32 %v6240, %v6242
    %v6244 = vrot.slane %v6177, %v6243
    %v6245 = vlaneseq
    %v6246 = vshrl.u32 %v6245, 7
    %v6247 = vsub.s32 %v6240, %v6246
    %v6248 = vrot.slane %v6180, %v6247
    %v6249 = vlaneseq
    %v6250 = vshrl.u32 %v6249, 7
    %v6251 = vsub.s32 %v6240, %v6250
    %v6252 = vrot.slane %v6183, %v6251
    %v6253 = vlaneseq
    %v6254 = vshrl.u32 %v6253, 7
    %v6255 = vsub.s32 %v6240, %v6254
    %v6256 = vrot.slane %v6186, %v6255
    %v6257 = vlaneseq
    %v6258 = vshrl.u32 %v6257, 7
    %v6259 = vsub.s32 %v6240, %v6258
    %v6260 = vrot.slane %v6189, %v6259
    %v6261 = vlaneseq
    %v6262 = vshrl.u32 %v6261, 7
    %v6263 = vsub.s32 %v6240, %v6262
    %v6264 = vrot.slane %v6192, %v6263
    %v6265 = vlaneseq
    %v6266 = vshrl.u32 %v6265, 7
    %v6267 = vsub.s32 %v6240, %v6266
    %v6268 = vrot.slane %v6195, %v6267
    %v6269 = vlaneseq
    %v6270 = vshrl.u32 %v6269, 7
    %v6271 = vsub.s32 %v6240, %v6270
    %v6272 = vrot.slane %v6198, %v6271
    %v6273 = vlaneseq
    %v6274 = vshrl.u32 %v6273, 7
    %v6275 = vsub.s32 %v6240, %v6274
    %v6276 = vrot.slane %v6201, %v6275
    %v6277 = vlaneseq
    %v6278 = vshrl.u32 %v6277, 7
    %v6279 = vsub.s32 %v6240, %v6278
    %v6280 = vrot.slane %v6204, %v6279
    %v6281 = vlaneseq
    %v6282 = vshrl.u32 %v6281, 7
    %v6283 = vsub.s32 %v6240, %v6282
    %v6284 = vrot.slane %v6207, %v6283
    %v6285 = vlaneseq
    %v6286 = vshrl.u32 %v6285, 7
    %v6287 = vsub.s32 %v6240, %v6286
    %v6288 = vrot.slane %v6210, %v6287
    %v6289 = vlaneseq
    %v6290 = vshrl.u32 %v6289, 7
    %v6291 = vsub.s32 %v6240, %v6290
    %v6292 = vrot.slane %v6213, %v6291
    %v6293 = vlaneseq
    %v6294 = vshrl.u32 %v6293, 7
    %v6295 = vsub.s32 %v6240, %v6294
    %v6296 = vrot.slane %v6216, %v6295
    %v6297 = vlaneseq
    %v6298 = vshrl.u32 %v6297, 7
    %v6299 = vsub.s32 %v6240, %v6298
    %v6300 = vrot.slane %v6219, %v6299
    %v6301 = vlaneseq
    %v6302 = vshrl.u32 %v6301, 7
    %v6303 = vsub.s32 %v6240, %v6302
    %v6304 = vrot.slane %v6222, %v6303
    %v6305 = vsel %vm1384, %v6248, %v6244
    %v6306 = vsel %vm1387, %v6252, %v6305
    %v6307 = vsel %vm1390, %v6256, %v6306
    %v6308 = vsel %vm1393, %v6260, %v6307
    %v6309 = vsel %vm1396, %v6264, %v6308
    %v6310 = vsel %vm1399, %v6268, %v6309
    %v6311 = vsel %vm1402, %v6272, %v6310
    %v6312 = vsel %vm1384, %v6280, %v6276
    %v6313 = vsel %vm1387, %v6284, %v6312
    %v6314 = vsel %vm1390, %v6288, %v6313
    %v6315 = vsel %vm1393, %v6292, %v6314
    %v6316 = vsel %vm1396, %v6296, %v6315
    %v6317 = vsel %vm1399, %v6300, %v6316
    %v6318 = vsel %vm1402, %v6304, %v6317
    %vm6321 = vcmask 64512
    %v6322 = vsel %vm6321, %v6311, -inf
    %6323 = vmax.xlane.f32.xlu0 %v6322
    %v6324 = vpop.xlane.xlu0 %6323
    %v6325 = vsel %vm6321, %v6318, -inf
    %6326 = vmax.xlane.f32.xlu0 %v6325
    %v6327 = vpop.xlane.xlu0 %6326
    %v6330 = vlaneseq
    %v6331 = vshrl.u32 %v6330, 7
    %v6332 = vsub.s32 0, %v6331
    %v6333 = vrot.slane %v6324, %v6332
    %v6334 = vlaneseq
    %v6335 = vshrl.u32 %v6334, 7
    %v6336 = vsub.s32 1, %v6335
    %v6337 = vrot.slane %v6324, %v6336
    %v6338 = vlaneseq
    %v6339 = vshrl.u32 %v6338, 7
    %v6340 = vsub.s32 2, %v6339
    %v6341 = vrot.slane %v6324, %v6340
    %v6342 = vlaneseq
    %v6343 = vshrl.u32 %v6342, 7
    %v6344 = vsub.s32 3, %v6343
    %v6345 = vrot.slane %v6324, %v6344
    %v6346 = vlaneseq
    %v6347 = vshrl.u32 %v6346, 7
    %v6348 = vsub.s32 4, %v6347
    %v6349 = vrot.slane %v6324, %v6348
    %v6350 = vlaneseq
    %v6351 = vshrl.u32 %v6350, 7
    %v6352 = vsub.s32 5, %v6351
    %v6353 = vrot.slane %v6324, %v6352
    %v6354 = vlaneseq
    %v6355 = vshrl.u32 %v6354, 7
    %v6356 = vsub.s32 6, %v6355
    %v6357 = vrot.slane %v6324, %v6356
    %v6358 = vlaneseq
    %v6359 = vshrl.u32 %v6358, 7
    %v6360 = vsub.s32 7, %v6359
    %v6361 = vrot.slane %v6324, %v6360
    %v6362 = vlaneseq
    %v6363 = vshrl.u32 %v6362, 7
    %v6364 = vsub.s32 0, %v6363
    %v6365 = vrot.slane %v6327, %v6364
    %v6366 = vlaneseq
    %v6367 = vshrl.u32 %v6366, 7
    %v6368 = vsub.s32 1, %v6367
    %v6369 = vrot.slane %v6327, %v6368
    %v6370 = vlaneseq
    %v6371 = vshrl.u32 %v6370, 7
    %v6372 = vsub.s32 2, %v6371
    %v6373 = vrot.slane %v6327, %v6372
    %v6374 = vlaneseq
    %v6375 = vshrl.u32 %v6374, 7
    %v6376 = vsub.s32 3, %v6375
    %v6377 = vrot.slane %v6327, %v6376
    %v6378 = vlaneseq
    %v6379 = vshrl.u32 %v6378, 7
    %v6380 = vsub.s32 4, %v6379
    %v6381 = vrot.slane %v6327, %v6380
    %v6382 = vlaneseq
    %v6383 = vshrl.u32 %v6382, 7
    %v6384 = vsub.s32 5, %v6383
    %v6385 = vrot.slane %v6327, %v6384
    %v6386 = vlaneseq
    %v6387 = vshrl.u32 %v6386, 7
    %v6388 = vsub.s32 6, %v6387
    %v6389 = vrot.slane %v6327, %v6388
    %v6390 = vlaneseq
    %v6391 = vshrl.u32 %v6390, 7
    %v6392 = vsub.s32 7, %v6391
    %v6393 = vrot.slane %v6327, %v6392
    %v6410 = vsub.f32 %v6177, %v6333
    %v6411 = vsub.f32 %v6180, %v6337
    %v6412 = vsub.f32 %v6183, %v6341
    %v6413 = vsub.f32 %v6186, %v6345
    %v6414 = vsub.f32 %v6189, %v6349
    %v6415 = vsub.f32 %v6192, %v6353
    %v6416 = vsub.f32 %v6195, %v6357
    %v6417 = vsub.f32 %v6198, %v6361
    %v6418 = vsub.f32 %v6201, %v6365
    %v6419 = vsub.f32 %v6204, %v6369
    %v6420 = vsub.f32 %v6207, %v6373
    %v6421 = vsub.f32 %v6210, %v6377
    %v6422 = vsub.f32 %v6213, %v6381
    %v6423 = vsub.f32 %v6216, %v6385
    %v6424 = vsub.f32 %v6219, %v6389
    %v6425 = vsub.f32 %v6222, %v6393
    %v6426 = vmul.f32 %v6410, 1.442695
    %v6427 = vpow.pop %v6426
    %v6428 = vmul.f32 %v6411, 1.442695
    %v6429 = vpow.pop %v6428
    %v6430 = vmul.f32 %v6412, 1.442695
    %v6431 = vpow.pop %v6430
    %v6432 = vmul.f32 %v6413, 1.442695
    %v6433 = vpow.pop %v6432
    %v6434 = vmul.f32 %v6414, 1.442695
    %v6435 = vpow.pop %v6434
    %v6436 = vmul.f32 %v6415, 1.442695
    %v6437 = vpow.pop %v6436
    %v6438 = vmul.f32 %v6416, 1.442695
    %v6439 = vpow.pop %v6438
    %v6440 = vmul.f32 %v6417, 1.442695
    %v6441 = vpow.pop %v6440
    %v6442 = vmul.f32 %v6418, 1.442695
    %v6443 = vpow.pop %v6442
    %v6444 = vmul.f32 %v6419, 1.442695
    %v6445 = vpow.pop %v6444
    %v6446 = vmul.f32 %v6420, 1.442695
    %v6447 = vpow.pop %v6446
    %v6448 = vmul.f32 %v6421, 1.442695
    %v6449 = vpow.pop %v6448
    %v6450 = vmul.f32 %v6422, 1.442695
    %v6451 = vpow.pop %v6450
    %v6452 = vmul.f32 %v6423, 1.442695
    %v6453 = vpow.pop %v6452
    %v6454 = vmul.f32 %v6424, 1.442695
    %v6455 = vpow.pop %v6454
    %v6456 = vmul.f32 %v6425, 1.442695
    %v6457 = vpow.pop %v6456
    %6474 = vset.pattern.permute.xlu0 0
    %6475 = vperm.xlu0 %6474, %v6427
    %v6476 = vpop.permute.xlu0 %6475
    %6477 = vset.pattern.permute.xlu0 0
    %6478 = vperm.xlu0 %6477, %v6429
    %v6479 = vpop.permute.xlu0 %6478
    %6480 = vset.pattern.permute.xlu0 0
    %6481 = vperm.xlu0 %6480, %v6431
    %v6482 = vpop.permute.xlu0 %6481
    %6483 = vset.pattern.permute.xlu0 0
    %6484 = vperm.xlu0 %6483, %v6433
    %v6485 = vpop.permute.xlu0 %6484
    %6486 = vset.pattern.permute.xlu0 0
    %6487 = vperm.xlu0 %6486, %v6435
    %v6488 = vpop.permute.xlu0 %6487
    %6489 = vset.pattern.permute.xlu0 0
    %6490 = vperm.xlu0 %6489, %v6437
    %v6491 = vpop.permute.xlu0 %6490
    %6492 = vset.pattern.permute.xlu0 0
    %6493 = vperm.xlu0 %6492, %v6439
    %v6494 = vpop.permute.xlu0 %6493
    %6495 = vset.pattern.permute.xlu0 0
    %6496 = vperm.xlu0 %6495, %v6441
    %v6497 = vpop.permute.xlu0 %6496
    %6498 = vset.pattern.permute.xlu0 0
    %6499 = vperm.xlu0 %6498, %v6443
    %v6500 = vpop.permute.xlu0 %6499
    %6501 = vset.pattern.permute.xlu0 0
    %6502 = vperm.xlu0 %6501, %v6445
    %v6503 = vpop.permute.xlu0 %6502
    %6504 = vset.pattern.permute.xlu0 0
    %6505 = vperm.xlu0 %6504, %v6447
    %v6506 = vpop.permute.xlu0 %6505
    %6507 = vset.pattern.permute.xlu0 0
    %6508 = vperm.xlu0 %6507, %v6449
    %v6509 = vpop.permute.xlu0 %6508
    %6510 = vset.pattern.permute.xlu0 0
    %6511 = vperm.xlu0 %6510, %v6451
    %v6512 = vpop.permute.xlu0 %6511
    %6513 = vset.pattern.permute.xlu0 0
    %6514 = vperm.xlu0 %6513, %v6453
    %v6515 = vpop.permute.xlu0 %6514
    %6516 = vset.pattern.permute.xlu0 0
    %6517 = vperm.xlu0 %6516, %v6455
    %v6518 = vpop.permute.xlu0 %6517
    %6519 = vset.pattern.permute.xlu0 0
    %6520 = vperm.xlu0 %6519, %v6457
    %v6521 = vpop.permute.xlu0 %6520
    %v6522 = vlaneseq
    %v6523 = vshrl.u32 %v6522, 7
    %v6524 = vsub.s32 %v6240, %v6523
    %v6525 = vrot.slane %v6476, %v6524
    %v6526 = vlaneseq
    %v6527 = vshrl.u32 %v6526, 7
    %v6528 = vsub.s32 %v6240, %v6527
    %v6529 = vrot.slane %v6479, %v6528
    %v6530 = vlaneseq
    %v6531 = vshrl.u32 %v6530, 7
    %v6532 = vsub.s32 %v6240, %v6531
    %v6533 = vrot.slane %v6482, %v6532
    %v6534 = vlaneseq
    %v6535 = vshrl.u32 %v6534, 7
    %v6536 = vsub.s32 %v6240, %v6535
    %v6537 = vrot.slane %v6485, %v6536
    %v6538 = vlaneseq
    %v6539 = vshrl.u32 %v6538, 7
    %v6540 = vsub.s32 %v6240, %v6539
    %v6541 = vrot.slane %v6488, %v6540
    %v6542 = vlaneseq
    %v6543 = vshrl.u32 %v6542, 7
    %v6544 = vsub.s32 %v6240, %v6543
    %v6545 = vrot.slane %v6491, %v6544
    %v6546 = vlaneseq
    %v6547 = vshrl.u32 %v6546, 7
    %v6548 = vsub.s32 %v6240, %v6547
    %v6549 = vrot.slane %v6494, %v6548
    %v6550 = vlaneseq
    %v6551 = vshrl.u32 %v6550, 7
    %v6552 = vsub.s32 %v6240, %v6551
    %v6553 = vrot.slane %v6497, %v6552
    %v6554 = vlaneseq
    %v6555 = vshrl.u32 %v6554, 7
    %v6556 = vsub.s32 %v6240, %v6555
    %v6557 = vrot.slane %v6500, %v6556
    %v6558 = vlaneseq
    %v6559 = vshrl.u32 %v6558, 7
    %v6560 = vsub.s32 %v6240, %v6559
    %v6561 = vrot.slane %v6503, %v6560
    %v6562 = vlaneseq
    %v6563 = vshrl.u32 %v6562, 7
    %v6564 = vsub.s32 %v6240, %v6563
    %v6565 = vrot.slane %v6506, %v6564
    %v6566 = vlaneseq
    %v6567 = vshrl.u32 %v6566, 7
    %v6568 = vsub.s32 %v6240, %v6567
    %v6569 = vrot.slane %v6509, %v6568
    %v6570 = vlaneseq
    %v6571 = vshrl.u32 %v6570, 7
    %v6572 = vsub.s32 %v6240, %v6571
    %v6573 = vrot.slane %v6512, %v6572
    %v6574 = vlaneseq
    %v6575 = vshrl.u32 %v6574, 7
    %v6576 = vsub.s32 %v6240, %v6575
    %v6577 = vrot.slane %v6515, %v6576
    %v6578 = vlaneseq
    %v6579 = vshrl.u32 %v6578, 7
    %v6580 = vsub.s32 %v6240, %v6579
    %v6581 = vrot.slane %v6518, %v6580
    %v6582 = vlaneseq
    %v6583 = vshrl.u32 %v6582, 7
    %v6584 = vsub.s32 %v6240, %v6583
    %v6585 = vrot.slane %v6521, %v6584
    %v6586 = vsel %vm1384, %v6529, %v6525
    %v6587 = vsel %vm1387, %v6533, %v6586
    %v6588 = vsel %vm1390, %v6537, %v6587
    %v6589 = vsel %vm1393, %v6541, %v6588
    %v6590 = vsel %vm1396, %v6545, %v6589
    %v6591 = vsel %vm1399, %v6549, %v6590
    %v6592 = vsel %vm1402, %v6553, %v6591
    %v6593 = vsel %vm1384, %v6561, %v6557
    %v6594 = vsel %vm1387, %v6565, %v6593
    %v6595 = vsel %vm1390, %v6569, %v6594
    %v6596 = vsel %vm1393, %v6573, %v6595
    %v6597 = vsel %vm1396, %v6577, %v6596
    %v6598 = vsel %vm1399, %v6581, %v6597
    %v6599 = vsel %vm1402, %v6585, %v6598
    %v6602 = vsel %vm6321, %v6592, 0.0
    %6603 = vadd.xlane.f32.xlu0 %v6602
    %v6604 = vpop.xlane.xlu0 %6603
    %v6605 = vsel %vm6321, %v6599, 0.0
    %6606 = vadd.xlane.f32.xlu0 %v6605
    %v6607 = vpop.xlane.xlu0 %6606
    %v6610 = vlaneseq
    %v6611 = vshrl.u32 %v6610, 7
    %v6612 = vsub.s32 0, %v6611
    %v6613 = vrot.slane %v6604, %v6612
    %v6614 = vlaneseq
    %v6615 = vshrl.u32 %v6614, 7
    %v6616 = vsub.s32 1, %v6615
    %v6617 = vrot.slane %v6604, %v6616
    %v6618 = vlaneseq
    %v6619 = vshrl.u32 %v6618, 7
    %v6620 = vsub.s32 2, %v6619
    %v6621 = vrot.slane %v6604, %v6620
    %v6622 = vlaneseq
    %v6623 = vshrl.u32 %v6622, 7
    %v6624 = vsub.s32 3, %v6623
    %v6625 = vrot.slane %v6604, %v6624
    %v6626 = vlaneseq
    %v6627 = vshrl.u32 %v6626, 7
    %v6628 = vsub.s32 4, %v6627
    %v6629 = vrot.slane %v6604, %v6628
    %v6630 = vlaneseq
    %v6631 = vshrl.u32 %v6630, 7
    %v6632 = vsub.s32 5, %v6631
    %v6633 = vrot.slane %v6604, %v6632
    %v6634 = vlaneseq
    %v6635 = vshrl.u32 %v6634, 7
    %v6636 = vsub.s32 6, %v6635
    %v6637 = vrot.slane %v6604, %v6636
    %v6638 = vlaneseq
    %v6639 = vshrl.u32 %v6638, 7
    %v6640 = vsub.s32 7, %v6639
    %v6641 = vrot.slane %v6604, %v6640
    %v6642 = vlaneseq
    %v6643 = vshrl.u32 %v6642, 7
    %v6644 = vsub.s32 0, %v6643
    %v6645 = vrot.slane %v6607, %v6644
    %v6646 = vlaneseq
    %v6647 = vshrl.u32 %v6646, 7
    %v6648 = vsub.s32 1, %v6647
    %v6649 = vrot.slane %v6607, %v6648
    %v6650 = vlaneseq
    %v6651 = vshrl.u32 %v6650, 7
    %v6652 = vsub.s32 2, %v6651
    %v6653 = vrot.slane %v6607, %v6652
    %v6654 = vlaneseq
    %v6655 = vshrl.u32 %v6654, 7
    %v6656 = vsub.s32 3, %v6655
    %v6657 = vrot.slane %v6607, %v6656
    %v6658 = vlaneseq
    %v6659 = vshrl.u32 %v6658, 7
    %v6660 = vsub.s32 4, %v6659
    %v6661 = vrot.slane %v6607, %v6660
    %v6662 = vlaneseq
    %v6663 = vshrl.u32 %v6662, 7
    %v6664 = vsub.s32 5, %v6663
    %v6665 = vrot.slane %v6607, %v6664
    %v6666 = vlaneseq
    %v6667 = vshrl.u32 %v6666, 7
    %v6668 = vsub.s32 6, %v6667
    %v6669 = vrot.slane %v6607, %v6668
    %v6670 = vlaneseq
    %v6671 = vshrl.u32 %v6670, 7
    %v6672 = vsub.s32 7, %v6671
    %v6673 = vrot.slane %v6607, %v6672
    %v6690 = vrcp.pop %v6613
    %v6691 = vmul.f32 %v6427, %v6690
    %v6692 = vrcp.pop %v6617
    %v6693 = vmul.f32 %v6429, %v6692
    %v6694 = vrcp.pop %v6621
    %v6695 = vmul.f32 %v6431, %v6694
    %v6696 = vrcp.pop %v6625
    %v6697 = vmul.f32 %v6433, %v6696
    %v6698 = vrcp.pop %v6629
    %v6699 = vmul.f32 %v6435, %v6698
    %v6700 = vrcp.pop %v6633
    %v6701 = vmul.f32 %v6437, %v6700
    %v6702 = vrcp.pop %v6637
    %v6703 = vmul.f32 %v6439, %v6702
    %v6704 = vrcp.pop %v6641
    %v6705 = vmul.f32 %v6441, %v6704
    %v6706 = vrcp.pop %v6645
    %v6707 = vmul.f32 %v6443, %v6706
    %v6708 = vrcp.pop %v6649
    %v6709 = vmul.f32 %v6445, %v6708
    %v6710 = vrcp.pop %v6653
    %v6711 = vmul.f32 %v6447, %v6710
    %v6712 = vrcp.pop %v6657
    %v6713 = vmul.f32 %v6449, %v6712
    %v6714 = vrcp.pop %v6661
    %v6715 = vmul.f32 %v6451, %v6714
    %v6716 = vrcp.pop %v6665
    %v6717 = vmul.f32 %v6453, %v6716
    %v6718 = vrcp.pop %v6669
    %v6719 = vmul.f32 %v6455, %v6718
    %v6720 = vrcp.pop %v6673
    %v6721 = vmul.f32 %v6457, %v6720
    %6723 = vset.pattern.permute.xlu0 0
    %6724 = vperm.xlu0 %6723, %v6691
    %v6725 = vpop.permute.xlu0 %6724
    %6728 = vset.pattern.permute.xlu0 0
    %6729 = vperm.xlu0 %6728, %v6693
    %v6730 = vpop.permute.xlu0 %6729
    %6733 = vset.pattern.permute.xlu0 0
    %6734 = vperm.xlu0 %6733, %v6695
    %v6735 = vpop.permute.xlu0 %6734
    %6738 = vset.pattern.permute.xlu0 0
    %6739 = vperm.xlu0 %6738, %v6697
    %v6740 = vpop.permute.xlu0 %6739
    %6743 = vset.pattern.permute.xlu0 0
    %6744 = vperm.xlu0 %6743, %v6699
    %v6745 = vpop.permute.xlu0 %6744
    %6748 = vset.pattern.permute.xlu0 0
    %6749 = vperm.xlu0 %6748, %v6701
    %v6750 = vpop.permute.xlu0 %6749
    %6753 = vset.pattern.permute.xlu0 0
    %6754 = vperm.xlu0 %6753, %v6703
    %v6755 = vpop.permute.xlu0 %6754
    %6758 = vset.pattern.permute.xlu0 0
    %6759 = vperm.xlu0 %6758, %v6705
    %v6760 = vpop.permute.xlu0 %6759
    %6763 = vset.pattern.permute.xlu0 0
    %6764 = vperm.xlu0 %6763, %v6707
    %v6765 = vpop.permute.xlu0 %6764
    %6768 = vset.pattern.permute.xlu0 0
    %6769 = vperm.xlu0 %6768, %v6709
    %v6770 = vpop.permute.xlu0 %6769
    %6773 = vset.pattern.permute.xlu0 0
    %6774 = vperm.xlu0 %6773, %v6711
    %v6775 = vpop.permute.xlu0 %6774
    %6778 = vset.pattern.permute.xlu0 0
    %6779 = vperm.xlu0 %6778, %v6713
    %v6780 = vpop.permute.xlu0 %6779
    %6783 = vset.pattern.permute.xlu0 0
    %6784 = vperm.xlu0 %6783, %v6715
    %v6785 = vpop.permute.xlu0 %6784
    %6788 = vset.pattern.permute.xlu0 0
    %6789 = vperm.xlu0 %6788, %v6717
    %v6790 = vpop.permute.xlu0 %6789
    %6793 = vset.pattern.permute.xlu0 0
    %6794 = vperm.xlu0 %6793, %v6719
    %v6795 = vpop.permute.xlu0 %6794
    %6798 = vset.pattern.permute.xlu0 0
    %6799 = vperm.xlu0 %6798, %v6721
    %v6800 = vpop.permute.xlu0 %6799
    %v6802 = vmul.f32 %v6120, %v6725
    %v6803 = vmul.f32 %v6121, %v6730
    %v6804 = vmul.f32 %v6122, %v6735
    %v6805 = vmul.f32 %v6123, %v6740
    %v6806 = vmul.f32 %v6124, %v6745
    %v6807 = vmul.f32 %v6125, %v6750
    %v6808 = vmul.f32 %v6126, %v6755
    %v6809 = vmul.f32 %v6127, %v6760
    %v6810 = vmul.f32 %v6128, %v6765
    %v6811 = vmul.f32 %v6129, %v6770
    %v6812 = vmul.f32 %v6130, %v6775
    %v6813 = vmul.f32 %v6131, %v6780
    %v6814 = vmul.f32 %v6132, %v6785
    %v6815 = vmul.f32 %v6133, %v6790
    %v6816 = vmul.f32 %v6134, %v6795
    %v6817 = vmul.f32 %v6135, %v6800
    %v6818 = vsel %vm775, %v6802, 0.0
    %v6819 = vrot.slane %v6818, 4
    %v6820 = vadd.f32 %v6818, %v6819
    %v6821 = vrot.slane %v6820, 2
    %v6822 = vadd.f32 %v6820, %v6821
    %v6823 = vrot.slane %v6822, 1
    %v6824 = vadd.f32 %v6822, %v6823
    %v6825 = vsel %vm775, %v6803, 0.0
    %v6826 = vrot.slane %v6825, 4
    %v6827 = vadd.f32 %v6825, %v6826
    %v6828 = vrot.slane %v6827, 2
    %v6829 = vadd.f32 %v6827, %v6828
    %v6830 = vrot.slane %v6829, 1
    %v6831 = vadd.f32 %v6829, %v6830
    %v6832 = vsel %vm775, %v6804, 0.0
    %v6833 = vrot.slane %v6832, 4
    %v6834 = vadd.f32 %v6832, %v6833
    %v6835 = vrot.slane %v6834, 2
    %v6836 = vadd.f32 %v6834, %v6835
    %v6837 = vrot.slane %v6836, 1
    %v6838 = vadd.f32 %v6836, %v6837
    %v6839 = vsel %vm775, %v6805, 0.0
    %v6840 = vrot.slane %v6839, 4
    %v6841 = vadd.f32 %v6839, %v6840
    %v6842 = vrot.slane %v6841, 2
    %v6843 = vadd.f32 %v6841, %v6842
    %v6844 = vrot.slane %v6843, 1
    %v6845 = vadd.f32 %v6843, %v6844
    %v6846 = vsel %vm775, %v6806, 0.0
    %v6847 = vrot.slane %v6846, 4
    %v6848 = vadd.f32 %v6846, %v6847
    %v6849 = vrot.slane %v6848, 2
    %v6850 = vadd.f32 %v6848, %v6849
    %v6851 = vrot.slane %v6850, 1
    %v6852 = vadd.f32 %v6850, %v6851
    %v6853 = vsel %vm775, %v6807, 0.0
    %v6854 = vrot.slane %v6853, 4
    %v6855 = vadd.f32 %v6853, %v6854
    %v6856 = vrot.slane %v6855, 2
    %v6857 = vadd.f32 %v6855, %v6856
    %v6858 = vrot.slane %v6857, 1
    %v6859 = vadd.f32 %v6857, %v6858
    %v6860 = vsel %vm775, %v6808, 0.0
    %v6861 = vrot.slane %v6860, 4
    %v6862 = vadd.f32 %v6860, %v6861
    %v6863 = vrot.slane %v6862, 2
    %v6864 = vadd.f32 %v6862, %v6863
    %v6865 = vrot.slane %v6864, 1
    %v6866 = vadd.f32 %v6864, %v6865
    %v6867 = vsel %vm775, %v6809, 0.0
    %v6868 = vrot.slane %v6867, 4
    %v6869 = vadd.f32 %v6867, %v6868
    %v6870 = vrot.slane %v6869, 2
    %v6871 = vadd.f32 %v6869, %v6870
    %v6872 = vrot.slane %v6871, 1
    %v6873 = vadd.f32 %v6871, %v6872
    %v6874 = vsel %vm775, %v6810, 0.0
    %v6875 = vrot.slane %v6874, 4
    %v6876 = vadd.f32 %v6874, %v6875
    %v6877 = vrot.slane %v6876, 2
    %v6878 = vadd.f32 %v6876, %v6877
    %v6879 = vrot.slane %v6878, 1
    %v6880 = vadd.f32 %v6878, %v6879
    %v6881 = vsel %vm775, %v6811, 0.0
    %v6882 = vrot.slane %v6881, 4
    %v6883 = vadd.f32 %v6881, %v6882
    %v6884 = vrot.slane %v6883, 2
    %v6885 = vadd.f32 %v6883, %v6884
    %v6886 = vrot.slane %v6885, 1
    %v6887 = vadd.f32 %v6885, %v6886
    %v6888 = vsel %vm775, %v6812, 0.0
    %v6889 = vrot.slane %v6888, 4
    %v6890 = vadd.f32 %v6888, %v6889
    %v6891 = vrot.slane %v6890, 2
    %v6892 = vadd.f32 %v6890, %v6891
    %v6893 = vrot.slane %v6892, 1
    %v6894 = vadd.f32 %v6892, %v6893
    %v6895 = vsel %vm775, %v6813, 0.0
    %v6896 = vrot.slane %v6895, 4
    %v6897 = vadd.f32 %v6895, %v6896
    %v6898 = vrot.slane %v6897, 2
    %v6899 = vadd.f32 %v6897, %v6898
    %v6900 = vrot.slane %v6899, 1
    %v6901 = vadd.f32 %v6899, %v6900
    %v6902 = vsel %vm775, %v6814, 0.0
    %v6903 = vrot.slane %v6902, 4
    %v6904 = vadd.f32 %v6902, %v6903
    %v6905 = vrot.slane %v6904, 2
    %v6906 = vadd.f32 %v6904, %v6905
    %v6907 = vrot.slane %v6906, 1
    %v6908 = vadd.f32 %v6906, %v6907
    %v6909 = vsel %vm775, %v6815, 0.0
    %v6910 = vrot.slane %v6909, 4
    %v6911 = vadd.f32 %v6909, %v6910
    %v6912 = vrot.slane %v6911, 2
    %v6913 = vadd.f32 %v6911, %v6912
    %v6914 = vrot.slane %v6913, 1
    %v6915 = vadd.f32 %v6913, %v6914
    %v6916 = vsel %vm775, %v6816, 0.0
    %v6917 = vrot.slane %v6916, 4
    %v6918 = vadd.f32 %v6916, %v6917
    %v6919 = vrot.slane %v6918, 2
    %v6920 = vadd.f32 %v6918, %v6919
    %v6921 = vrot.slane %v6920, 1
    %v6922 = vadd.f32 %v6920, %v6921
    %v6923 = vsel %vm775, %v6817, 0.0
    %v6924 = vrot.slane %v6923, 4
    %v6925 = vadd.f32 %v6923, %v6924
    %v6926 = vrot.slane %v6925, 2
    %v6927 = vadd.f32 %v6925, %v6926
    %v6928 = vrot.slane %v6927, 1
    %v6929 = vadd.f32 %v6927, %v6928
    %v6930 = vtanh.pop %v6824
    %v6931 = vtanh.pop %v6831
    %v6932 = vtanh.pop %v6838
    %v6933 = vtanh.pop %v6845
    %v6934 = vtanh.pop %v6852
    %v6935 = vtanh.pop %v6859
    %v6936 = vtanh.pop %v6866
    %v6937 = vtanh.pop %v6873
    %v6938 = vtanh.pop %v6880
    %v6939 = vtanh.pop %v6887
    %v6940 = vtanh.pop %v6894
    %v6941 = vtanh.pop %v6901
    %v6942 = vtanh.pop %v6908
    %v6943 = vtanh.pop %v6915
    %v6944 = vtanh.pop %v6922
    %v6945 = vtanh.pop %v6929
    %v6946 = vld [vmem:[%s6] sm:$0xff]
    %v6947 = vld [vmem:[%s6 + $0x8] sm:$0xff]
    %v6948 = vld [vmem:[%s6 + $0x10] sm:$0xff]
    %v6949 = vld [vmem:[%s6 + $0x18] sm:$0xff]
    %v6950 = vld [vmem:[%s7] sm:$0x1]
    %v6952 = vlaneseq
    %v6953 = vshrl.u32 %v6952, 7
    %v6954 = vsub.s32 0, %v6953
    %v6955 = vrot.slane %v6950, %v6954
    %v6973 = vsel %vm1384, %v6931, %v6930
    %v6974 = vsel %vm1387, %v6932, %v6973
    %v6975 = vsel %vm1390, %v6933, %v6974
    %v6976 = vsel %vm1393, %v6934, %v6975
    %v6977 = vsel %vm1396, %v6935, %v6976
    %v6978 = vsel %vm1399, %v6936, %v6977
    %v6979 = vsel %vm1402, %v6937, %v6978
    %v6980 = vsel %vm1384, %v6939, %v6938
    %v6981 = vsel %vm1387, %v6940, %v6980
    %v6982 = vsel %vm1390, %v6941, %v6981
    %v6983 = vsel %vm1393, %v6942, %v6982
    %v6984 = vsel %vm1396, %v6943, %v6983
    %v6985 = vsel %vm1399, %v6944, %v6984
    %v6986 = vsel %vm1402, %v6945, %v6985
    %v6987 = vsel %vm775, %v6979, 0
    %v6989 = vsel %vm775, %v6986, 0
    %6991 = vmatprep.subr.mxu0 0.0
    %6992 = vmatpush1.msra.mxu0 %v6946
    %6993 = vmatprep.subr.mxu0 0.0
    %6994 = vmatpush1.msra.mxu0 %v6947
    %6995 = vmatprep.subr.mxu0 0.0
    %6996 = vmatpush1.msra.mxu0 %v6948
    %6997 = vmatprep.subr.mxu0 0.0
    %6998 = vmatpush1.msra.mxu0 %v6949
    %6999 = vmatprep.subr.mxu0 0.0
    %7000 = vmatpush1.msra.mxu0 0.0
    %7001 = vmatprep.subr.mxu0 0.0
    %7002 = vmatpush1.msra.mxu0 0.0
    %7003 = vmatprep.subr.mxu0 0.0
    %7004 = vmatpush1.msra.mxu0 0.0
    %7005 = vmatprep.subr.mxu0 0.0
    %7006 = vmatpush1.msra.mxu0 0.0
    %7007 = vmatprep.subr.mxu0 0.0
    %7008 = vmatpush1.msra.mxu0 0.0
    %7009 = vmatprep.subr.mxu0 0.0
    %7010 = vmatpush1.msra.mxu0 0.0
    %7011 = vmatprep.subr.mxu0 0.0
    %7012 = vmatpush1.msra.mxu0 0.0
    %7013 = vmatprep.subr.mxu0 0.0
    %7014 = vmatpush1.msra.mxu0 0.0
    %7015 = vmatprep.subr.mxu0 0.0
    %7016 = vmatpush1.msra.mxu0 0.0
    %7017 = vmatprep.subr.mxu0 0.0
    %7018 = vmatpush1.msra.mxu0 0.0
    %7019 = vmatprep.subr.mxu0 0.0
    %7020 = vmatpush1.msra.mxu0 0.0
    %7021 = vmatprep.subr.mxu0 0.0
    %7022 = vmatpush1.msra.mxu0 0.0
    %7023 = vmatprep.subr.mxu0 0.0
    %7024 = vmatpush1.msra.mxu0 0.0
    %7025 = vmatprep.subr.mxu0 0.0
    %7026 = vmatpush1.msra.mxu0 0.0
    %7027 = vmatprep.subr.mxu0 0.0
    %7028 = vmatpush1.msra.mxu0 0.0
    %7029 = vmatprep.subr.mxu0 0.0
    %7030 = vmatpush1.msra.mxu0 0.0
    %7031 = vmatprep.subr.mxu0 0.0
    %7032 = vmatpush1.msra.mxu0 0.0
    %7033 = vmatprep.subr.mxu0 0.0
    %7034 = vmatpush1.msra.mxu0 0.0
    %7035 = vmatprep.subr.mxu0 0.0
    %7036 = vmatpush1.msra.mxu0 0.0
    %7037 = vmatprep.subr.mxu0 0.0
    %7038 = vmatpush1.msra.mxu0 0.0
    %7039 = vmatprep.subr.mxu0 0.0
    %7040 = vmatpush1.msra.mxu0 0.0
    %7041 = vmatprep.subr.mxu0 0.0
    %7042 = vmatpush1.msra.mxu0 0.0
    %7043 = vmatprep.subr.mxu0 0.0
    %7044 = vmatpush1.msra.mxu0 0.0
    %7045 = vmatprep.subr.mxu0 0.0
    %7046 = vmatpush1.msra.mxu0 0.0
    %7047 = vmatprep.subr.mxu0 0.0
    %7048 = vmatpush1.msra.mxu0 0.0
    %7049 = vmatprep.subr.mxu0 0.0
    %7050 = vmatpush1.msra.mxu0 0.0
    %7051 = vmatprep.subr.mxu0 0.0
    %7052 = vmatpush1.msra.mxu0 0.0
    %7053 = vmatprep.subr.mxu0 0.0
    %7054 = vmatpush1.msra.mxu0 0.0
    %7055 = vmatprep.mubr.f32.mxu0 0.0
    %7056 = vmatmul.mubr.f32.gmra.mrb[0].mxu0 %v6987
    %v7057 = vpop.f32.mrb[0].mxu0
    %v7058 = vadd.f32 %v6955, %v7057
    %v7059 = vpop.f32.mrb[0].mxu0
    %7060 = vmatprep.mubr.f32.mxu0 0.0
    %7061 = vmatmul.mubr.f32.gmra.mrb[0].mxu0 %v6989
    %v7062 = vpop.f32.mrb[0].mxu0
    %v7063 = vadd.f32 %v6955, %v7062
    %v7064 = vpop.f32.mrb[0].mxu0
    %7065 = vdwg.mxu0
    %7066 = vst.msk [vmem:[%s8] sm:$0xff] %vm6321, %v7058
    %7067 = vst.msk [vmem:[%s8 + $0x8] sm:$0xff] %vm6321, %v7063
    // Predicated region
    $region46: #{tpu_custom_call.1} parent=1 // pred_check
      _
    $region47: #{tpu_custom_call.1} parent=1 // pred_check_branch
      %7069 = sbr.rel (0) target = $region49
    $region48: #{tpu_custom_call.1} parent=1 // pred_region
      _
    $region49: #{tpu_custom_call.1} parent=1 // pred_fallthru
      _
    // Predicated region
    $region50: #{tpu_custom_call.1} parent=1 // pred_check
      _
    $region51: #{tpu_custom_call.1} parent=1 // pred_check_branch
      %7071 = sbr.rel (0) target = $region53
    $region52: #{tpu_custom_call.1} parent=1 // pred_region
      _
    $region53: #{tpu_custom_call.1} parent=1 // pred_fallthru
      _
    %7072 = vsyncpa [#allocation5], 1
    %7073 = vsyncpa [#allocation7], 1

</llo_original>
